<compile_context>
chip_gen: v7x
topology: tpu7x:2x2x1
jax: 0.10.0
libtpu: 0.0.40
codegen_flags: <defaults>
</compile_context>

<pallas_src>
import functools

import jax
import jax.numpy as jnp
from jax.experimental import pallas as pl
from jax.experimental.pallas import tpu as pltpu


def _rtab_kernel(x_ref, mask_ref, w1_ref, b1_ref, w2_ref, b2_ref,
                 wa1_ref, ba1_ref, wa2_ref, ba2_ref,
                 o_ref, y1buf, *, Wp, inv_hw):
    """One batch element.

    x_ref  : (1, C, Sp_ext) zero-padded + zero-margined flattened input
    mask_ref: (1, Sp) f32, 1.0 at interior (real) pixels, 0.0 on the conv pad border
    w*_ref : conv weights as (9, C_out, C_in) taps; b*_ref as (C, 1)
    wa*/ba*: SE attention 1x1-conv weights (C//r, C), (C, C//r) and biases (·, 1)
    o_ref  : (1, C, Sp) output in padded-flattened coords (border sliced off outside)
    y1buf  : (C, Sp_ext) VMEM scratch holding relu(conv1) with zero margins
    """
    C = o_ref.shape[1]
    Sp = o_ref.shape[2]
    Sp_ext = x_ref.shape[2]
    OFF = (Sp_ext - Sp) // 2            # = Wp + 1 (extra zero margin)

    mask = mask_ref[...]                # (1, Sp)

    # ---- conv1 (3x3, padding=1) + bias + ReLU: 9 shifted MXU matmuls ----
    acc1 = jnp.zeros((C, Sp), jnp.float32)
    for t in range(9):
        delta = (t // 3 - 1) * Wp + (t % 3 - 1)
        sh = x_ref[0, :, OFF + delta: OFF + delta + Sp]          # (C, Sp)
        acc1 = acc1 + jnp.dot(w1_ref[t], sh,
                              preferred_element_type=jnp.float32)
    y1 = jnp.maximum(acc1 + b1_ref[...], 0.0) * mask             # zero the pad border

    # Stage y1 in a zero-margined scratch so conv2's taps are plain static slices.
    y1buf[...] = jnp.zeros_like(y1buf)
    y1buf[:, OFF:OFF + Sp] = y1

    # ---- conv2 (3x3, padding=1) + bias ----
    acc2 = jnp.zeros((C, Sp), jnp.float32)
    for t in range(9):
        delta = (t // 3 - 1) * Wp + (t % 3 - 1)
        sh = y1buf[:, OFF + delta: OFF + delta + Sp]             # (C, Sp)
        acc2 = acc2 + jnp.dot(w2_ref[t], sh,
                              preferred_element_type=jnp.float32)
    y2 = (acc2 + b2_ref[...]) * mask                             # (C, Sp)

    # ---- channel attention: global avg-pool -> 1x1 conv -> ReLU -> 1x1 conv -> sigmoid
    pooled = jnp.sum(y2, axis=1, keepdims=True) * inv_hw         # (C, 1)
    pooled_bc = jnp.broadcast_to(pooled, (C, Sp))                # keep matmuls lane-wide
    h1 = jnp.maximum(
        jnp.dot(wa1_ref[...], pooled_bc, preferred_element_type=jnp.float32)
        + ba1_ref[...], 0.0)                                     # (C//r, Sp), const per row
    z = (jnp.dot(wa2_ref[...], h1, preferred_element_type=jnp.float32)
         + ba2_ref[...])                                         # (C, Sp), const per row
    attn = 1.0 / (1.0 + jnp.exp(-z))

    # ---- scale + residual ----
    x_in = x_ref[0, :, OFF:OFF + Sp]                             # original (padded) input
    o_ref[0] = y2 * attn + x_in


def rtab_forward(x, params):
    """x: (B, C, H, W) float32.  params as produced in __main__.  Returns (B, C, H, W)."""
    w1, b1, w2, b2, wa1, ba1, wa2, ba2 = params
    B, C, H, W = x.shape
    Cr = wa1.shape[0]
    Hp, Wp = H + 2, W + 2
    Sp = Hp * Wp
    OFF = Wp + 1
    Sp_ext = Sp + 2 * OFF

    # Conv zero-padding + lane-dense flattening + extra zero margin for static tap slices.
    xp = jnp.pad(x, ((0, 0), (0, 0), (1, 1), (1, 1))).reshape(B, C, Sp)
    x_ext = jnp.pad(xp, ((0, 0), (0, 0), (OFF, OFF)))            # (B, C, Sp_ext)

    idx = jnp.arange(Sp, dtype=jnp.int32)
    hp, wp = idx // Wp, idx % Wp
    interior = (hp >= 1) & (hp <= H) & (wp >= 1) & (wp <= W)
    mask = interior.astype(jnp.float32)[None, :]                 # (1, Sp)

    # (C_out, C_in, 3, 3) -> (9, C_out, C_in): leading-dim tap index only in the kernel.
    w1t = jnp.transpose(w1, (2, 3, 0, 1)).reshape(9, C, C)
    w2t = jnp.transpose(w2, (2, 3, 0, 1)).reshape(9, C, C)
    b1c = b1.reshape(C, 1)
    b2c = b2.reshape(C, 1)
    ba1c = ba1.reshape(Cr, 1)
    ba2c = ba2.reshape(C, 1)

    kernel = functools.partial(_rtab_kernel, Wp=Wp, inv_hw=1.0 / float(H * W))

    out_p = pl.pallas_call(
        kernel,
        out_shape=jax.ShapeDtypeStruct((B, C, Sp), jnp.float32),
        grid=(B,),
        in_specs=[
            pl.BlockSpec((1, C, Sp_ext), lambda b: (b, 0, 0)),   # x (per batch element)
            pl.BlockSpec((1, Sp), lambda b: (0, 0)),             # interior mask
            pl.BlockSpec((9, C, C), lambda b: (0, 0, 0)),        # conv1 weight taps
            pl.BlockSpec((C, 1), lambda b: (0, 0)),              # conv1 bias
            pl.BlockSpec((9, C, C), lambda b: (0, 0, 0)),        # conv2 weight taps
            pl.BlockSpec((C, 1), lambda b: (0, 0)),              # conv2 bias
            pl.BlockSpec((Cr, C), lambda b: (0, 0)),             # attn fc1 weight
            pl.BlockSpec((Cr, 1), lambda b: (0, 0)),             # attn fc1 bias
            pl.BlockSpec((C, Cr), lambda b: (0, 0)),             # attn fc2 weight
            pl.BlockSpec((C, 1), lambda b: (0, 0)),              # attn fc2 bias
        ],
        out_specs=pl.BlockSpec((1, C, Sp), lambda b: (b, 0, 0)),
        scratch_shapes=[pltpu.VMEM((C, Sp_ext), jnp.float32)],
        compiler_params=pltpu.CompilerParams(
            dimension_semantics=("parallel",)),
    )(x_ext, mask, w1t, b1c, w2t, b2c, wa1, ba1c, wa2, ba2c)

    # Free, contiguous un-flatten + strip of the conv pad border back to NCHW.
    return out_p.reshape(B, C, Hp, Wp)[:, :, 1:H + 1, 1:W + 1]


def rtab_ref(x, params):
    """Pure-JAX reference mirroring the PyTorch forward."""
    w1, b1, w2, b2, wa1, ba1, wa2, ba2 = params
    dn = ('NCHW', 'OIHW', 'NCHW')
    prec = jax.lax.Precision.HIGHEST
    y = jax.lax.conv_general_dilated(x, w1, (1, 1), ((1, 1), (1, 1)),
                                     dimension_numbers=dn, precision=prec)
    y = jax.nn.relu(y + b1[None, :, None, None])
    y = jax.lax.conv_general_dilated(y, w2, (1, 1), ((1, 1), (1, 1)),
                                     dimension_numbers=dn, precision=prec)
    y = y + b2[None, :, None, None]
    pooled = jnp.mean(y, axis=(2, 3))                                      # (B, C)
    a = jax.nn.relu(jnp.dot(pooled, wa1.T, precision=prec) + ba1)          # (B, C//r)
    attn = jax.nn.sigmoid(jnp.dot(a, wa2.T, precision=prec) + ba2)         # (B, C)
    return y * attn[:, :, None, None] + x


if __name__ == "__main__":
    key = jax.random.PRNGKey(0)
    B, C, H, W = 2, 4, 16, 16
    r = 2
    Cr = C // r
    ks = jax.random.split(key, 9)

    # Keep inputs/weights exactly bf16-representable so the MXU precision path and the
    # XLA reference agree to f32 rounding, independent of matmul precision defaults.
    def bf16_round(a):
        return a.astype(jnp.bfloat16).astype(jnp.float32)

    scale = 0.2
    x = bf16_round(jax.random.normal(ks[0], (B, C, H, W), jnp.float32))
    w1 = bf16_round(scale * jax.random.normal(ks[1], (C, C, 3, 3), jnp.float32))
    b1 = bf16_round(scale * jax.random.normal(ks[2], (C,), jnp.float32))
    w2 = bf16_round(scale * jax.random.normal(ks[3], (C, C, 3, 3), jnp.float32))
    b2 = bf16_round(scale * jax.random.normal(ks[4], (C,), jnp.float32))
    wa1 = bf16_round(scale * jax.random.normal(ks[5], (Cr, C), jnp.float32))
    ba1 = bf16_round(scale * jax.random.normal(ks[6], (Cr,), jnp.float32))
    wa2 = bf16_round(scale * jax.random.normal(ks[7], (C, Cr), jnp.float32))
    ba2 = bf16_round(scale * jax.random.normal(ks[8], (C,), jnp.float32))
    params = (w1, b1, w2, b2, wa1, ba1, wa2, ba2)

    out = rtab_forward(x, params)
    out = jax.block_until_ready(out)

    ref = rtab_ref(x, params)
    assert out.shape == (B, C, H, W)
    assert out.dtype == jnp.float32
    max_err = float(jnp.max(jnp.abs(out - ref)))
    assert max_err < 2e-2, f"max abs error {max_err}"
    print("KERNEL_OK")
</pallas_src>

<mosaic_0001>
module attributes {stable_mosaic.version = 11 : i64} {
  func.func @_rtab_kernel(%arg0: i32, %arg1: memref<1x4x362xf32, #tpu.memory_space<vmem>>, %arg2: memref<1x324xf32, #tpu.memory_space<vmem>>, %arg3: memref<9x4x4xf32, #tpu.memory_space<vmem>>, %arg4: memref<4x1xf32, #tpu.memory_space<vmem>>, %arg5: memref<9x4x4xf32, #tpu.memory_space<vmem>>, %arg6: memref<4x1xf32, #tpu.memory_space<vmem>>, %arg7: memref<2x4xf32, #tpu.memory_space<vmem>>, %arg8: memref<2x1xf32, #tpu.memory_space<vmem>>, %arg9: memref<4x2xf32, #tpu.memory_space<vmem>>, %arg10: memref<4x1xf32, #tpu.memory_space<vmem>>, %arg11: memref<1x4x324xf32, #tpu.memory_space<vmem>>, %arg12: memref<4x362xf32, #tpu.memory_space<vmem>>) attributes {dimension_semantics = [#tpu.dimension_semantics<parallel>], iteration_bounds = array<i64: 2>, scalar_prefetch = 0 : i64, scratch_operands = 1 : i64, tpu.core_type = #tpu.core_type<tc>, window_params = [{transform_indices = @transform_0, window_bounds = array<i64: 1, 4, 362>}, {pipeline_mode = #tpu.pipeline_mode<synchronous>, transform_indices = @transform_1, window_bounds = array<i64: 1, 324>}, {pipeline_mode = #tpu.pipeline_mode<synchronous>, transform_indices = @transform_2, window_bounds = array<i64: 9, 4, 4>}, {pipeline_mode = #tpu.pipeline_mode<synchronous>, transform_indices = @transform_3, window_bounds = array<i64: 4, 1>}, {pipeline_mode = #tpu.pipeline_mode<synchronous>, transform_indices = @transform_4, window_bounds = array<i64: 9, 4, 4>}, {pipeline_mode = #tpu.pipeline_mode<synchronous>, transform_indices = @transform_5, window_bounds = array<i64: 4, 1>}, {pipeline_mode = #tpu.pipeline_mode<synchronous>, transform_indices = @transform_6, window_bounds = array<i64: 2, 4>}, {pipeline_mode = #tpu.pipeline_mode<synchronous>, transform_indices = @transform_7, window_bounds = array<i64: 2, 1>}, {pipeline_mode = #tpu.pipeline_mode<synchronous>, transform_indices = @transform_8, window_bounds = array<i64: 4, 2>}, {pipeline_mode = #tpu.pipeline_mode<synchronous>, transform_indices = @transform_9, window_bounds = array<i64: 4, 1>}, {transform_indices = @transform_10, window_bounds = array<i64: 1, 4, 324>}]} {
    %c0 = arith.constant 0 : index
    %c0_0 = arith.constant 0 : index
    %0 = vector.load %arg2[%c0, %c0_0] : memref<1x324xf32, #tpu.memory_space<vmem>>, vector<1x324xf32>
    %cst = arith.constant 0.000000e+00 : f32
    %1 = vector.broadcast %cst : f32 to vector<4x324xf32>
    %c0_1 = arith.constant 0 : index
    %c0_2 = arith.constant 0 : index
    %c0_3 = arith.constant 0 : index
    %2 = vector.load %arg1[%c0_1, %c0_2, %c0_3] : memref<1x4x362xf32, #tpu.memory_space<vmem>>, vector<1x4x324xf32>
    %3 = vector.shape_cast %2 : vector<1x4x324xf32> to vector<4x324xf32>
    %c0_4 = arith.constant 0 : index
    %c0_5 = arith.constant 0 : index
    %c0_6 = arith.constant 0 : index
    %4 = vector.load %arg3[%c0_4, %c0_5, %c0_6] : memref<9x4x4xf32, #tpu.memory_space<vmem>>, vector<1x4x4xf32>
    %5 = vector.shape_cast %4 : vector<1x4x4xf32> to vector<4x4xf32>
    %cst_7 = arith.constant dense<0.000000e+00> : vector<4x324xf32>
    %6 = tpu.matmul %5, %3, %cst_7 {dimension_numbers = #tpu.dot_dimension_numbers<[1], [0], [0], [1], [0, 0, 1, 1], [], []>} : vector<4x4xf32>, vector<4x324xf32>, vector<4x324xf32> -> vector<4x324xf32>
    %7 = arith.addf %1, %6 : vector<4x324xf32>
    %c0_8 = arith.constant 0 : index
    %c0_9 = arith.constant 0 : index
    %c1 = arith.constant 1 : index
    %8 = vector.load %arg1[%c0_8, %c0_9, %c1] : memref<1x4x362xf32, #tpu.memory_space<vmem>>, vector<1x4x324xf32>
    %9 = vector.shape_cast %8 : vector<1x4x324xf32> to vector<4x324xf32>
    %c1_10 = arith.constant 1 : index
    %c0_11 = arith.constant 0 : index
    %c0_12 = arith.constant 0 : index
    %10 = vector.load %arg3[%c1_10, %c0_11, %c0_12] : memref<9x4x4xf32, #tpu.memory_space<vmem>>, vector<1x4x4xf32>
    %11 = vector.shape_cast %10 : vector<1x4x4xf32> to vector<4x4xf32>
    %cst_13 = arith.constant dense<0.000000e+00> : vector<4x324xf32>
    %12 = tpu.matmul %11, %9, %cst_13 {dimension_numbers = #tpu.dot_dimension_numbers<[1], [0], [0], [1], [0, 0, 1, 1], [], []>} : vector<4x4xf32>, vector<4x324xf32>, vector<4x324xf32> -> vector<4x324xf32>
    %13 = arith.addf %7, %12 : vector<4x324xf32>
    %c0_14 = arith.constant 0 : index
    %c0_15 = arith.constant 0 : index
    %c2 = arith.constant 2 : index
    %14 = vector.load %arg1[%c0_14, %c0_15, %c2] : memref<1x4x362xf32, #tpu.memory_space<vmem>>, vector<1x4x324xf32>
    %15 = vector.shape_cast %14 : vector<1x4x324xf32> to vector<4x324xf32>
    %c2_16 = arith.constant 2 : index
    %c0_17 = arith.constant 0 : index
    %c0_18 = arith.constant 0 : index
    %16 = vector.load %arg3[%c2_16, %c0_17, %c0_18] : memref<9x4x4xf32, #tpu.memory_space<vmem>>, vector<1x4x4xf32>
    %17 = vector.shape_cast %16 : vector<1x4x4xf32> to vector<4x4xf32>
    %cst_19 = arith.constant dense<0.000000e+00> : vector<4x324xf32>
    %18 = tpu.matmul %17, %15, %cst_19 {dimension_numbers = #tpu.dot_dimension_numbers<[1], [0], [0], [1], [0, 0, 1, 1], [], []>} : vector<4x4xf32>, vector<4x324xf32>, vector<4x324xf32> -> vector<4x324xf32>
    %19 = arith.addf %13, %18 : vector<4x324xf32>
    %c0_20 = arith.constant 0 : index
    %c0_21 = arith.constant 0 : index
    %c18 = arith.constant 18 : index
    %20 = vector.load %arg1[%c0_20, %c0_21, %c18] : memref<1x4x362xf32, #tpu.memory_space<vmem>>, vector<1x4x324xf32>
    %21 = vector.shape_cast %20 : vector<1x4x324xf32> to vector<4x324xf32>
    %c3 = arith.constant 3 : index
    %c0_22 = arith.constant 0 : index
    %c0_23 = arith.constant 0 : index
    %22 = vector.load %arg3[%c3, %c0_22, %c0_23] : memref<9x4x4xf32, #tpu.memory_space<vmem>>, vector<1x4x4xf32>
    %23 = vector.shape_cast %22 : vector<1x4x4xf32> to vector<4x4xf32>
    %cst_24 = arith.constant dense<0.000000e+00> : vector<4x324xf32>
    %24 = tpu.matmul %23, %21, %cst_24 {dimension_numbers = #tpu.dot_dimension_numbers<[1], [0], [0], [1], [0, 0, 1, 1], [], []>} : vector<4x4xf32>, vector<4x324xf32>, vector<4x324xf32> -> vector<4x324xf32>
    %25 = arith.addf %19, %24 : vector<4x324xf32>
    %c0_25 = arith.constant 0 : index
    %c0_26 = arith.constant 0 : index
    %c19 = arith.constant 19 : index
    %26 = vector.load %arg1[%c0_25, %c0_26, %c19] : memref<1x4x362xf32, #tpu.memory_space<vmem>>, vector<1x4x324xf32>
    %27 = vector.shape_cast %26 : vector<1x4x324xf32> to vector<4x324xf32>
    %c4 = arith.constant 4 : index
    %c0_27 = arith.constant 0 : index
    %c0_28 = arith.constant 0 : index
    %28 = vector.load %arg3[%c4, %c0_27, %c0_28] : memref<9x4x4xf32, #tpu.memory_space<vmem>>, vector<1x4x4xf32>
    %29 = vector.shape_cast %28 : vector<1x4x4xf32> to vector<4x4xf32>
    %cst_29 = arith.constant dense<0.000000e+00> : vector<4x324xf32>
    %30 = tpu.matmul %29, %27, %cst_29 {dimension_numbers = #tpu.dot_dimension_numbers<[1], [0], [0], [1], [0, 0, 1, 1], [], []>} : vector<4x4xf32>, vector<4x324xf32>, vector<4x324xf32> -> vector<4x324xf32>
    %31 = arith.addf %25, %30 : vector<4x324xf32>
    %c0_30 = arith.constant 0 : index
    %c0_31 = arith.constant 0 : index
    %c20 = arith.constant 20 : index
    %32 = vector.load %arg1[%c0_30, %c0_31, %c20] : memref<1x4x362xf32, #tpu.memory_space<vmem>>, vector<1x4x324xf32>
    %33 = vector.shape_cast %32 : vector<1x4x324xf32> to vector<4x324xf32>
    %c5 = arith.constant 5 : index
    %c0_32 = arith.constant 0 : index
    %c0_33 = arith.constant 0 : index
    %34 = vector.load %arg3[%c5, %c0_32, %c0_33] : memref<9x4x4xf32, #tpu.memory_space<vmem>>, vector<1x4x4xf32>
    %35 = vector.shape_cast %34 : vector<1x4x4xf32> to vector<4x4xf32>
    %cst_34 = arith.constant dense<0.000000e+00> : vector<4x324xf32>
    %36 = tpu.matmul %35, %33, %cst_34 {dimension_numbers = #tpu.dot_dimension_numbers<[1], [0], [0], [1], [0, 0, 1, 1], [], []>} : vector<4x4xf32>, vector<4x324xf32>, vector<4x324xf32> -> vector<4x324xf32>
    %37 = arith.addf %31, %36 : vector<4x324xf32>
    %c0_35 = arith.constant 0 : index
    %c0_36 = arith.constant 0 : index
    %c36 = arith.constant 36 : index
    %38 = vector.load %arg1[%c0_35, %c0_36, %c36] : memref<1x4x362xf32, #tpu.memory_space<vmem>>, vector<1x4x324xf32>
    %39 = vector.shape_cast %38 : vector<1x4x324xf32> to vector<4x324xf32>
    %c6 = arith.constant 6 : index
    %c0_37 = arith.constant 0 : index
    %c0_38 = arith.constant 0 : index
    %40 = vector.load %arg3[%c6, %c0_37, %c0_38] : memref<9x4x4xf32, #tpu.memory_space<vmem>>, vector<1x4x4xf32>
    %41 = vector.shape_cast %40 : vector<1x4x4xf32> to vector<4x4xf32>
    %cst_39 = arith.constant dense<0.000000e+00> : vector<4x324xf32>
    %42 = tpu.matmul %41, %39, %cst_39 {dimension_numbers = #tpu.dot_dimension_numbers<[1], [0], [0], [1], [0, 0, 1, 1], [], []>} : vector<4x4xf32>, vector<4x324xf32>, vector<4x324xf32> -> vector<4x324xf32>
    %43 = arith.addf %37, %42 : vector<4x324xf32>
    %c0_40 = arith.constant 0 : index
    %c0_41 = arith.constant 0 : index
    %c37 = arith.constant 37 : index
    %44 = vector.load %arg1[%c0_40, %c0_41, %c37] : memref<1x4x362xf32, #tpu.memory_space<vmem>>, vector<1x4x324xf32>
    %45 = vector.shape_cast %44 : vector<1x4x324xf32> to vector<4x324xf32>
    %c7 = arith.constant 7 : index
    %c0_42 = arith.constant 0 : index
    %c0_43 = arith.constant 0 : index
    %46 = vector.load %arg3[%c7, %c0_42, %c0_43] : memref<9x4x4xf32, #tpu.memory_space<vmem>>, vector<1x4x4xf32>
    %47 = vector.shape_cast %46 : vector<1x4x4xf32> to vector<4x4xf32>
    %cst_44 = arith.constant dense<0.000000e+00> : vector<4x324xf32>
    %48 = tpu.matmul %47, %45, %cst_44 {dimension_numbers = #tpu.dot_dimension_numbers<[1], [0], [0], [1], [0, 0, 1, 1], [], []>} : vector<4x4xf32>, vector<4x324xf32>, vector<4x324xf32> -> vector<4x324xf32>
    %49 = arith.addf %43, %48 : vector<4x324xf32>
    %c0_45 = arith.constant 0 : index
    %c0_46 = arith.constant 0 : index
    %c38 = arith.constant 38 : index
    %50 = vector.load %arg1[%c0_45, %c0_46, %c38] : memref<1x4x362xf32, #tpu.memory_space<vmem>>, vector<1x4x324xf32>
    %51 = vector.shape_cast %50 : vector<1x4x324xf32> to vector<4x324xf32>
    %c8 = arith.constant 8 : index
    %c0_47 = arith.constant 0 : index
    %c0_48 = arith.constant 0 : index
    %52 = vector.load %arg3[%c8, %c0_47, %c0_48] : memref<9x4x4xf32, #tpu.memory_space<vmem>>, vector<1x4x4xf32>
    %53 = vector.shape_cast %52 : vector<1x4x4xf32> to vector<4x4xf32>
    %cst_49 = arith.constant dense<0.000000e+00> : vector<4x324xf32>
    %54 = tpu.matmul %53, %51, %cst_49 {dimension_numbers = #tpu.dot_dimension_numbers<[1], [0], [0], [1], [0, 0, 1, 1], [], []>} : vector<4x4xf32>, vector<4x324xf32>, vector<4x324xf32> -> vector<4x324xf32>
    %55 = arith.addf %49, %54 : vector<4x324xf32>
    %c0_50 = arith.constant 0 : index
    %c0_51 = arith.constant 0 : index
    %56 = vector.load %arg4[%c0_50, %c0_51] : memref<4x1xf32, #tpu.memory_space<vmem>>, vector<4x1xf32>
    %57 = vector.broadcast %56 : vector<4x1xf32> to vector<4x324xf32>
    %58 = arith.addf %55, %57 : vector<4x324xf32>
    %cst_52 = arith.constant 0.000000e+00 : f32
    %59 = vector.broadcast %cst_52 : f32 to vector<4x324xf32>
    %60 = arith.maximumf %58, %59 : vector<4x324xf32>
    %61 = vector.broadcast %0 : vector<1x324xf32> to vector<4x324xf32>
    %62 = arith.mulf %60, %61 : vector<4x324xf32>
    %cst_53 = arith.constant 0.000000e+00 : f32
    %63 = vector.broadcast %cst_53 : f32 to vector<4x362xf32>
    %c0_54 = arith.constant 0 : index
    %c0_55 = arith.constant 0 : index
    %64 = vector.load %arg12[%c0_54, %c0_55] : memref<4x362xf32, #tpu.memory_space<vmem>>, vector<4x362xf32>
    tpu.vector_store %arg12[%c0_54, %c0_55], %63 {strides = array<i32>} : memref<4x362xf32, #tpu.memory_space<vmem>>, vector<4x362xf32>,
    %c0_56 = arith.constant 0 : index
    %c19_57 = arith.constant 19 : index
    %65 = vector.load %arg12[%c0_56, %c19_57] : memref<4x362xf32, #tpu.memory_space<vmem>>, vector<4x324xf32>
    tpu.vector_store %arg12[%c0_56, %c19_57], %62 {strides = array<i32>} : memref<4x362xf32, #tpu.memory_space<vmem>>, vector<4x324xf32>,
    %cst_58 = arith.constant 0.000000e+00 : f32
    %66 = vector.broadcast %cst_58 : f32 to vector<4x324xf32>
    %c0_59 = arith.constant 0 : index
    %c0_60 = arith.constant 0 : index
    %67 = vector.load %arg12[%c0_59, %c0_60] : memref<4x362xf32, #tpu.memory_space<vmem>>, vector<4x324xf32>
    %c0_61 = arith.constant 0 : index
    %c0_62 = arith.constant 0 : index
    %c0_63 = arith.constant 0 : index
    %68 = vector.load %arg5[%c0_61, %c0_62, %c0_63] : memref<9x4x4xf32, #tpu.memory_space<vmem>>, vector<1x4x4xf32>
    %69 = vector.shape_cast %68 : vector<1x4x4xf32> to vector<4x4xf32>
    %cst_64 = arith.constant dense<0.000000e+00> : vector<4x324xf32>
    %70 = tpu.matmul %69, %67, %cst_64 {dimension_numbers = #tpu.dot_dimension_numbers<[1], [0], [0], [1], [0, 0, 1, 1], [], []>} : vector<4x4xf32>, vector<4x324xf32>, vector<4x324xf32> -> vector<4x324xf32>
    %71 = arith.addf %66, %70 : vector<4x324xf32>
    %c0_65 = arith.constant 0 : index
    %c1_66 = arith.constant 1 : index
    %72 = vector.load %arg12[%c0_65, %c1_66] : memref<4x362xf32, #tpu.memory_space<vmem>>, vector<4x324xf32>
    %c1_67 = arith.constant 1 : index
    %c0_68 = arith.constant 0 : index
    %c0_69 = arith.constant 0 : index
    %73 = vector.load %arg5[%c1_67, %c0_68, %c0_69] : memref<9x4x4xf32, #tpu.memory_space<vmem>>, vector<1x4x4xf32>
    %74 = vector.shape_cast %73 : vector<1x4x4xf32> to vector<4x4xf32>
    %cst_70 = arith.constant dense<0.000000e+00> : vector<4x324xf32>
    %75 = tpu.matmul %74, %72, %cst_70 {dimension_numbers = #tpu.dot_dimension_numbers<[1], [0], [0], [1], [0, 0, 1, 1], [], []>} : vector<4x4xf32>, vector<4x324xf32>, vector<4x324xf32> -> vector<4x324xf32>
    %76 = arith.addf %71, %75 : vector<4x324xf32>
    %c0_71 = arith.constant 0 : index
    %c2_72 = arith.constant 2 : index
    %77 = vector.load %arg12[%c0_71, %c2_72] : memref<4x362xf32, #tpu.memory_space<vmem>>, vector<4x324xf32>
    %c2_73 = arith.constant 2 : index
    %c0_74 = arith.constant 0 : index
    %c0_75 = arith.constant 0 : index
    %78 = vector.load %arg5[%c2_73, %c0_74, %c0_75] : memref<9x4x4xf32, #tpu.memory_space<vmem>>, vector<1x4x4xf32>
    %79 = vector.shape_cast %78 : vector<1x4x4xf32> to vector<4x4xf32>
    %cst_76 = arith.constant dense<0.000000e+00> : vector<4x324xf32>
    %80 = tpu.matmul %79, %77, %cst_76 {dimension_numbers = #tpu.dot_dimension_numbers<[1], [0], [0], [1], [0, 0, 1, 1], [], []>} : vector<4x4xf32>, vector<4x324xf32>, vector<4x324xf32> -> vector<4x324xf32>
    %81 = arith.addf %76, %80 : vector<4x324xf32>
    %c0_77 = arith.constant 0 : index
    %c18_78 = arith.constant 18 : index
    %82 = vector.load %arg12[%c0_77, %c18_78] : memref<4x362xf32, #tpu.memory_space<vmem>>, vector<4x324xf32>
    %c3_79 = arith.constant 3 : index
    %c0_80 = arith.constant 0 : index
    %c0_81 = arith.constant 0 : index
    %83 = vector.load %arg5[%c3_79, %c0_80, %c0_81] : memref<9x4x4xf32, #tpu.memory_space<vmem>>, vector<1x4x4xf32>
    %84 = vector.shape_cast %83 : vector<1x4x4xf32> to vector<4x4xf32>
    %cst_82 = arith.constant dense<0.000000e+00> : vector<4x324xf32>
    %85 = tpu.matmul %84, %82, %cst_82 {dimension_numbers = #tpu.dot_dimension_numbers<[1], [0], [0], [1], [0, 0, 1, 1], [], []>} : vector<4x4xf32>, vector<4x324xf32>, vector<4x324xf32> -> vector<4x324xf32>
    %86 = arith.addf %81, %85 : vector<4x324xf32>
    %c0_83 = arith.constant 0 : index
    %c19_84 = arith.constant 19 : index
    %87 = vector.load %arg12[%c0_83, %c19_84] : memref<4x362xf32, #tpu.memory_space<vmem>>, vector<4x324xf32>
    %c4_85 = arith.constant 4 : index
    %c0_86 = arith.constant 0 : index
    %c0_87 = arith.constant 0 : index
    %88 = vector.load %arg5[%c4_85, %c0_86, %c0_87] : memref<9x4x4xf32, #tpu.memory_space<vmem>>, vector<1x4x4xf32>
    %89 = vector.shape_cast %88 : vector<1x4x4xf32> to vector<4x4xf32>
    %cst_88 = arith.constant dense<0.000000e+00> : vector<4x324xf32>
    %90 = tpu.matmul %89, %87, %cst_88 {dimension_numbers = #tpu.dot_dimension_numbers<[1], [0], [0], [1], [0, 0, 1, 1], [], []>} : vector<4x4xf32>, vector<4x324xf32>, vector<4x324xf32> -> vector<4x324xf32>
    %91 = arith.addf %86, %90 : vector<4x324xf32>
    %c0_89 = arith.constant 0 : index
    %c20_90 = arith.constant 20 : index
    %92 = vector.load %arg12[%c0_89, %c20_90] : memref<4x362xf32, #tpu.memory_space<vmem>>, vector<4x324xf32>
    %c5_91 = arith.constant 5 : index
    %c0_92 = arith.constant 0 : index
    %c0_93 = arith.constant 0 : index
    %93 = vector.load %arg5[%c5_91, %c0_92, %c0_93] : memref<9x4x4xf32, #tpu.memory_space<vmem>>, vector<1x4x4xf32>
    %94 = vector.shape_cast %93 : vector<1x4x4xf32> to vector<4x4xf32>
    %cst_94 = arith.constant dense<0.000000e+00> : vector<4x324xf32>
    %95 = tpu.matmul %94, %92, %cst_94 {dimension_numbers = #tpu.dot_dimension_numbers<[1], [0], [0], [1], [0, 0, 1, 1], [], []>} : vector<4x4xf32>, vector<4x324xf32>, vector<4x324xf32> -> vector<4x324xf32>
    %96 = arith.addf %91, %95 : vector<4x324xf32>
    %c0_95 = arith.constant 0 : index
    %c36_96 = arith.constant 36 : index
    %97 = vector.load %arg12[%c0_95, %c36_96] : memref<4x362xf32, #tpu.memory_space<vmem>>, vector<4x324xf32>
    %c6_97 = arith.constant 6 : index
    %c0_98 = arith.constant 0 : index
    %c0_99 = arith.constant 0 : index
    %98 = vector.load %arg5[%c6_97, %c0_98, %c0_99] : memref<9x4x4xf32, #tpu.memory_space<vmem>>, vector<1x4x4xf32>
    %99 = vector.shape_cast %98 : vector<1x4x4xf32> to vector<4x4xf32>
    %cst_100 = arith.constant dense<0.000000e+00> : vector<4x324xf32>
    %100 = tpu.matmul %99, %97, %cst_100 {dimension_numbers = #tpu.dot_dimension_numbers<[1], [0], [0], [1], [0, 0, 1, 1], [], []>} : vector<4x4xf32>, vector<4x324xf32>, vector<4x324xf32> -> vector<4x324xf32>
    %101 = arith.addf %96, %100 : vector<4x324xf32>
    %c0_101 = arith.constant 0 : index
    %c37_102 = arith.constant 37 : index
    %102 = vector.load %arg12[%c0_101, %c37_102] : memref<4x362xf32, #tpu.memory_space<vmem>>, vector<4x324xf32>
    %c7_103 = arith.constant 7 : index
    %c0_104 = arith.constant 0 : index
    %c0_105 = arith.constant 0 : index
    %103 = vector.load %arg5[%c7_103, %c0_104, %c0_105] : memref<9x4x4xf32, #tpu.memory_space<vmem>>, vector<1x4x4xf32>
    %104 = vector.shape_cast %103 : vector<1x4x4xf32> to vector<4x4xf32>
    %cst_106 = arith.constant dense<0.000000e+00> : vector<4x324xf32>
    %105 = tpu.matmul %104, %102, %cst_106 {dimension_numbers = #tpu.dot_dimension_numbers<[1], [0], [0], [1], [0, 0, 1, 1], [], []>} : vector<4x4xf32>, vector<4x324xf32>, vector<4x324xf32> -> vector<4x324xf32>
    %106 = arith.addf %101, %105 : vector<4x324xf32>
    %c0_107 = arith.constant 0 : index
    %c38_108 = arith.constant 38 : index
    %107 = vector.load %arg12[%c0_107, %c38_108] : memref<4x362xf32, #tpu.memory_space<vmem>>, vector<4x324xf32>
    %c8_109 = arith.constant 8 : index
    %c0_110 = arith.constant 0 : index
    %c0_111 = arith.constant 0 : index
    %108 = vector.load %arg5[%c8_109, %c0_110, %c0_111] : memref<9x4x4xf32, #tpu.memory_space<vmem>>, vector<1x4x4xf32>
    %109 = vector.shape_cast %108 : vector<1x4x4xf32> to vector<4x4xf32>
    %cst_112 = arith.constant dense<0.000000e+00> : vector<4x324xf32>
    %110 = tpu.matmul %109, %107, %cst_112 {dimension_numbers = #tpu.dot_dimension_numbers<[1], [0], [0], [1], [0, 0, 1, 1], [], []>} : vector<4x4xf32>, vector<4x324xf32>, vector<4x324xf32> -> vector<4x324xf32>
    %111 = arith.addf %106, %110 : vector<4x324xf32>
    %c0_113 = arith.constant 0 : index
    %c0_114 = arith.constant 0 : index
    %112 = vector.load %arg6[%c0_113, %c0_114] : memref<4x1xf32, #tpu.memory_space<vmem>>, vector<4x1xf32>
    %113 = vector.broadcast %112 : vector<4x1xf32> to vector<4x324xf32>
    %114 = arith.addf %111, %113 : vector<4x324xf32>
    %115 = vector.broadcast %0 : vector<1x324xf32> to vector<4x324xf32>
    %116 = arith.mulf %114, %115 : vector<4x324xf32>
    %cst_115 = arith.constant dense<0.000000e+00> : vector<4xf32>
    %117 = vector.multi_reduction <add>, %116, %cst_115 [1] : vector<4x324xf32> to vector<4xf32>
    %118 = vector.shape_cast %117 : vector<4xf32> to vector<4x1xf32>
    %cst_116 = arith.constant 3.906250e-03 : f32
    %119 = vector.broadcast %cst_116 : f32 to vector<4x1xf32>
    %120 = arith.mulf %118, %119 : vector<4x1xf32>
    %121 = vector.shape_cast %120 : vector<4x1xf32> to vector<4x1xf32>
    %122 = vector.broadcast %121 : vector<4x1xf32> to vector<4x324xf32>
    %c0_117 = arith.constant 0 : index
    %c0_118 = arith.constant 0 : index
    %123 = vector.load %arg7[%c0_117, %c0_118] : memref<2x4xf32, #tpu.memory_space<vmem>>, vector<2x4xf32>
    %cst_119 = arith.constant dense<0.000000e+00> : vector<2x324xf32>
    %124 = tpu.matmul %123, %122, %cst_119 {dimension_numbers = #tpu.dot_dimension_numbers<[1], [0], [0], [1], [0, 0, 1, 1], [], []>} : vector<2x4xf32>, vector<4x324xf32>, vector<2x324xf32> -> vector<2x324xf32>
    %c0_120 = arith.constant 0 : index
    %c0_121 = arith.constant 0 : index
    %125 = vector.load %arg8[%c0_120, %c0_121] : memref<2x1xf32, #tpu.memory_space<vmem>>, vector<2x1xf32>
    %126 = vector.broadcast %125 : vector<2x1xf32> to vector<2x324xf32>
    %127 = arith.addf %124, %126 : vector<2x324xf32>
    %cst_122 = arith.constant 0.000000e+00 : f32
    %128 = vector.broadcast %cst_122 : f32 to vector<2x324xf32>
    %129 = arith.maximumf %127, %128 : vector<2x324xf32>
    %c0_123 = arith.constant 0 : index
    %c0_124 = arith.constant 0 : index
    %130 = vector.load %arg9[%c0_123, %c0_124] : memref<4x2xf32, #tpu.memory_space<vmem>>, vector<4x2xf32>
    %cst_125 = arith.constant dense<0.000000e+00> : vector<4x324xf32>
    %131 = tpu.matmul %130, %129, %cst_125 {dimension_numbers = #tpu.dot_dimension_numbers<[1], [0], [0], [1], [0, 0, 1, 1], [], []>} : vector<4x2xf32>, vector<2x324xf32>, vector<4x324xf32> -> vector<4x324xf32>
    %c0_126 = arith.constant 0 : index
    %c0_127 = arith.constant 0 : index
    %132 = vector.load %arg10[%c0_126, %c0_127] : memref<4x1xf32, #tpu.memory_space<vmem>>, vector<4x1xf32>
    %133 = vector.broadcast %132 : vector<4x1xf32> to vector<4x324xf32>
    %134 = arith.addf %131, %133 : vector<4x324xf32>
    %cst_128 = arith.constant 0.000000e+00 : f32
    %135 = vector.broadcast %cst_128 : f32 to vector<4x324xf32>
    %136 = arith.subf %135, %134 : vector<4x324xf32>
    %137 = math.exp %136 : vector<4x324xf32>
    %cst_129 = arith.constant 1.000000e+00 : f32
    %138 = vector.broadcast %cst_129 : f32 to vector<4x324xf32>
    %139 = arith.addf %138, %137 : vector<4x324xf32>
    %cst_130 = arith.constant 1.000000e+00 : f32
    %140 = vector.broadcast %cst_130 : f32 to vector<4x324xf32>
    %141 = arith.divf %140, %139 : vector<4x324xf32>
    %c0_131 = arith.constant 0 : index
    %c0_132 = arith.constant 0 : index
    %c19_133 = arith.constant 19 : index
    %142 = vector.load %arg1[%c0_131, %c0_132, %c19_133] : memref<1x4x362xf32, #tpu.memory_space<vmem>>, vector<1x4x324xf32>
    %143 = vector.shape_cast %142 : vector<1x4x324xf32> to vector<4x324xf32>
    %144 = arith.mulf %116, %141 : vector<4x324xf32>
    %145 = arith.addf %144, %143 : vector<4x324xf32>
    %c0_134 = arith.constant 0 : index
    %c0_135 = arith.constant 0 : index
    %c0_136 = arith.constant 0 : index
    %146 = vector.load %arg11[%c0_134, %c0_135, %c0_136] : memref<1x4x324xf32, #tpu.memory_space<vmem>>, vector<1x4x324xf32>
    %147 = vector.shape_cast %146 : vector<1x4x324xf32> to vector<4x324xf32>
    %148 = vector.shape_cast %145 : vector<4x324xf32> to vector<1x4x324xf32>
    tpu.vector_store %arg11[%c0_134, %c0_135, %c0_136], %148 {strides = array<i32>} : memref<1x4x324xf32, #tpu.memory_space<vmem>>, vector<1x4x324xf32>,
    return
  }
  func.func @transform_0(%arg0: i32) -> (i32, i32, i32) {
    %c0_i32 = arith.constant 0 : i32
    %c0_i32_0 = arith.constant 0 : i32
    %c0_i32_1 = arith.constant 0 : i32
    return %arg0, %c0_i32, %c0_i32_0 : i32, i32, i32
  }
  func.func @transform_1(%arg0: i32) -> (i32, i32) {
    %c0_i32 = arith.constant 0 : i32
    %c0_i32_0 = arith.constant 0 : i32
    %c0_i32_1 = arith.constant 0 : i32
    return %c0_i32, %c0_i32_0 : i32, i32
  }
  func.func @transform_2(%arg0: i32) -> (i32, i32, i32) {
    %c0_i32 = arith.constant 0 : i32
    %c0_i32_0 = arith.constant 0 : i32
    %c0_i32_1 = arith.constant 0 : i32
    %c0_i32_2 = arith.constant 0 : i32
    return %c0_i32, %c0_i32_0, %c0_i32_1 : i32, i32, i32
  }
  func.func @transform_3(%arg0: i32) -> (i32, i32) {
    %c0_i32 = arith.constant 0 : i32
    %c0_i32_0 = arith.constant 0 : i32
    %c0_i32_1 = arith.constant 0 : i32
    return %c0_i32, %c0_i32_0 : i32, i32
  }
  func.func @transform_4(%arg0: i32) -> (i32, i32, i32) {
    %c0_i32 = arith.constant 0 : i32
    %c0_i32_0 = arith.constant 0 : i32
    %c0_i32_1 = arith.constant 0 : i32
    %c0_i32_2 = arith.constant 0 : i32
    return %c0_i32, %c0_i32_0, %c0_i32_1 : i32, i32, i32
  }
  func.func @transform_5(%arg0: i32) -> (i32, i32) {
    %c0_i32 = arith.constant 0 : i32
    %c0_i32_0 = arith.constant 0 : i32
    %c0_i32_1 = arith.constant 0 : i32
    return %c0_i32, %c0_i32_0 : i32, i32
  }
  func.func @transform_6(%arg0: i32) -> (i32, i32) {
    %c0_i32 = arith.constant 0 : i32
    %c0_i32_0 = arith.constant 0 : i32
    %c0_i32_1 = arith.constant 0 : i32
    return %c0_i32, %c0_i32_0 : i32, i32
  }
  func.func @transform_7(%arg0: i32) -> (i32, i32) {
    %c0_i32 = arith.constant 0 : i32
    %c0_i32_0 = arith.constant 0 : i32
    %c0_i32_1 = arith.constant 0 : i32
    return %c0_i32, %c0_i32_0 : i32, i32
  }
  func.func @transform_8(%arg0: i32) -> (i32, i32) {
    %c0_i32 = arith.constant 0 : i32
    %c0_i32_0 = arith.constant 0 : i32
    %c0_i32_1 = arith.constant 0 : i32
    return %c0_i32, %c0_i32_0 : i32, i32
  }
  func.func @transform_9(%arg0: i32) -> (i32, i32) {
    %c0_i32 = arith.constant 0 : i32
    %c0_i32_0 = arith.constant 0 : i32
    %c0_i32_1 = arith.constant 0 : i32
    return %c0_i32, %c0_i32_0 : i32, i32
  }
  func.func @transform_10(%arg0: i32) -> (i32, i32, i32) {
    %c0_i32 = arith.constant 0 : i32
    %c0_i32_0 = arith.constant 0 : i32
    %c0_i32_1 = arith.constant 0 : i32
    return %arg0, %c0_i32, %c0_i32_0 : i32, i32, i32
  }
}

</mosaic_0001>

<llo_original>
// kernel: tpu_custom_call.1
$region0: #{tpu_custom_call.1}
  #allocation0 [shape = 'u32[]', space=smem, size = 0x4, offset = 0x4, fixed_abs, tag = 'smem constant byte address 0x4 - core index']
  #allocation1 [shape = 'u32[144,128]{1,0:T(1,128)}', space=vmem, size = 0x12000, scoped, tag = 'internal scratch']
  #allocation2 [shape = 'f32[4,362]{1,0:T(4,128)}', space=vmem, size = 0x1800, scoped, tag = 'scratch operand']
  %s0 = inlined_call_operand.vmem [shape: f32[2,4,362], index: 0, kind: input, shape index: {}]
  %s1 = inlined_call_operand.vmem [shape: f32[1,324], index: 1, kind: input, shape index: {}]
  %s2 = inlined_call_operand.vmem [shape: f32[9,4,4], index: 2, kind: input, shape index: {}]
  %s3 = inlined_call_operand.vmem [shape: f32[4,1], index: 3, kind: input, shape index: {}]
  %s4 = inlined_call_operand.vmem [shape: f32[9,4,4], index: 4, kind: input, shape index: {}]
  %s5 = inlined_call_operand.vmem [shape: f32[4,1], index: 5, kind: input, shape index: {}]
  %s6 = inlined_call_operand.vmem [shape: f32[2,4], index: 6, kind: input, shape index: {}]
  %s7 = inlined_call_operand.vmem [shape: f32[2,1], index: 7, kind: input, shape index: {}]
  %s8 = inlined_call_operand.vmem [shape: f32[4,2], index: 8, kind: input, shape index: {}]
  %s9 = inlined_call_operand.vmem [shape: f32[4,1], index: 9, kind: input, shape index: {}]
  %s10 = inlined_call_operand.hbm [shape: f32[2,4,324], index: 10, kind: output, shape index: {}]
  %s11 = sld [smem:[#allocation0]]
  $region73: #{tpu_custom_call.1} parent=0
    _
  %s13 = ssub.s32 1, %s11
  %s14 = scalar_select 0, %s13, %s11
  $region1: #{tpu_custom_call.1} parent=0
    #allocation3 [shape = 'u8[12288]{0}', space=vmem, size = 0x3000, scoped, tag = 'output window, operand 0']
    #allocation4 [shape = 's32[2]{0}', space=sflag, size = 0x8, scoped, tag = 'scoped memory for tpu_custom_call.1']
    %15 = vsyncpa [#allocation4], 0
    %s16 = scalar_lea.sflag [#allocation4], 1
    %17 = vsyncpa %s16, 0
    loop: start=0, step=1, limit=4
    $region2: #{tpu_custom_call.1} parent=1 // loop_pre_header
      _
    $region3: #{tpu_custom_call.1} parent=1 // loop_header
      %s19 = sphi 0, %s23
      %p20 = scmp.ge.s32.totalorder %s19, 4
      %s29 = sphi 0, %s31
      %s32 = sphi 0, %s29
      %s33 = sphi 0, %s32
      %s49 = sphi 0, %s33
      %s53 = sphi 0, %s53
      %s55 = sphi 0, %s53
      %s56 = sphi 0, %s55
      %s70 = sphi 0, %s56
      %s74 = sphi 0, %s74
      %s76 = sphi 0, %s74
      %s77 = sphi 0, %s76
      %s91 = sphi 0, %s77
      %s95 = sphi 0, %s95
      %s97 = sphi 0, %s95
      %s98 = sphi 0, %s97
      %s112 = sphi 0, %s98
      %s116 = sphi 0, %s116
      %s118 = sphi 0, %s116
      %s119 = sphi 0, %s118
      %s133 = sphi 0, %s119
      %s137 = sphi 0, %s137
      %s139 = sphi 0, %s137
      %s140 = sphi 0, %s139
      %s154 = sphi 0, %s140
      %s158 = sphi 0, %s158
      %s160 = sphi 0, %s158
      %s161 = sphi 0, %s160
      %s175 = sphi 0, %s161
      %s179 = sphi 0, %s179
      %s181 = sphi 0, %s179
      %s182 = sphi 0, %s181
      %s196 = sphi 0, %s182
      %s200 = sphi 0, %s200
      %s202 = sphi 0, %s200
      %s203 = sphi 0, %s202
      %s217 = sphi 0, %s203
      %s221 = sphi 0, %s221
      %s223 = sphi 0, %s221
      %s224 = sphi 0, %s223
      %s238 = sphi 0, %s224
      %s244 = sphi 0, %s246
      %s247 = sphi 0, %s244
      %s248 = sphi 0, %s247
      %s264 = sphi 0, %s248
    $region4: #{tpu_custom_call.1} parent=1 // loop_header_branch
      %22 = sbr.rel (%p20) target = $region8
    $region5: #{tpu_custom_call.1} parent=1 // loop_body
      %s24 = ssub.s32 %s19, 1
      %s25 = ssub.s32 %s19, 2
      %s26 = sadd.s32 %s19, 1
      %s27 = ssub.s32 %s19, %s26
      %p28 = scmp.eq.s32.totalorder %s27, 0
      %s30 = sadd.s32 %s29, 1
      %s31 = scalar_select %p28, %s29, %s30
      %p34 = pneg %p28
      %p35 = scmp.eq.s32.totalorder %s19, 1
      %p36 = por %p34, %p35
      %p37 = scmp.ne.s32.totalorder %s29, %s32
      %p38 = scmp.eq.s32.totalorder %s19, 0
      %p39 = por %p37, %p38
      %p40 = scmp.ne.s32.totalorder %s29, %s32
      %p41 = scmp.eq.s32.totalorder %s24, 1
      %p42 = por %p40, %p41
      %p43 = scmp.ne.s32.totalorder %s32, %s33
      %p44 = scmp.eq.s32.totalorder %s24, 0
      %p45 = por %p43, %p44
      %p46 = scmp.ne.s32.totalorder %s32, %s33
      %p47 = scmp.eq.s32.totalorder %s25, 1
      %p48 = por %p46, %p47
      %p50 = scmp.ne.s32.totalorder %s33, %s49
      %p51 = scmp.eq.s32.totalorder %s25, 0
      %p52 = por %p50, %p51
      %s54 = sadd.s32 %s53, 1
      %p57 = scmp.eq.s32.totalorder %s19, 1
      %p58 = scmp.ne.s32.totalorder %s53, %s55
      %p59 = scmp.eq.s32.totalorder %s19, 0
      %p60 = por %p58, %p59
      %p61 = scmp.ne.s32.totalorder %s53, %s55
      %p62 = scmp.eq.s32.totalorder %s24, 1
      %p63 = por %p61, %p62
      %p64 = scmp.ne.s32.totalorder %s55, %s56
      %p65 = scmp.eq.s32.totalorder %s24, 0
      %p66 = por %p64, %p65
      %p67 = scmp.ne.s32.totalorder %s55, %s56
      %p68 = scmp.eq.s32.totalorder %s25, 1
      %p69 = por %p67, %p68
      %p71 = scmp.ne.s32.totalorder %s56, %s70
      %p72 = scmp.eq.s32.totalorder %s25, 0
      %p73 = por %p71, %p72
      %s75 = sadd.s32 %s74, 1
      %p78 = scmp.eq.s32.totalorder %s19, 1
      %p79 = scmp.ne.s32.totalorder %s74, %s76
      %p80 = scmp.eq.s32.totalorder %s19, 0
      %p81 = por %p79, %p80
      %p82 = scmp.ne.s32.totalorder %s74, %s76
      %p83 = scmp.eq.s32.totalorder %s24, 1
      %p84 = por %p82, %p83
      %p85 = scmp.ne.s32.totalorder %s76, %s77
      %p86 = scmp.eq.s32.totalorder %s24, 0
      %p87 = por %p85, %p86
      %p88 = scmp.ne.s32.totalorder %s76, %s77
      %p89 = scmp.eq.s32.totalorder %s25, 1
      %p90 = por %p88, %p89
      %p92 = scmp.ne.s32.totalorder %s77, %s91
      %p93 = scmp.eq.s32.totalorder %s25, 0
      %p94 = por %p92, %p93
      %s96 = sadd.s32 %s95, 1
      %p99 = scmp.eq.s32.totalorder %s19, 1
      %p100 = scmp.ne.s32.totalorder %s95, %s97
      %p101 = scmp.eq.s32.totalorder %s19, 0
      %p102 = por %p100, %p101
      %p103 = scmp.ne.s32.totalorder %s95, %s97
      %p104 = scmp.eq.s32.totalorder %s24, 1
      %p105 = por %p103, %p104
      %p106 = scmp.ne.s32.totalorder %s97, %s98
      %p107 = scmp.eq.s32.totalorder %s24, 0
      %p108 = por %p106, %p107
      %p109 = scmp.ne.s32.totalorder %s97, %s98
      %p110 = scmp.eq.s32.totalorder %s25, 1
      %p111 = por %p109, %p110
      %p113 = scmp.ne.s32.totalorder %s98, %s112
      %p114 = scmp.eq.s32.totalorder %s25, 0
      %p115 = por %p113, %p114
      %s117 = sadd.s32 %s116, 1
      %p120 = scmp.eq.s32.totalorder %s19, 1
      %p121 = scmp.ne.s32.totalorder %s116, %s118
      %p122 = scmp.eq.s32.totalorder %s19, 0
      %p123 = por %p121, %p122
      %p124 = scmp.ne.s32.totalorder %s116, %s118
      %p125 = scmp.eq.s32.totalorder %s24, 1
      %p126 = por %p124, %p125
      %p127 = scmp.ne.s32.totalorder %s118, %s119
      %p128 = scmp.eq.s32.totalorder %s24, 0
      %p129 = por %p127, %p128
      %p130 = scmp.ne.s32.totalorder %s118, %s119
      %p131 = scmp.eq.s32.totalorder %s25, 1
      %p132 = por %p130, %p131
      %p134 = scmp.ne.s32.totalorder %s119, %s133
      %p135 = scmp.eq.s32.totalorder %s25, 0
      %p136 = por %p134, %p135
      %s138 = sadd.s32 %s137, 1
      %p141 = scmp.eq.s32.totalorder %s19, 1
      %p142 = scmp.ne.s32.totalorder %s137, %s139
      %p143 = scmp.eq.s32.totalorder %s19, 0
      %p144 = por %p142, %p143
      %p145 = scmp.ne.s32.totalorder %s137, %s139
      %p146 = scmp.eq.s32.totalorder %s24, 1
      %p147 = por %p145, %p146
      %p148 = scmp.ne.s32.totalorder %s139, %s140
      %p149 = scmp.eq.s32.totalorder %s24, 0
      %p150 = por %p148, %p149
      %p151 = scmp.ne.s32.totalorder %s139, %s140
      %p152 = scmp.eq.s32.totalorder %s25, 1
      %p153 = por %p151, %p152
      %p155 = scmp.ne.s32.totalorder %s140, %s154
      %p156 = scmp.eq.s32.totalorder %s25, 0
      %p157 = por %p155, %p156
      %s159 = sadd.s32 %s158, 1
      %p162 = scmp.eq.s32.totalorder %s19, 1
      %p163 = scmp.ne.s32.totalorder %s158, %s160
      %p164 = scmp.eq.s32.totalorder %s19, 0
      %p165 = por %p163, %p164
      %p166 = scmp.ne.s32.totalorder %s158, %s160
      %p167 = scmp.eq.s32.totalorder %s24, 1
      %p168 = por %p166, %p167
      %p169 = scmp.ne.s32.totalorder %s160, %s161
      %p170 = scmp.eq.s32.totalorder %s24, 0
      %p171 = por %p169, %p170
      %p172 = scmp.ne.s32.totalorder %s160, %s161
      %p173 = scmp.eq.s32.totalorder %s25, 1
      %p174 = por %p172, %p173
      %p176 = scmp.ne.s32.totalorder %s161, %s175
      %p177 = scmp.eq.s32.totalorder %s25, 0
      %p178 = por %p176, %p177
      %s180 = sadd.s32 %s179, 1
      %p183 = scmp.eq.s32.totalorder %s19, 1
      %p184 = scmp.ne.s32.totalorder %s179, %s181
      %p185 = scmp.eq.s32.totalorder %s19, 0
      %p186 = por %p184, %p185
      %p187 = scmp.ne.s32.totalorder %s179, %s181
      %p188 = scmp.eq.s32.totalorder %s24, 1
      %p189 = por %p187, %p188
      %p190 = scmp.ne.s32.totalorder %s181, %s182
      %p191 = scmp.eq.s32.totalorder %s24, 0
      %p192 = por %p190, %p191
      %p193 = scmp.ne.s32.totalorder %s181, %s182
      %p194 = scmp.eq.s32.totalorder %s25, 1
      %p195 = por %p193, %p194
      %p197 = scmp.ne.s32.totalorder %s182, %s196
      %p198 = scmp.eq.s32.totalorder %s25, 0
      %p199 = por %p197, %p198
      %s201 = sadd.s32 %s200, 1
      %p204 = scmp.eq.s32.totalorder %s19, 1
      %p205 = scmp.ne.s32.totalorder %s200, %s202
      %p206 = scmp.eq.s32.totalorder %s19, 0
      %p207 = por %p205, %p206
      %p208 = scmp.ne.s32.totalorder %s200, %s202
      %p209 = scmp.eq.s32.totalorder %s24, 1
      %p210 = por %p208, %p209
      %p211 = scmp.ne.s32.totalorder %s202, %s203
      %p212 = scmp.eq.s32.totalorder %s24, 0
      %p213 = por %p211, %p212
      %p214 = scmp.ne.s32.totalorder %s202, %s203
      %p215 = scmp.eq.s32.totalorder %s25, 1
      %p216 = por %p214, %p215
      %p218 = scmp.ne.s32.totalorder %s203, %s217
      %p219 = scmp.eq.s32.totalorder %s25, 0
      %p220 = por %p218, %p219
      %s222 = sadd.s32 %s221, 1
      %p225 = scmp.eq.s32.totalorder %s19, 1
      %p226 = scmp.ne.s32.totalorder %s221, %s223
      %p227 = scmp.eq.s32.totalorder %s19, 0
      %p228 = por %p226, %p227
      %p229 = scmp.ne.s32.totalorder %s221, %s223
      %p230 = scmp.eq.s32.totalorder %s24, 1
      %p231 = por %p229, %p230
      %p232 = scmp.ne.s32.totalorder %s223, %s224
      %p233 = scmp.eq.s32.totalorder %s24, 0
      %p234 = por %p232, %p233
      %p235 = scmp.ne.s32.totalorder %s223, %s224
      %p236 = scmp.eq.s32.totalorder %s25, 1
      %p237 = por %p235, %p236
      %p239 = scmp.ne.s32.totalorder %s224, %s238
      %p240 = scmp.eq.s32.totalorder %s25, 0
      %p241 = por %p239, %p240
      %s242 = ssub.s32 %s19, %s26
      %p243 = scmp.eq.s32.totalorder %s242, 0
      %s245 = sadd.s32 %s244, 1
      %s246 = scalar_select %p243, %s244, %s245
      %p249 = pneg %p243
      %p250 = scmp.eq.s32.totalorder %s19, 1
      %p251 = por %p249, %p250
      %p252 = scmp.ne.s32.totalorder %s244, %s247
      %p253 = scmp.eq.s32.totalorder %s19, 0
      %p254 = por %p252, %p253
      %p255 = scmp.ne.s32.totalorder %s244, %s247
      %p256 = scmp.eq.s32.totalorder %s24, 1
      %p257 = por %p255, %p256
      %p258 = scmp.ne.s32.totalorder %s247, %s248
      %p259 = scmp.eq.s32.totalorder %s24, 0
      %p260 = por %p258, %p259
      %p261 = scmp.ne.s32.totalorder %s247, %s248
      %p262 = scmp.eq.s32.totalorder %s25, 1
      %p263 = por %p261, %p262
      %p265 = scmp.ne.s32.totalorder %s248, %s264
      %p266 = scmp.eq.s32.totalorder %s25, 0
      %p267 = por %p265, %p266
      %p268 = scmp.le.s32.totalorder 1, %s19
      %p269 = scmp.lt.s32.totalorder %s19, 3
      %p270 = pnand %p268, %p269
      %p271 = pneg %p270
      // Predicated region
      $region9: #{tpu_custom_call.1} parent=5 // pred_check
        _
      $region10: #{tpu_custom_call.1} parent=5 // pred_check_branch
        %273 = sbr.rel (%p270) target = $region12
      $region11: #{tpu_custom_call.1} parent=5 // pred_region
        %s274 = ssub.s32 %s19, 1
        // Predicated region
        $region13: #{tpu_custom_call.1} parent=11 // pred_check
          %p275 = pneg %p66
        $region14: #{tpu_custom_call.1} parent=11 // pred_check_branch
          %277 = sbr.rel (%p275) target = $region16
        $region15: #{tpu_custom_call.1} parent=11 // pred_region
          _
        $region16: #{tpu_custom_call.1} parent=11 // pred_fallthru
          _
        // Predicated region
        $region17: #{tpu_custom_call.1} parent=11 // pred_check
          %p278 = pneg %p87
        $region18: #{tpu_custom_call.1} parent=11 // pred_check_branch
          %280 = sbr.rel (%p278) target = $region20
        $region19: #{tpu_custom_call.1} parent=11 // pred_region
          _
        $region20: #{tpu_custom_call.1} parent=11 // pred_fallthru
          _
        // Predicated region
        $region21: #{tpu_custom_call.1} parent=11 // pred_check
          %p281 = pneg %p108
        $region22: #{tpu_custom_call.1} parent=11 // pred_check_branch
          %283 = sbr.rel (%p281) target = $region24
        $region23: #{tpu_custom_call.1} parent=11 // pred_region
          _
        $region24: #{tpu_custom_call.1} parent=11 // pred_fallthru
          _
        // Predicated region
        $region25: #{tpu_custom_call.1} parent=11 // pred_check
          %p284 = pneg %p129
        $region26: #{tpu_custom_call.1} parent=11 // pred_check_branch
          %286 = sbr.rel (%p284) target = $region28
        $region27: #{tpu_custom_call.1} parent=11 // pred_region
          _
        $region28: #{tpu_custom_call.1} parent=11 // pred_fallthru
          _
        // Predicated region
        $region29: #{tpu_custom_call.1} parent=11 // pred_check
          %p287 = pneg %p150
        $region30: #{tpu_custom_call.1} parent=11 // pred_check_branch
          %289 = sbr.rel (%p287) target = $region32
        $region31: #{tpu_custom_call.1} parent=11 // pred_region
          _
        $region32: #{tpu_custom_call.1} parent=11 // pred_fallthru
          _
        // Predicated region
        $region33: #{tpu_custom_call.1} parent=11 // pred_check
          %p290 = pneg %p171
        $region34: #{tpu_custom_call.1} parent=11 // pred_check_branch
          %292 = sbr.rel (%p290) target = $region36
        $region35: #{tpu_custom_call.1} parent=11 // pred_region
          _
        $region36: #{tpu_custom_call.1} parent=11 // pred_fallthru
          _
        // Predicated region
        $region37: #{tpu_custom_call.1} parent=11 // pred_check
          %p293 = pneg %p192
        $region38: #{tpu_custom_call.1} parent=11 // pred_check_branch
          %295 = sbr.rel (%p293) target = $region40
        $region39: #{tpu_custom_call.1} parent=11 // pred_region
          _
        $region40: #{tpu_custom_call.1} parent=11 // pred_fallthru
          _
        // Predicated region
        $region41: #{tpu_custom_call.1} parent=11 // pred_check
          %p296 = pneg %p213
        $region42: #{tpu_custom_call.1} parent=11 // pred_check_branch
          %298 = sbr.rel (%p296) target = $region44
        $region43: #{tpu_custom_call.1} parent=11 // pred_region
          _
        $region44: #{tpu_custom_call.1} parent=11 // pred_fallthru
          _
        // Predicated region
        $region45: #{tpu_custom_call.1} parent=11 // pred_check
          %p299 = pneg %p234
        $region46: #{tpu_custom_call.1} parent=11 // pred_check_branch
          %301 = sbr.rel (%p299) target = $region48
        $region47: #{tpu_custom_call.1} parent=11 // pred_region
          _
        $region48: #{tpu_custom_call.1} parent=11 // pred_fallthru
          _
      $region12: #{tpu_custom_call.1} parent=5 // pred_fallthru
        _
      %p302 = scmp.lt.s32.totalorder %s19, 2
      // Predicated region
      $region49: #{tpu_custom_call.1} parent=5 // pred_check
        %p303 = pneg %p302
      $region50: #{tpu_custom_call.1} parent=5 // pred_check_branch
        %305 = sbr.rel (%p303) target = $region52
      $region51: #{tpu_custom_call.1} parent=5 // pred_region
        // Predicated region
        $region53: #{tpu_custom_call.1} parent=51 // pred_check
          %p306 = pneg %p39
        $region54: #{tpu_custom_call.1} parent=51 // pred_check_branch
          %308 = sbr.rel (%p306) target = $region56
        $region55: #{tpu_custom_call.1} parent=51 // pred_region
          %p309 = scmp.lt.s32.totalorder %s19, 1
          %s310 = scalar_select %p309, %s19, 1
          %s311 = smul.addr %s310, 3
          %s312 = smul.addr %s311, 4
          %s313 = scalar_lea.vmem %s0, %s312
        $region56: #{tpu_custom_call.1} parent=51 // pred_fallthru
          _
      $region52: #{tpu_custom_call.1} parent=5 // pred_fallthru
        _
      %p314 = scmp.le.s32.totalorder 1, %s19
      %p315 = scmp.lt.s32.totalorder %s19, 3
      %p316 = pnand %p314, %p315
      %p317 = pneg %p316
      // Predicated region
      $region57: #{tpu_custom_call.1} parent=5 // pred_check
        _
      $region58: #{tpu_custom_call.1} parent=5 // pred_check_branch
        %319 = sbr.rel (%p316) target = $region60
      $region59: #{tpu_custom_call.1} parent=5 // pred_region
        %s320 = ssub.s32 %s19, 1
        %p321 = scmp.lt.s32.totalorder %s24, 1
        %s322 = scalar_select %p321, %s24, 1
        %s323 = smul.addr %s322, 3
        %s324 = smul.addr %s323, 4
        %s325 = scalar_lea.vmem %s0, %s324
        %p326 = pneg %p45
        %p327 = pneg %p42
        %p328 = pneg %p66
        %p329 = pneg %p63
        %p330 = pneg %p87
        %p331 = pneg %p84
        %p332 = pneg %p108
        %p333 = pneg %p105
        %p334 = pneg %p129
        %p335 = pneg %p126
        %p336 = pneg %p150
        %p337 = pneg %p147
        %p338 = pneg %p171
        %p339 = pneg %p168
        %p340 = pneg %p192
        %p341 = pneg %p189
        %p342 = pneg %p213
        %p343 = pneg %p210
        %p344 = pneg %p234
        %p345 = pneg %p231
        %p346 = pneg %p260
        %p347 = pneg %p257
        %s348 = sand.u32 %s247, 1
        %s349 = scalar_lea.sflag [#allocation4], %s348
        %s350 = sand.u32 %s247, 1
        %s351 = smul.addr %s350, 12
        %s352 = scalar_lea.vmem [#allocation3], %s351
        %p353 = scmp.lt.s32.totalorder %s24, 1
        %s354 = scalar_select %p353, %s24, 1
        %s355 = smul.addr %s354, 3
        %s356 = smul.addr %s355, 4
        %s357 = scalar_lea.vmem %s0, %s356
        %v358 = vld [vmem:[%s1] sm:$0x7]
        %v359 = vld [vmem:[%s357] sm:$0xff]
        %v360 = vld [vmem:[%s357 + $0x8] sm:$0xf]
        %v361 = vld [vmem:[%s2] sm:$0xf]
        %s362 = scalar_lea.vmem %s2, 4
        %v363 = vld [vmem:[%s362] sm:$0xf]
        %v366 = vcombine.high %v359, %v359
        %367 = vrot.lane.b32.xlu0 %v359, 127
        %v368 = vpop.permute.xlu0 %367
        %369 = vrot.lane.b32.xlu0 %v366, 127
        %v370 = vpop.permute.xlu0 %369
        %371 = vrot.lane.b32.xlu0 %v360, 127
        %v372 = vpop.permute.xlu0 %371
        %vm373 = vcmask 1039360
        %v374 = vsel %vm373, %v368, %v370
        %v375 = vsel %vm373, %v370, %v372
        %vm376 = vcmask 31744
        %v378 = vsel %vm376, %v363, 0
        %vm380 = vcmask 1043456
        %v381 = vsel %vm380, %v374, 0
        %v383 = vsel %vm380, %v375, 0
        %v385 = vsel %vm380, %v372, 0
        %387 = vmatprep.subr.mxu0 %v383
        %388 = vmatpush1.msra.mxu0 %v381
        %389 = vmatprep.subr.mxu0 0.0
        %390 = vmatpush1.msra.mxu0 0.0
        %391 = vmatprep.subr.mxu0 0.0
        %392 = vmatpush1.msra.mxu0 0.0
        %393 = vmatprep.subr.mxu0 0.0
        %394 = vmatpush1.msra.mxu0 0.0
        %395 = vmatprep.subr.mxu0 0.0
        %396 = vmatpush1.msra.mxu0 0.0
        %397 = vmatprep.subr.mxu0 0.0
        %398 = vmatpush1.msra.mxu0 0.0
        %399 = vmatprep.subr.mxu0 0.0
        %400 = vmatpush1.msra.mxu0 0.0
        %401 = vmatprep.subr.mxu0 0.0
        %402 = vmatpush1.msra.mxu0 0.0
        %403 = vmatprep.subr.mxu0 0.0
        %404 = vmatpush1.msra.mxu0 0.0
        %405 = vmatprep.subr.mxu0 0.0
        %406 = vmatpush1.msra.mxu0 0.0
        %407 = vmatprep.subr.mxu0 0.0
        %408 = vmatpush1.msra.mxu0 0.0
        %409 = vmatprep.subr.mxu0 0.0
        %410 = vmatpush1.msra.mxu0 0.0
        %411 = vmatprep.subr.mxu0 0.0
        %412 = vmatpush1.msra.mxu0 0.0
        %413 = vmatprep.subr.mxu0 0.0
        %414 = vmatpush1.msra.mxu0 0.0
        %415 = vmatprep.subr.mxu0 0.0
        %416 = vmatpush1.msra.mxu0 0.0
        %417 = vmatprep.subr.mxu0 0.0
        %418 = vmatpush1.msra.mxu0 0.0
        %419 = vmatprep.subr.mxu0 0.0
        %420 = vmatpush1.msra.mxu0 0.0
        %421 = vmatprep.subr.mxu0 0.0
        %422 = vmatpush1.msra.mxu0 0.0
        %423 = vmatprep.subr.mxu0 0.0
        %424 = vmatpush1.msra.mxu0 0.0
        %425 = vmatprep.subr.mxu0 0.0
        %426 = vmatpush1.msra.mxu0 0.0
        %427 = vmatprep.subr.mxu0 0.0
        %428 = vmatpush1.msra.mxu0 0.0
        %429 = vmatprep.subr.mxu0 0.0
        %430 = vmatpush1.msra.mxu0 0.0
        %431 = vmatprep.subr.mxu0 0.0
        %432 = vmatpush1.msra.mxu0 0.0
        %433 = vmatprep.subr.mxu0 0.0
        %434 = vmatpush1.msra.mxu0 0.0
        %435 = vmatprep.subr.mxu0 0.0
        %436 = vmatpush1.msra.mxu0 0.0
        %437 = vmatprep.subr.mxu0 0.0
        %438 = vmatpush1.msra.mxu0 0.0
        %439 = vmatprep.subr.mxu0 0.0
        %440 = vmatpush1.msra.mxu0 0.0
        %441 = vmatprep.subr.mxu0 0.0
        %442 = vmatpush1.msra.mxu0 0.0
        %443 = vmatprep.subr.mxu0 0.0
        %444 = vmatpush1.msra.mxu0 0.0
        %445 = vmatprep.subr.mxu0 0.0
        %446 = vmatpush1.msra.mxu0 0.0
        %447 = vmatprep.subr.mxu0 0.0
        %448 = vmatpush1.msra.mxu0 0.0
        %449 = vmatprep.subr.mxu0 0.0
        %450 = vmatpush1.msra.mxu0 0.0
        %451 = vmatprep.mubr.f32.mxu0 0.0
        %452 = vmatmul.mubr.f32.gmra.mrb[0].mxu0 %v378
        %v453 = vpop.f32.mrb[0].mxu0
        %v454 = vadd.f32 0.0, %v453
        %v455 = vpop.f32.mrb[0].mxu0
        %v456 = vadd.f32 0.0, %v455
        %457 = vdwg.mxu0
        %458 = vmatprep.subr.mxu0 0.0
        %459 = vmatpush1.msra.mxu0 %v385
        %460 = vmatprep.subr.mxu0 0.0
        %461 = vmatpush1.msra.mxu0 0.0
        %462 = vmatprep.subr.mxu0 0.0
        %463 = vmatpush1.msra.mxu0 0.0
        %464 = vmatprep.subr.mxu0 0.0
        %465 = vmatpush1.msra.mxu0 0.0
        %466 = vmatprep.subr.mxu0 0.0
        %467 = vmatpush1.msra.mxu0 0.0
        %468 = vmatprep.subr.mxu0 0.0
        %469 = vmatpush1.msra.mxu0 0.0
        %470 = vmatprep.subr.mxu0 0.0
        %471 = vmatpush1.msra.mxu0 0.0
        %472 = vmatprep.subr.mxu0 0.0
        %473 = vmatpush1.msra.mxu0 0.0
        %474 = vmatprep.subr.mxu0 0.0
        %475 = vmatpush1.msra.mxu0 0.0
        %476 = vmatprep.subr.mxu0 0.0
        %477 = vmatpush1.msra.mxu0 0.0
        %478 = vmatprep.subr.mxu0 0.0
        %479 = vmatpush1.msra.mxu0 0.0
        %480 = vmatprep.subr.mxu0 0.0
        %481 = vmatpush1.msra.mxu0 0.0
        %482 = vmatprep.subr.mxu0 0.0
        %483 = vmatpush1.msra.mxu0 0.0
        %484 = vmatprep.subr.mxu0 0.0
        %485 = vmatpush1.msra.mxu0 0.0
        %486 = vmatprep.subr.mxu0 0.0
        %487 = vmatpush1.msra.mxu0 0.0
        %488 = vmatprep.subr.mxu0 0.0
        %489 = vmatpush1.msra.mxu0 0.0
        %490 = vmatprep.subr.mxu0 0.0
        %491 = vmatpush1.msra.mxu0 0.0
        %492 = vmatprep.subr.mxu0 0.0
        %493 = vmatpush1.msra.mxu0 0.0
        %494 = vmatprep.subr.mxu0 0.0
        %495 = vmatpush1.msra.mxu0 0.0
        %496 = vmatprep.subr.mxu0 0.0
        %497 = vmatpush1.msra.mxu0 0.0
        %498 = vmatprep.subr.mxu0 0.0
        %499 = vmatpush1.msra.mxu0 0.0
        %500 = vmatprep.subr.mxu0 0.0
        %501 = vmatpush1.msra.mxu0 0.0
        %502 = vmatprep.subr.mxu0 0.0
        %503 = vmatpush1.msra.mxu0 0.0
        %504 = vmatprep.subr.mxu0 0.0
        %505 = vmatpush1.msra.mxu0 0.0
        %506 = vmatprep.subr.mxu0 0.0
        %507 = vmatpush1.msra.mxu0 0.0
        %508 = vmatprep.subr.mxu0 0.0
        %509 = vmatpush1.msra.mxu0 0.0
        %510 = vmatprep.subr.mxu0 0.0
        %511 = vmatpush1.msra.mxu0 0.0
        %512 = vmatprep.subr.mxu0 0.0
        %513 = vmatpush1.msra.mxu0 0.0
        %514 = vmatprep.subr.mxu0 0.0
        %515 = vmatpush1.msra.mxu0 0.0
        %516 = vmatprep.subr.mxu0 0.0
        %517 = vmatpush1.msra.mxu0 0.0
        %518 = vmatprep.subr.mxu0 0.0
        %519 = vmatpush1.msra.mxu0 0.0
        %520 = vmatprep.subr.mxu0 0.0
        %521 = vmatpush1.msra.mxu0 0.0
        %522 = vmatprep.mubr.f32.mxu0 0.0
        %523 = vmatmul.mubr.f32.gmra.mrb[0].mxu0 %v378
        %v524 = vpop.f32.mrb[0].mxu0
        %v525 = vadd.f32 0.0, %v524
        %v526 = vpop.f32.mrb[0].mxu0
        %527 = vdwg.mxu0
        %v529 = vsel %vm376, %v361, 0
        %v531 = vsel %vm380, %v359, 0
        %v533 = vsel %vm380, %v366, 0
        %v535 = vsel %vm380, %v360, 0
        %537 = vmatprep.subr.mxu0 %v533
        %538 = vmatpush1.msra.mxu0 %v531
        %539 = vmatprep.subr.mxu0 0.0
        %540 = vmatpush1.msra.mxu0 0.0
        %541 = vmatprep.subr.mxu0 0.0
        %542 = vmatpush1.msra.mxu0 0.0
        %543 = vmatprep.subr.mxu0 0.0
        %544 = vmatpush1.msra.mxu0 0.0
        %545 = vmatprep.subr.mxu0 0.0
        %546 = vmatpush1.msra.mxu0 0.0
        %547 = vmatprep.subr.mxu0 0.0
        %548 = vmatpush1.msra.mxu0 0.0
        %549 = vmatprep.subr.mxu0 0.0
        %550 = vmatpush1.msra.mxu0 0.0
        %551 = vmatprep.subr.mxu0 0.0
        %552 = vmatpush1.msra.mxu0 0.0
        %553 = vmatprep.subr.mxu0 0.0
        %554 = vmatpush1.msra.mxu0 0.0
        %555 = vmatprep.subr.mxu0 0.0
        %556 = vmatpush1.msra.mxu0 0.0
        %557 = vmatprep.subr.mxu0 0.0
        %558 = vmatpush1.msra.mxu0 0.0
        %559 = vmatprep.subr.mxu0 0.0
        %560 = vmatpush1.msra.mxu0 0.0
        %561 = vmatprep.subr.mxu0 0.0
        %562 = vmatpush1.msra.mxu0 0.0
        %563 = vmatprep.subr.mxu0 0.0
        %564 = vmatpush1.msra.mxu0 0.0
        %565 = vmatprep.subr.mxu0 0.0
        %566 = vmatpush1.msra.mxu0 0.0
        %567 = vmatprep.subr.mxu0 0.0
        %568 = vmatpush1.msra.mxu0 0.0
        %569 = vmatprep.subr.mxu0 0.0
        %570 = vmatpush1.msra.mxu0 0.0
        %571 = vmatprep.subr.mxu0 0.0
        %572 = vmatpush1.msra.mxu0 0.0
        %573 = vmatprep.subr.mxu0 0.0
        %574 = vmatpush1.msra.mxu0 0.0
        %575 = vmatprep.subr.mxu0 0.0
        %576 = vmatpush1.msra.mxu0 0.0
        %577 = vmatprep.subr.mxu0 0.0
        %578 = vmatpush1.msra.mxu0 0.0
        %579 = vmatprep.subr.mxu0 0.0
        %580 = vmatpush1.msra.mxu0 0.0
        %581 = vmatprep.subr.mxu0 0.0
        %582 = vmatpush1.msra.mxu0 0.0
        %583 = vmatprep.subr.mxu0 0.0
        %584 = vmatpush1.msra.mxu0 0.0
        %585 = vmatprep.subr.mxu0 0.0
        %586 = vmatpush1.msra.mxu0 0.0
        %587 = vmatprep.subr.mxu0 0.0
        %588 = vmatpush1.msra.mxu0 0.0
        %589 = vmatprep.subr.mxu0 0.0
        %590 = vmatpush1.msra.mxu0 0.0
        %591 = vmatprep.subr.mxu0 0.0
        %592 = vmatpush1.msra.mxu0 0.0
        %593 = vmatprep.subr.mxu0 0.0
        %594 = vmatpush1.msra.mxu0 0.0
        %595 = vmatprep.subr.mxu0 0.0
        %596 = vmatpush1.msra.mxu0 0.0
        %597 = vmatprep.subr.mxu0 0.0
        %598 = vmatpush1.msra.mxu0 0.0
        %599 = vmatprep.subr.mxu0 0.0
        %600 = vmatpush1.msra.mxu0 0.0
        %601 = vmatprep.mubr.f32.mxu0 0.0
        %602 = vmatmul.mubr.f32.gmra.mrb[0].mxu0 %v529
        %v603 = vpop.f32.mrb[0].mxu0
        %v604 = vadd.f32 %v454, %v603
        %v605 = vpop.f32.mrb[0].mxu0
        %v606 = vadd.f32 %v456, %v605
        %607 = vdwg.mxu0
        %608 = vmatprep.subr.mxu0 0.0
        %609 = vmatpush1.msra.mxu0 %v535
        %610 = vmatprep.subr.mxu0 0.0
        %611 = vmatpush1.msra.mxu0 0.0
        %612 = vmatprep.subr.mxu0 0.0
        %613 = vmatpush1.msra.mxu0 0.0
        %614 = vmatprep.subr.mxu0 0.0
        %615 = vmatpush1.msra.mxu0 0.0
        %616 = vmatprep.subr.mxu0 0.0
        %617 = vmatpush1.msra.mxu0 0.0
        %618 = vmatprep.subr.mxu0 0.0
        %619 = vmatpush1.msra.mxu0 0.0
        %620 = vmatprep.subr.mxu0 0.0
        %621 = vmatpush1.msra.mxu0 0.0
        %622 = vmatprep.subr.mxu0 0.0
        %623 = vmatpush1.msra.mxu0 0.0
        %624 = vmatprep.subr.mxu0 0.0
        %625 = vmatpush1.msra.mxu0 0.0
        %626 = vmatprep.subr.mxu0 0.0
        %627 = vmatpush1.msra.mxu0 0.0
        %628 = vmatprep.subr.mxu0 0.0
        %629 = vmatpush1.msra.mxu0 0.0
        %630 = vmatprep.subr.mxu0 0.0
        %631 = vmatpush1.msra.mxu0 0.0
        %632 = vmatprep.subr.mxu0 0.0
        %633 = vmatpush1.msra.mxu0 0.0
        %634 = vmatprep.subr.mxu0 0.0
        %635 = vmatpush1.msra.mxu0 0.0
        %636 = vmatprep.subr.mxu0 0.0
        %637 = vmatpush1.msra.mxu0 0.0
        %638 = vmatprep.subr.mxu0 0.0
        %639 = vmatpush1.msra.mxu0 0.0
        %640 = vmatprep.subr.mxu0 0.0
        %641 = vmatpush1.msra.mxu0 0.0
        %642 = vmatprep.subr.mxu0 0.0
        %643 = vmatpush1.msra.mxu0 0.0
        %644 = vmatprep.subr.mxu0 0.0
        %645 = vmatpush1.msra.mxu0 0.0
        %646 = vmatprep.subr.mxu0 0.0
        %647 = vmatpush1.msra.mxu0 0.0
        %648 = vmatprep.subr.mxu0 0.0
        %649 = vmatpush1.msra.mxu0 0.0
        %650 = vmatprep.subr.mxu0 0.0
        %651 = vmatpush1.msra.mxu0 0.0
        %652 = vmatprep.subr.mxu0 0.0
        %653 = vmatpush1.msra.mxu0 0.0
        %654 = vmatprep.subr.mxu0 0.0
        %655 = vmatpush1.msra.mxu0 0.0
        %656 = vmatprep.subr.mxu0 0.0
        %657 = vmatpush1.msra.mxu0 0.0
        %658 = vmatprep.subr.mxu0 0.0
        %659 = vmatpush1.msra.mxu0 0.0
        %660 = vmatprep.subr.mxu0 0.0
        %661 = vmatpush1.msra.mxu0 0.0
        %662 = vmatprep.subr.mxu0 0.0
        %663 = vmatpush1.msra.mxu0 0.0
        %664 = vmatprep.subr.mxu0 0.0
        %665 = vmatpush1.msra.mxu0 0.0
        %666 = vmatprep.subr.mxu0 0.0
        %667 = vmatpush1.msra.mxu0 0.0
        %668 = vmatprep.subr.mxu0 0.0
        %669 = vmatpush1.msra.mxu0 0.0
        %670 = vmatprep.subr.mxu0 0.0
        %671 = vmatpush1.msra.mxu0 0.0
        %672 = vmatprep.mubr.f32.mxu0 0.0
        %673 = vmatmul.mubr.f32.gmra.mrb[0].mxu0 %v529
        %v674 = vpop.f32.mrb[0].mxu0
        %v675 = vadd.f32 %v525, %v674
        %v676 = vpop.f32.mrb[0].mxu0
        %677 = vdwg.mxu0
        %v678 = vld [vmem:[%s357] sm:$0xff]
        %v679 = vld [vmem:[%s357 + $0x8] sm:$0xf]
        %s680 = scalar_lea.vmem %s2, 8
        %v681 = vld [vmem:[%s680] sm:$0xf]
        %v684 = vcombine.high %v678, %v678
        %685 = vrot.lane.b32.xlu0 %v678, 126
        %v686 = vpop.permute.xlu0 %685
        %687 = vrot.lane.b32.xlu0 %v684, 126
        %v688 = vpop.permute.xlu0 %687
        %689 = vrot.lane.b32.xlu0 %v679, 126
        %v690 = vpop.permute.xlu0 %689
        %vm691 = vcmask 1031168
        %v692 = vsel %vm691, %v686, %v688
        %v693 = vsel %vm691, %v688, %v690
        %v695 = vsel %vm376, %v681, 0
        %v697 = vsel %vm380, %v692, 0
        %v699 = vsel %vm380, %v693, 0
        %v701 = vsel %vm380, %v690, 0
        %703 = vmatprep.subr.mxu0 %v699
        %704 = vmatpush1.msra.mxu0 %v697
        %705 = vmatprep.subr.mxu0 0.0
        %706 = vmatpush1.msra.mxu0 0.0
        %707 = vmatprep.subr.mxu0 0.0
        %708 = vmatpush1.msra.mxu0 0.0
        %709 = vmatprep.subr.mxu0 0.0
        %710 = vmatpush1.msra.mxu0 0.0
        %711 = vmatprep.subr.mxu0 0.0
        %712 = vmatpush1.msra.mxu0 0.0
        %713 = vmatprep.subr.mxu0 0.0
        %714 = vmatpush1.msra.mxu0 0.0
        %715 = vmatprep.subr.mxu0 0.0
        %716 = vmatpush1.msra.mxu0 0.0
        %717 = vmatprep.subr.mxu0 0.0
        %718 = vmatpush1.msra.mxu0 0.0
        %719 = vmatprep.subr.mxu0 0.0
        %720 = vmatpush1.msra.mxu0 0.0
        %721 = vmatprep.subr.mxu0 0.0
        %722 = vmatpush1.msra.mxu0 0.0
        %723 = vmatprep.subr.mxu0 0.0
        %724 = vmatpush1.msra.mxu0 0.0
        %725 = vmatprep.subr.mxu0 0.0
        %726 = vmatpush1.msra.mxu0 0.0
        %727 = vmatprep.subr.mxu0 0.0
        %728 = vmatpush1.msra.mxu0 0.0
        %729 = vmatprep.subr.mxu0 0.0
        %730 = vmatpush1.msra.mxu0 0.0
        %731 = vmatprep.subr.mxu0 0.0
        %732 = vmatpush1.msra.mxu0 0.0
        %733 = vmatprep.subr.mxu0 0.0
        %734 = vmatpush1.msra.mxu0 0.0
        %735 = vmatprep.subr.mxu0 0.0
        %736 = vmatpush1.msra.mxu0 0.0
        %737 = vmatprep.subr.mxu0 0.0
        %738 = vmatpush1.msra.mxu0 0.0
        %739 = vmatprep.subr.mxu0 0.0
        %740 = vmatpush1.msra.mxu0 0.0
        %741 = vmatprep.subr.mxu0 0.0
        %742 = vmatpush1.msra.mxu0 0.0
        %743 = vmatprep.subr.mxu0 0.0
        %744 = vmatpush1.msra.mxu0 0.0
        %745 = vmatprep.subr.mxu0 0.0
        %746 = vmatpush1.msra.mxu0 0.0
        %747 = vmatprep.subr.mxu0 0.0
        %748 = vmatpush1.msra.mxu0 0.0
        %749 = vmatprep.subr.mxu0 0.0
        %750 = vmatpush1.msra.mxu0 0.0
        %751 = vmatprep.subr.mxu0 0.0
        %752 = vmatpush1.msra.mxu0 0.0
        %753 = vmatprep.subr.mxu0 0.0
        %754 = vmatpush1.msra.mxu0 0.0
        %755 = vmatprep.subr.mxu0 0.0
        %756 = vmatpush1.msra.mxu0 0.0
        %757 = vmatprep.subr.mxu0 0.0
        %758 = vmatpush1.msra.mxu0 0.0
        %759 = vmatprep.subr.mxu0 0.0
        %760 = vmatpush1.msra.mxu0 0.0
        %761 = vmatprep.subr.mxu0 0.0
        %762 = vmatpush1.msra.mxu0 0.0
        %763 = vmatprep.subr.mxu0 0.0
        %764 = vmatpush1.msra.mxu0 0.0
        %765 = vmatprep.subr.mxu0 0.0
        %766 = vmatpush1.msra.mxu0 0.0
        %767 = vmatprep.mubr.f32.mxu0 0.0
        %768 = vmatmul.mubr.f32.gmra.mrb[0].mxu0 %v695
        %v769 = vpop.f32.mrb[0].mxu0
        %v770 = vadd.f32 0.0, %v769
        %v771 = vpop.f32.mrb[0].mxu0
        %v772 = vadd.f32 0.0, %v771
        %773 = vdwg.mxu0
        %774 = vmatprep.subr.mxu0 0.0
        %775 = vmatpush1.msra.mxu0 %v701
        %776 = vmatprep.subr.mxu0 0.0
        %777 = vmatpush1.msra.mxu0 0.0
        %778 = vmatprep.subr.mxu0 0.0
        %779 = vmatpush1.msra.mxu0 0.0
        %780 = vmatprep.subr.mxu0 0.0
        %781 = vmatpush1.msra.mxu0 0.0
        %782 = vmatprep.subr.mxu0 0.0
        %783 = vmatpush1.msra.mxu0 0.0
        %784 = vmatprep.subr.mxu0 0.0
        %785 = vmatpush1.msra.mxu0 0.0
        %786 = vmatprep.subr.mxu0 0.0
        %787 = vmatpush1.msra.mxu0 0.0
        %788 = vmatprep.subr.mxu0 0.0
        %789 = vmatpush1.msra.mxu0 0.0
        %790 = vmatprep.subr.mxu0 0.0
        %791 = vmatpush1.msra.mxu0 0.0
        %792 = vmatprep.subr.mxu0 0.0
        %793 = vmatpush1.msra.mxu0 0.0
        %794 = vmatprep.subr.mxu0 0.0
        %795 = vmatpush1.msra.mxu0 0.0
        %796 = vmatprep.subr.mxu0 0.0
        %797 = vmatpush1.msra.mxu0 0.0
        %798 = vmatprep.subr.mxu0 0.0
        %799 = vmatpush1.msra.mxu0 0.0
        %800 = vmatprep.subr.mxu0 0.0
        %801 = vmatpush1.msra.mxu0 0.0
        %802 = vmatprep.subr.mxu0 0.0
        %803 = vmatpush1.msra.mxu0 0.0
        %804 = vmatprep.subr.mxu0 0.0
        %805 = vmatpush1.msra.mxu0 0.0
        %806 = vmatprep.subr.mxu0 0.0
        %807 = vmatpush1.msra.mxu0 0.0
        %808 = vmatprep.subr.mxu0 0.0
        %809 = vmatpush1.msra.mxu0 0.0
        %810 = vmatprep.subr.mxu0 0.0
        %811 = vmatpush1.msra.mxu0 0.0
        %812 = vmatprep.subr.mxu0 0.0
        %813 = vmatpush1.msra.mxu0 0.0
        %814 = vmatprep.subr.mxu0 0.0
        %815 = vmatpush1.msra.mxu0 0.0
        %816 = vmatprep.subr.mxu0 0.0
        %817 = vmatpush1.msra.mxu0 0.0
        %818 = vmatprep.subr.mxu0 0.0
        %819 = vmatpush1.msra.mxu0 0.0
        %820 = vmatprep.subr.mxu0 0.0
        %821 = vmatpush1.msra.mxu0 0.0
        %822 = vmatprep.subr.mxu0 0.0
        %823 = vmatpush1.msra.mxu0 0.0
        %824 = vmatprep.subr.mxu0 0.0
        %825 = vmatpush1.msra.mxu0 0.0
        %826 = vmatprep.subr.mxu0 0.0
        %827 = vmatpush1.msra.mxu0 0.0
        %828 = vmatprep.subr.mxu0 0.0
        %829 = vmatpush1.msra.mxu0 0.0
        %830 = vmatprep.subr.mxu0 0.0
        %831 = vmatpush1.msra.mxu0 0.0
        %832 = vmatprep.subr.mxu0 0.0
        %833 = vmatpush1.msra.mxu0 0.0
        %834 = vmatprep.subr.mxu0 0.0
        %835 = vmatpush1.msra.mxu0 0.0
        %836 = vmatprep.subr.mxu0 0.0
        %837 = vmatpush1.msra.mxu0 0.0
        %838 = vmatprep.mubr.f32.mxu0 0.0
        %839 = vmatmul.mubr.f32.gmra.mrb[0].mxu0 %v695
        %v840 = vpop.f32.mrb[0].mxu0
        %v841 = vadd.f32 0.0, %v840
        %v842 = vpop.f32.mrb[0].mxu0
        %843 = vdwg.mxu0
        %v844 = vadd.f32 %v604, %v770
        %v845 = vadd.f32 %v606, %v772
        %v846 = vadd.f32 %v675, %v841
        %v847 = vld [vmem:[%s357] sm:$0xff]
        %v848 = vld [vmem:[%s357 + $0x8] sm:$0xf]
        %s849 = scalar_lea.vmem %s2, 12
        %v850 = vld [vmem:[%s849] sm:$0xf]
        %v853 = vcombine.high %v847, %v847
        %854 = vrot.lane.b32.xlu0 %v847, 110
        %v855 = vpop.permute.xlu0 %854
        %856 = vrot.lane.b32.xlu0 %v853, 110
        %v857 = vpop.permute.xlu0 %856
        %858 = vrot.lane.b32.xlu0 %v848, 110
        %v859 = vpop.permute.xlu0 %858
        %vm860 = vcmask 900096
        %v861 = vsel %vm860, %v855, %v857
        %v862 = vsel %vm860, %v857, %v859
        %v864 = vsel %vm376, %v850, 0
        %v866 = vsel %vm380, %v861, 0
        %v868 = vsel %vm380, %v862, 0
        %v870 = vsel %vm380, %v859, 0
        %872 = vmatprep.subr.mxu0 %v868
        %873 = vmatpush1.msra.mxu0 %v866
        %874 = vmatprep.subr.mxu0 0.0
        %875 = vmatpush1.msra.mxu0 0.0
        %876 = vmatprep.subr.mxu0 0.0
        %877 = vmatpush1.msra.mxu0 0.0
        %878 = vmatprep.subr.mxu0 0.0
        %879 = vmatpush1.msra.mxu0 0.0
        %880 = vmatprep.subr.mxu0 0.0
        %881 = vmatpush1.msra.mxu0 0.0
        %882 = vmatprep.subr.mxu0 0.0
        %883 = vmatpush1.msra.mxu0 0.0
        %884 = vmatprep.subr.mxu0 0.0
        %885 = vmatpush1.msra.mxu0 0.0
        %886 = vmatprep.subr.mxu0 0.0
        %887 = vmatpush1.msra.mxu0 0.0
        %888 = vmatprep.subr.mxu0 0.0
        %889 = vmatpush1.msra.mxu0 0.0
        %890 = vmatprep.subr.mxu0 0.0
        %891 = vmatpush1.msra.mxu0 0.0
        %892 = vmatprep.subr.mxu0 0.0
        %893 = vmatpush1.msra.mxu0 0.0
        %894 = vmatprep.subr.mxu0 0.0
        %895 = vmatpush1.msra.mxu0 0.0
        %896 = vmatprep.subr.mxu0 0.0
        %897 = vmatpush1.msra.mxu0 0.0
        %898 = vmatprep.subr.mxu0 0.0
        %899 = vmatpush1.msra.mxu0 0.0
        %900 = vmatprep.subr.mxu0 0.0
        %901 = vmatpush1.msra.mxu0 0.0
        %902 = vmatprep.subr.mxu0 0.0
        %903 = vmatpush1.msra.mxu0 0.0
        %904 = vmatprep.subr.mxu0 0.0
        %905 = vmatpush1.msra.mxu0 0.0
        %906 = vmatprep.subr.mxu0 0.0
        %907 = vmatpush1.msra.mxu0 0.0
        %908 = vmatprep.subr.mxu0 0.0
        %909 = vmatpush1.msra.mxu0 0.0
        %910 = vmatprep.subr.mxu0 0.0
        %911 = vmatpush1.msra.mxu0 0.0
        %912 = vmatprep.subr.mxu0 0.0
        %913 = vmatpush1.msra.mxu0 0.0
        %914 = vmatprep.subr.mxu0 0.0
        %915 = vmatpush1.msra.mxu0 0.0
        %916 = vmatprep.subr.mxu0 0.0
        %917 = vmatpush1.msra.mxu0 0.0
        %918 = vmatprep.subr.mxu0 0.0
        %919 = vmatpush1.msra.mxu0 0.0
        %920 = vmatprep.subr.mxu0 0.0
        %921 = vmatpush1.msra.mxu0 0.0
        %922 = vmatprep.subr.mxu0 0.0
        %923 = vmatpush1.msra.mxu0 0.0
        %924 = vmatprep.subr.mxu0 0.0
        %925 = vmatpush1.msra.mxu0 0.0
        %926 = vmatprep.subr.mxu0 0.0
        %927 = vmatpush1.msra.mxu0 0.0
        %928 = vmatprep.subr.mxu0 0.0
        %929 = vmatpush1.msra.mxu0 0.0
        %930 = vmatprep.subr.mxu0 0.0
        %931 = vmatpush1.msra.mxu0 0.0
        %932 = vmatprep.subr.mxu0 0.0
        %933 = vmatpush1.msra.mxu0 0.0
        %934 = vmatprep.subr.mxu0 0.0
        %935 = vmatpush1.msra.mxu0 0.0
        %936 = vmatprep.mubr.f32.mxu0 0.0
        %937 = vmatmul.mubr.f32.gmra.mrb[0].mxu0 %v864
        %v938 = vpop.f32.mrb[0].mxu0
        %v939 = vadd.f32 0.0, %v938
        %v940 = vpop.f32.mrb[0].mxu0
        %v941 = vadd.f32 0.0, %v940
        %942 = vdwg.mxu0
        %943 = vmatprep.subr.mxu0 0.0
        %944 = vmatpush1.msra.mxu0 %v870
        %945 = vmatprep.subr.mxu0 0.0
        %946 = vmatpush1.msra.mxu0 0.0
        %947 = vmatprep.subr.mxu0 0.0
        %948 = vmatpush1.msra.mxu0 0.0
        %949 = vmatprep.subr.mxu0 0.0
        %950 = vmatpush1.msra.mxu0 0.0
        %951 = vmatprep.subr.mxu0 0.0
        %952 = vmatpush1.msra.mxu0 0.0
        %953 = vmatprep.subr.mxu0 0.0
        %954 = vmatpush1.msra.mxu0 0.0
        %955 = vmatprep.subr.mxu0 0.0
        %956 = vmatpush1.msra.mxu0 0.0
        %957 = vmatprep.subr.mxu0 0.0
        %958 = vmatpush1.msra.mxu0 0.0
        %959 = vmatprep.subr.mxu0 0.0
        %960 = vmatpush1.msra.mxu0 0.0
        %961 = vmatprep.subr.mxu0 0.0
        %962 = vmatpush1.msra.mxu0 0.0
        %963 = vmatprep.subr.mxu0 0.0
        %964 = vmatpush1.msra.mxu0 0.0
        %965 = vmatprep.subr.mxu0 0.0
        %966 = vmatpush1.msra.mxu0 0.0
        %967 = vmatprep.subr.mxu0 0.0
        %968 = vmatpush1.msra.mxu0 0.0
        %969 = vmatprep.subr.mxu0 0.0
        %970 = vmatpush1.msra.mxu0 0.0
        %971 = vmatprep.subr.mxu0 0.0
        %972 = vmatpush1.msra.mxu0 0.0
        %973 = vmatprep.subr.mxu0 0.0
        %974 = vmatpush1.msra.mxu0 0.0
        %975 = vmatprep.subr.mxu0 0.0
        %976 = vmatpush1.msra.mxu0 0.0
        %977 = vmatprep.subr.mxu0 0.0
        %978 = vmatpush1.msra.mxu0 0.0
        %979 = vmatprep.subr.mxu0 0.0
        %980 = vmatpush1.msra.mxu0 0.0
        %981 = vmatprep.subr.mxu0 0.0
        %982 = vmatpush1.msra.mxu0 0.0
        %983 = vmatprep.subr.mxu0 0.0
        %984 = vmatpush1.msra.mxu0 0.0
        %985 = vmatprep.subr.mxu0 0.0
        %986 = vmatpush1.msra.mxu0 0.0
        %987 = vmatprep.subr.mxu0 0.0
        %988 = vmatpush1.msra.mxu0 0.0
        %989 = vmatprep.subr.mxu0 0.0
        %990 = vmatpush1.msra.mxu0 0.0
        %991 = vmatprep.subr.mxu0 0.0
        %992 = vmatpush1.msra.mxu0 0.0
        %993 = vmatprep.subr.mxu0 0.0
        %994 = vmatpush1.msra.mxu0 0.0
        %995 = vmatprep.subr.mxu0 0.0
        %996 = vmatpush1.msra.mxu0 0.0
        %997 = vmatprep.subr.mxu0 0.0
        %998 = vmatpush1.msra.mxu0 0.0
        %999 = vmatprep.subr.mxu0 0.0
        %1000 = vmatpush1.msra.mxu0 0.0
        %1001 = vmatprep.subr.mxu0 0.0
        %1002 = vmatpush1.msra.mxu0 0.0
        %1003 = vmatprep.subr.mxu0 0.0
        %1004 = vmatpush1.msra.mxu0 0.0
        %1005 = vmatprep.subr.mxu0 0.0
        %1006 = vmatpush1.msra.mxu0 0.0
        %1007 = vmatprep.mubr.f32.mxu0 0.0
        %1008 = vmatmul.mubr.f32.gmra.mrb[0].mxu0 %v864
        %v1009 = vpop.f32.mrb[0].mxu0
        %v1010 = vadd.f32 0.0, %v1009
        %v1011 = vpop.f32.mrb[0].mxu0
        %1012 = vdwg.mxu0
        %v1013 = vadd.f32 %v844, %v939
        %v1014 = vadd.f32 %v845, %v941
        %v1015 = vadd.f32 %v846, %v1010
        %v1016 = vld [vmem:[%s357] sm:$0xff]
        %v1017 = vld [vmem:[%s357 + $0x8] sm:$0xf]
        %s1018 = scalar_lea.vmem %s2, 16
        %v1019 = vld [vmem:[%s1018] sm:$0xf]
        %v1022 = vcombine.high %v1016, %v1016
        %1023 = vrot.lane.b32.xlu0 %v1016, 109
        %v1024 = vpop.permute.xlu0 %1023
        %1025 = vrot.lane.b32.xlu0 %v1022, 109
        %v1026 = vpop.permute.xlu0 %1025
        %1027 = vrot.lane.b32.xlu0 %v1017, 109
        %v1028 = vpop.permute.xlu0 %1027
        %vm1029 = vcmask 891904
        %v1030 = vsel %vm1029, %v1024, %v1026
        %v1031 = vsel %vm1029, %v1026, %v1028
        %v1033 = vsel %vm376, %v1019, 0
        %v1035 = vsel %vm380, %v1030, 0
        %v1037 = vsel %vm380, %v1031, 0
        %v1039 = vsel %vm380, %v1028, 0
        %1041 = vmatprep.subr.mxu0 %v1037
        %1042 = vmatpush1.msra.mxu0 %v1035
        %1043 = vmatprep.subr.mxu0 0.0
        %1044 = vmatpush1.msra.mxu0 0.0
        %1045 = vmatprep.subr.mxu0 0.0
        %1046 = vmatpush1.msra.mxu0 0.0
        %1047 = vmatprep.subr.mxu0 0.0
        %1048 = vmatpush1.msra.mxu0 0.0
        %1049 = vmatprep.subr.mxu0 0.0
        %1050 = vmatpush1.msra.mxu0 0.0
        %1051 = vmatprep.subr.mxu0 0.0
        %1052 = vmatpush1.msra.mxu0 0.0
        %1053 = vmatprep.subr.mxu0 0.0
        %1054 = vmatpush1.msra.mxu0 0.0
        %1055 = vmatprep.subr.mxu0 0.0
        %1056 = vmatpush1.msra.mxu0 0.0
        %1057 = vmatprep.subr.mxu0 0.0
        %1058 = vmatpush1.msra.mxu0 0.0
        %1059 = vmatprep.subr.mxu0 0.0
        %1060 = vmatpush1.msra.mxu0 0.0
        %1061 = vmatprep.subr.mxu0 0.0
        %1062 = vmatpush1.msra.mxu0 0.0
        %1063 = vmatprep.subr.mxu0 0.0
        %1064 = vmatpush1.msra.mxu0 0.0
        %1065 = vmatprep.subr.mxu0 0.0
        %1066 = vmatpush1.msra.mxu0 0.0
        %1067 = vmatprep.subr.mxu0 0.0
        %1068 = vmatpush1.msra.mxu0 0.0
        %1069 = vmatprep.subr.mxu0 0.0
        %1070 = vmatpush1.msra.mxu0 0.0
        %1071 = vmatprep.subr.mxu0 0.0
        %1072 = vmatpush1.msra.mxu0 0.0
        %1073 = vmatprep.subr.mxu0 0.0
        %1074 = vmatpush1.msra.mxu0 0.0
        %1075 = vmatprep.subr.mxu0 0.0
        %1076 = vmatpush1.msra.mxu0 0.0
        %1077 = vmatprep.subr.mxu0 0.0
        %1078 = vmatpush1.msra.mxu0 0.0
        %1079 = vmatprep.subr.mxu0 0.0
        %1080 = vmatpush1.msra.mxu0 0.0
        %1081 = vmatprep.subr.mxu0 0.0
        %1082 = vmatpush1.msra.mxu0 0.0
        %1083 = vmatprep.subr.mxu0 0.0
        %1084 = vmatpush1.msra.mxu0 0.0
        %1085 = vmatprep.subr.mxu0 0.0
        %1086 = vmatpush1.msra.mxu0 0.0
        %1087 = vmatprep.subr.mxu0 0.0
        %1088 = vmatpush1.msra.mxu0 0.0
        %1089 = vmatprep.subr.mxu0 0.0
        %1090 = vmatpush1.msra.mxu0 0.0
        %1091 = vmatprep.subr.mxu0 0.0
        %1092 = vmatpush1.msra.mxu0 0.0
        %1093 = vmatprep.subr.mxu0 0.0
        %1094 = vmatpush1.msra.mxu0 0.0
        %1095 = vmatprep.subr.mxu0 0.0
        %1096 = vmatpush1.msra.mxu0 0.0
        %1097 = vmatprep.subr.mxu0 0.0
        %1098 = vmatpush1.msra.mxu0 0.0
        %1099 = vmatprep.subr.mxu0 0.0
        %1100 = vmatpush1.msra.mxu0 0.0
        %1101 = vmatprep.subr.mxu0 0.0
        %1102 = vmatpush1.msra.mxu0 0.0
        %1103 = vmatprep.subr.mxu0 0.0
        %1104 = vmatpush1.msra.mxu0 0.0
        %1105 = vmatprep.mubr.f32.mxu0 0.0
        %1106 = vmatmul.mubr.f32.gmra.mrb[0].mxu0 %v1033
        %v1107 = vpop.f32.mrb[0].mxu0
        %v1108 = vadd.f32 0.0, %v1107
        %v1109 = vpop.f32.mrb[0].mxu0
        %v1110 = vadd.f32 0.0, %v1109
        %1111 = vdwg.mxu0
        %1112 = vmatprep.subr.mxu0 0.0
        %1113 = vmatpush1.msra.mxu0 %v1039
        %1114 = vmatprep.subr.mxu0 0.0
        %1115 = vmatpush1.msra.mxu0 0.0
        %1116 = vmatprep.subr.mxu0 0.0
        %1117 = vmatpush1.msra.mxu0 0.0
        %1118 = vmatprep.subr.mxu0 0.0
        %1119 = vmatpush1.msra.mxu0 0.0
        %1120 = vmatprep.subr.mxu0 0.0
        %1121 = vmatpush1.msra.mxu0 0.0
        %1122 = vmatprep.subr.mxu0 0.0
        %1123 = vmatpush1.msra.mxu0 0.0
        %1124 = vmatprep.subr.mxu0 0.0
        %1125 = vmatpush1.msra.mxu0 0.0
        %1126 = vmatprep.subr.mxu0 0.0
        %1127 = vmatpush1.msra.mxu0 0.0
        %1128 = vmatprep.subr.mxu0 0.0
        %1129 = vmatpush1.msra.mxu0 0.0
        %1130 = vmatprep.subr.mxu0 0.0
        %1131 = vmatpush1.msra.mxu0 0.0
        %1132 = vmatprep.subr.mxu0 0.0
        %1133 = vmatpush1.msra.mxu0 0.0
        %1134 = vmatprep.subr.mxu0 0.0
        %1135 = vmatpush1.msra.mxu0 0.0
        %1136 = vmatprep.subr.mxu0 0.0
        %1137 = vmatpush1.msra.mxu0 0.0
        %1138 = vmatprep.subr.mxu0 0.0
        %1139 = vmatpush1.msra.mxu0 0.0
        %1140 = vmatprep.subr.mxu0 0.0
        %1141 = vmatpush1.msra.mxu0 0.0
        %1142 = vmatprep.subr.mxu0 0.0
        %1143 = vmatpush1.msra.mxu0 0.0
        %1144 = vmatprep.subr.mxu0 0.0
        %1145 = vmatpush1.msra.mxu0 0.0
        %1146 = vmatprep.subr.mxu0 0.0
        %1147 = vmatpush1.msra.mxu0 0.0
        %1148 = vmatprep.subr.mxu0 0.0
        %1149 = vmatpush1.msra.mxu0 0.0
        %1150 = vmatprep.subr.mxu0 0.0
        %1151 = vmatpush1.msra.mxu0 0.0
        %1152 = vmatprep.subr.mxu0 0.0
        %1153 = vmatpush1.msra.mxu0 0.0
        %1154 = vmatprep.subr.mxu0 0.0
        %1155 = vmatpush1.msra.mxu0 0.0
        %1156 = vmatprep.subr.mxu0 0.0
        %1157 = vmatpush1.msra.mxu0 0.0
        %1158 = vmatprep.subr.mxu0 0.0
        %1159 = vmatpush1.msra.mxu0 0.0
        %1160 = vmatprep.subr.mxu0 0.0
        %1161 = vmatpush1.msra.mxu0 0.0
        %1162 = vmatprep.subr.mxu0 0.0
        %1163 = vmatpush1.msra.mxu0 0.0
        %1164 = vmatprep.subr.mxu0 0.0
        %1165 = vmatpush1.msra.mxu0 0.0
        %1166 = vmatprep.subr.mxu0 0.0
        %1167 = vmatpush1.msra.mxu0 0.0
        %1168 = vmatprep.subr.mxu0 0.0
        %1169 = vmatpush1.msra.mxu0 0.0
        %1170 = vmatprep.subr.mxu0 0.0
        %1171 = vmatpush1.msra.mxu0 0.0
        %1172 = vmatprep.subr.mxu0 0.0
        %1173 = vmatpush1.msra.mxu0 0.0
        %1174 = vmatprep.subr.mxu0 0.0
        %1175 = vmatpush1.msra.mxu0 0.0
        %1176 = vmatprep.mubr.f32.mxu0 0.0
        %1177 = vmatmul.mubr.f32.gmra.mrb[0].mxu0 %v1033
        %v1178 = vpop.f32.mrb[0].mxu0
        %v1179 = vadd.f32 0.0, %v1178
        %v1180 = vpop.f32.mrb[0].mxu0
        %1181 = vdwg.mxu0
        %v1182 = vadd.f32 %v1013, %v1108
        %v1183 = vadd.f32 %v1014, %v1110
        %v1184 = vadd.f32 %v1015, %v1179
        %v1185 = vld [vmem:[%s357] sm:$0xff]
        %v1186 = vld [vmem:[%s357 + $0x8] sm:$0xf]
        %s1187 = scalar_lea.vmem %s2, 20
        %v1188 = vld [vmem:[%s1187] sm:$0xf]
        %v1191 = vcombine.high %v1185, %v1185
        %1192 = vrot.lane.b32.xlu0 %v1185, 108
        %v1193 = vpop.permute.xlu0 %1192
        %1194 = vrot.lane.b32.xlu0 %v1191, 108
        %v1195 = vpop.permute.xlu0 %1194
        %1196 = vrot.lane.b32.xlu0 %v1186, 108
        %v1197 = vpop.permute.xlu0 %1196
        %vm1198 = vcmask 883712
        %v1199 = vsel %vm1198, %v1193, %v1195
        %v1200 = vsel %vm1198, %v1195, %v1197
        %v1202 = vsel %vm376, %v1188, 0
        %v1204 = vsel %vm380, %v1199, 0
        %v1206 = vsel %vm380, %v1200, 0
        %v1208 = vsel %vm380, %v1197, 0
        %1210 = vmatprep.subr.mxu0 %v1206
        %1211 = vmatpush1.msra.mxu0 %v1204
        %1212 = vmatprep.subr.mxu0 0.0
        %1213 = vmatpush1.msra.mxu0 0.0
        %1214 = vmatprep.subr.mxu0 0.0
        %1215 = vmatpush1.msra.mxu0 0.0
        %1216 = vmatprep.subr.mxu0 0.0
        %1217 = vmatpush1.msra.mxu0 0.0
        %1218 = vmatprep.subr.mxu0 0.0
        %1219 = vmatpush1.msra.mxu0 0.0
        %1220 = vmatprep.subr.mxu0 0.0
        %1221 = vmatpush1.msra.mxu0 0.0
        %1222 = vmatprep.subr.mxu0 0.0
        %1223 = vmatpush1.msra.mxu0 0.0
        %1224 = vmatprep.subr.mxu0 0.0
        %1225 = vmatpush1.msra.mxu0 0.0
        %1226 = vmatprep.subr.mxu0 0.0
        %1227 = vmatpush1.msra.mxu0 0.0
        %1228 = vmatprep.subr.mxu0 0.0
        %1229 = vmatpush1.msra.mxu0 0.0
        %1230 = vmatprep.subr.mxu0 0.0
        %1231 = vmatpush1.msra.mxu0 0.0
        %1232 = vmatprep.subr.mxu0 0.0
        %1233 = vmatpush1.msra.mxu0 0.0
        %1234 = vmatprep.subr.mxu0 0.0
        %1235 = vmatpush1.msra.mxu0 0.0
        %1236 = vmatprep.subr.mxu0 0.0
        %1237 = vmatpush1.msra.mxu0 0.0
        %1238 = vmatprep.subr.mxu0 0.0
        %1239 = vmatpush1.msra.mxu0 0.0
        %1240 = vmatprep.subr.mxu0 0.0
        %1241 = vmatpush1.msra.mxu0 0.0
        %1242 = vmatprep.subr.mxu0 0.0
        %1243 = vmatpush1.msra.mxu0 0.0
        %1244 = vmatprep.subr.mxu0 0.0
        %1245 = vmatpush1.msra.mxu0 0.0
        %1246 = vmatprep.subr.mxu0 0.0
        %1247 = vmatpush1.msra.mxu0 0.0
        %1248 = vmatprep.subr.mxu0 0.0
        %1249 = vmatpush1.msra.mxu0 0.0
        %1250 = vmatprep.subr.mxu0 0.0
        %1251 = vmatpush1.msra.mxu0 0.0
        %1252 = vmatprep.subr.mxu0 0.0
        %1253 = vmatpush1.msra.mxu0 0.0
        %1254 = vmatprep.subr.mxu0 0.0
        %1255 = vmatpush1.msra.mxu0 0.0
        %1256 = vmatprep.subr.mxu0 0.0
        %1257 = vmatpush1.msra.mxu0 0.0
        %1258 = vmatprep.subr.mxu0 0.0
        %1259 = vmatpush1.msra.mxu0 0.0
        %1260 = vmatprep.subr.mxu0 0.0
        %1261 = vmatpush1.msra.mxu0 0.0
        %1262 = vmatprep.subr.mxu0 0.0
        %1263 = vmatpush1.msra.mxu0 0.0
        %1264 = vmatprep.subr.mxu0 0.0
        %1265 = vmatpush1.msra.mxu0 0.0
        %1266 = vmatprep.subr.mxu0 0.0
        %1267 = vmatpush1.msra.mxu0 0.0
        %1268 = vmatprep.subr.mxu0 0.0
        %1269 = vmatpush1.msra.mxu0 0.0
        %1270 = vmatprep.subr.mxu0 0.0
        %1271 = vmatpush1.msra.mxu0 0.0
        %1272 = vmatprep.subr.mxu0 0.0
        %1273 = vmatpush1.msra.mxu0 0.0
        %1274 = vmatprep.mubr.f32.mxu0 0.0
        %1275 = vmatmul.mubr.f32.gmra.mrb[0].mxu0 %v1202
        %v1276 = vpop.f32.mrb[0].mxu0
        %v1277 = vadd.f32 0.0, %v1276
        %v1278 = vpop.f32.mrb[0].mxu0
        %v1279 = vadd.f32 0.0, %v1278
        %1280 = vdwg.mxu0
        %1281 = vmatprep.subr.mxu0 0.0
        %1282 = vmatpush1.msra.mxu0 %v1208
        %1283 = vmatprep.subr.mxu0 0.0
        %1284 = vmatpush1.msra.mxu0 0.0
        %1285 = vmatprep.subr.mxu0 0.0
        %1286 = vmatpush1.msra.mxu0 0.0
        %1287 = vmatprep.subr.mxu0 0.0
        %1288 = vmatpush1.msra.mxu0 0.0
        %1289 = vmatprep.subr.mxu0 0.0
        %1290 = vmatpush1.msra.mxu0 0.0
        %1291 = vmatprep.subr.mxu0 0.0
        %1292 = vmatpush1.msra.mxu0 0.0
        %1293 = vmatprep.subr.mxu0 0.0
        %1294 = vmatpush1.msra.mxu0 0.0
        %1295 = vmatprep.subr.mxu0 0.0
        %1296 = vmatpush1.msra.mxu0 0.0
        %1297 = vmatprep.subr.mxu0 0.0
        %1298 = vmatpush1.msra.mxu0 0.0
        %1299 = vmatprep.subr.mxu0 0.0
        %1300 = vmatpush1.msra.mxu0 0.0
        %1301 = vmatprep.subr.mxu0 0.0
        %1302 = vmatpush1.msra.mxu0 0.0
        %1303 = vmatprep.subr.mxu0 0.0
        %1304 = vmatpush1.msra.mxu0 0.0
        %1305 = vmatprep.subr.mxu0 0.0
        %1306 = vmatpush1.msra.mxu0 0.0
        %1307 = vmatprep.subr.mxu0 0.0
        %1308 = vmatpush1.msra.mxu0 0.0
        %1309 = vmatprep.subr.mxu0 0.0
        %1310 = vmatpush1.msra.mxu0 0.0
        %1311 = vmatprep.subr.mxu0 0.0
        %1312 = vmatpush1.msra.mxu0 0.0
        %1313 = vmatprep.subr.mxu0 0.0
        %1314 = vmatpush1.msra.mxu0 0.0
        %1315 = vmatprep.subr.mxu0 0.0
        %1316 = vmatpush1.msra.mxu0 0.0
        %1317 = vmatprep.subr.mxu0 0.0
        %1318 = vmatpush1.msra.mxu0 0.0
        %1319 = vmatprep.subr.mxu0 0.0
        %1320 = vmatpush1.msra.mxu0 0.0
        %1321 = vmatprep.subr.mxu0 0.0
        %1322 = vmatpush1.msra.mxu0 0.0
        %1323 = vmatprep.subr.mxu0 0.0
        %1324 = vmatpush1.msra.mxu0 0.0
        %1325 = vmatprep.subr.mxu0 0.0
        %1326 = vmatpush1.msra.mxu0 0.0
        %1327 = vmatprep.subr.mxu0 0.0
        %1328 = vmatpush1.msra.mxu0 0.0
        %1329 = vmatprep.subr.mxu0 0.0
        %1330 = vmatpush1.msra.mxu0 0.0
        %1331 = vmatprep.subr.mxu0 0.0
        %1332 = vmatpush1.msra.mxu0 0.0
        %1333 = vmatprep.subr.mxu0 0.0
        %1334 = vmatpush1.msra.mxu0 0.0
        %1335 = vmatprep.subr.mxu0 0.0
        %1336 = vmatpush1.msra.mxu0 0.0
        %1337 = vmatprep.subr.mxu0 0.0
        %1338 = vmatpush1.msra.mxu0 0.0
        %1339 = vmatprep.subr.mxu0 0.0
        %1340 = vmatpush1.msra.mxu0 0.0
        %1341 = vmatprep.subr.mxu0 0.0
        %1342 = vmatpush1.msra.mxu0 0.0
        %1343 = vmatprep.subr.mxu0 0.0
        %1344 = vmatpush1.msra.mxu0 0.0
        %1345 = vmatprep.mubr.f32.mxu0 0.0
        %1346 = vmatmul.mubr.f32.gmra.mrb[0].mxu0 %v1202
        %v1347 = vpop.f32.mrb[0].mxu0
        %v1348 = vadd.f32 0.0, %v1347
        %v1349 = vpop.f32.mrb[0].mxu0
        %1350 = vdwg.mxu0
        %v1351 = vadd.f32 %v1182, %v1277
        %v1352 = vadd.f32 %v1183, %v1279
        %v1353 = vadd.f32 %v1184, %v1348
        %v1354 = vld [vmem:[%s357] sm:$0xff]
        %v1355 = vld [vmem:[%s357 + $0x8] sm:$0xf]
        %s1356 = scalar_lea.vmem %s2, 24
        %v1357 = vld [vmem:[%s1356] sm:$0xf]
        %v1360 = vcombine.high %v1354, %v1354
        %1361 = vrot.lane.b32.xlu0 %v1354, 92
        %v1362 = vpop.permute.xlu0 %1361
        %1363 = vrot.lane.b32.xlu0 %v1360, 92
        %v1364 = vpop.permute.xlu0 %1363
        %1365 = vrot.lane.b32.xlu0 %v1355, 92
        %v1366 = vpop.permute.xlu0 %1365
        %vm1367 = vcmask 752640
        %v1368 = vsel %vm1367, %v1362, %v1364
        %v1369 = vsel %vm1367, %v1364, %v1366
        %v1371 = vsel %vm376, %v1357, 0
        %v1373 = vsel %vm380, %v1368, 0
        %v1375 = vsel %vm380, %v1369, 0
        %v1377 = vsel %vm380, %v1366, 0
        %1379 = vmatprep.subr.mxu0 %v1375
        %1380 = vmatpush1.msra.mxu0 %v1373
        %1381 = vmatprep.subr.mxu0 0.0
        %1382 = vmatpush1.msra.mxu0 0.0
        %1383 = vmatprep.subr.mxu0 0.0
        %1384 = vmatpush1.msra.mxu0 0.0
        %1385 = vmatprep.subr.mxu0 0.0
        %1386 = vmatpush1.msra.mxu0 0.0
        %1387 = vmatprep.subr.mxu0 0.0
        %1388 = vmatpush1.msra.mxu0 0.0
        %1389 = vmatprep.subr.mxu0 0.0
        %1390 = vmatpush1.msra.mxu0 0.0
        %1391 = vmatprep.subr.mxu0 0.0
        %1392 = vmatpush1.msra.mxu0 0.0
        %1393 = vmatprep.subr.mxu0 0.0
        %1394 = vmatpush1.msra.mxu0 0.0
        %1395 = vmatprep.subr.mxu0 0.0
        %1396 = vmatpush1.msra.mxu0 0.0
        %1397 = vmatprep.subr.mxu0 0.0
        %1398 = vmatpush1.msra.mxu0 0.0
        %1399 = vmatprep.subr.mxu0 0.0
        %1400 = vmatpush1.msra.mxu0 0.0
        %1401 = vmatprep.subr.mxu0 0.0
        %1402 = vmatpush1.msra.mxu0 0.0
        %1403 = vmatprep.subr.mxu0 0.0
        %1404 = vmatpush1.msra.mxu0 0.0
        %1405 = vmatprep.subr.mxu0 0.0
        %1406 = vmatpush1.msra.mxu0 0.0
        %1407 = vmatprep.subr.mxu0 0.0
        %1408 = vmatpush1.msra.mxu0 0.0
        %1409 = vmatprep.subr.mxu0 0.0
        %1410 = vmatpush1.msra.mxu0 0.0
        %1411 = vmatprep.subr.mxu0 0.0
        %1412 = vmatpush1.msra.mxu0 0.0
        %1413 = vmatprep.subr.mxu0 0.0
        %1414 = vmatpush1.msra.mxu0 0.0
        %1415 = vmatprep.subr.mxu0 0.0
        %1416 = vmatpush1.msra.mxu0 0.0
        %1417 = vmatprep.subr.mxu0 0.0
        %1418 = vmatpush1.msra.mxu0 0.0
        %1419 = vmatprep.subr.mxu0 0.0
        %1420 = vmatpush1.msra.mxu0 0.0
        %1421 = vmatprep.subr.mxu0 0.0
        %1422 = vmatpush1.msra.mxu0 0.0
        %1423 = vmatprep.subr.mxu0 0.0
        %1424 = vmatpush1.msra.mxu0 0.0
        %1425 = vmatprep.subr.mxu0 0.0
        %1426 = vmatpush1.msra.mxu0 0.0
        %1427 = vmatprep.subr.mxu0 0.0
        %1428 = vmatpush1.msra.mxu0 0.0
        %1429 = vmatprep.subr.mxu0 0.0
        %1430 = vmatpush1.msra.mxu0 0.0
        %1431 = vmatprep.subr.mxu0 0.0
        %1432 = vmatpush1.msra.mxu0 0.0
        %1433 = vmatprep.subr.mxu0 0.0
        %1434 = vmatpush1.msra.mxu0 0.0
        %1435 = vmatprep.subr.mxu0 0.0
        %1436 = vmatpush1.msra.mxu0 0.0
        %1437 = vmatprep.subr.mxu0 0.0
        %1438 = vmatpush1.msra.mxu0 0.0
        %1439 = vmatprep.subr.mxu0 0.0
        %1440 = vmatpush1.msra.mxu0 0.0
        %1441 = vmatprep.subr.mxu0 0.0
        %1442 = vmatpush1.msra.mxu0 0.0
        %1443 = vmatprep.mubr.f32.mxu0 0.0
        %1444 = vmatmul.mubr.f32.gmra.mrb[0].mxu0 %v1371
        %v1445 = vpop.f32.mrb[0].mxu0
        %v1446 = vadd.f32 0.0, %v1445
        %v1447 = vpop.f32.mrb[0].mxu0
        %v1448 = vadd.f32 0.0, %v1447
        %1449 = vdwg.mxu0
        %1450 = vmatprep.subr.mxu0 0.0
        %1451 = vmatpush1.msra.mxu0 %v1377
        %1452 = vmatprep.subr.mxu0 0.0
        %1453 = vmatpush1.msra.mxu0 0.0
        %1454 = vmatprep.subr.mxu0 0.0
        %1455 = vmatpush1.msra.mxu0 0.0
        %1456 = vmatprep.subr.mxu0 0.0
        %1457 = vmatpush1.msra.mxu0 0.0
        %1458 = vmatprep.subr.mxu0 0.0
        %1459 = vmatpush1.msra.mxu0 0.0
        %1460 = vmatprep.subr.mxu0 0.0
        %1461 = vmatpush1.msra.mxu0 0.0
        %1462 = vmatprep.subr.mxu0 0.0
        %1463 = vmatpush1.msra.mxu0 0.0
        %1464 = vmatprep.subr.mxu0 0.0
        %1465 = vmatpush1.msra.mxu0 0.0
        %1466 = vmatprep.subr.mxu0 0.0
        %1467 = vmatpush1.msra.mxu0 0.0
        %1468 = vmatprep.subr.mxu0 0.0
        %1469 = vmatpush1.msra.mxu0 0.0
        %1470 = vmatprep.subr.mxu0 0.0
        %1471 = vmatpush1.msra.mxu0 0.0
        %1472 = vmatprep.subr.mxu0 0.0
        %1473 = vmatpush1.msra.mxu0 0.0
        %1474 = vmatprep.subr.mxu0 0.0
        %1475 = vmatpush1.msra.mxu0 0.0
        %1476 = vmatprep.subr.mxu0 0.0
        %1477 = vmatpush1.msra.mxu0 0.0
        %1478 = vmatprep.subr.mxu0 0.0
        %1479 = vmatpush1.msra.mxu0 0.0
        %1480 = vmatprep.subr.mxu0 0.0
        %1481 = vmatpush1.msra.mxu0 0.0
        %1482 = vmatprep.subr.mxu0 0.0
        %1483 = vmatpush1.msra.mxu0 0.0
        %1484 = vmatprep.subr.mxu0 0.0
        %1485 = vmatpush1.msra.mxu0 0.0
        %1486 = vmatprep.subr.mxu0 0.0
        %1487 = vmatpush1.msra.mxu0 0.0
        %1488 = vmatprep.subr.mxu0 0.0
        %1489 = vmatpush1.msra.mxu0 0.0
        %1490 = vmatprep.subr.mxu0 0.0
        %1491 = vmatpush1.msra.mxu0 0.0
        %1492 = vmatprep.subr.mxu0 0.0
        %1493 = vmatpush1.msra.mxu0 0.0
        %1494 = vmatprep.subr.mxu0 0.0
        %1495 = vmatpush1.msra.mxu0 0.0
        %1496 = vmatprep.subr.mxu0 0.0
        %1497 = vmatpush1.msra.mxu0 0.0
        %1498 = vmatprep.subr.mxu0 0.0
        %1499 = vmatpush1.msra.mxu0 0.0
        %1500 = vmatprep.subr.mxu0 0.0
        %1501 = vmatpush1.msra.mxu0 0.0
        %1502 = vmatprep.subr.mxu0 0.0
        %1503 = vmatpush1.msra.mxu0 0.0
        %1504 = vmatprep.subr.mxu0 0.0
        %1505 = vmatpush1.msra.mxu0 0.0
        %1506 = vmatprep.subr.mxu0 0.0
        %1507 = vmatpush1.msra.mxu0 0.0
        %1508 = vmatprep.subr.mxu0 0.0
        %1509 = vmatpush1.msra.mxu0 0.0
        %1510 = vmatprep.subr.mxu0 0.0
        %1511 = vmatpush1.msra.mxu0 0.0
        %1512 = vmatprep.subr.mxu0 0.0
        %1513 = vmatpush1.msra.mxu0 0.0
        %1514 = vmatprep.mubr.f32.mxu0 0.0
        %1515 = vmatmul.mubr.f32.gmra.mrb[0].mxu0 %v1371
        %v1516 = vpop.f32.mrb[0].mxu0
        %v1517 = vadd.f32 0.0, %v1516
        %v1518 = vpop.f32.mrb[0].mxu0
        %1519 = vdwg.mxu0
        %v1520 = vadd.f32 %v1351, %v1446
        %v1521 = vadd.f32 %v1352, %v1448
        %v1522 = vadd.f32 %v1353, %v1517
        %v1523 = vld [vmem:[%s357] sm:$0xff]
        %v1524 = vld [vmem:[%s357 + $0x8] sm:$0xf]
        %s1525 = scalar_lea.vmem %s2, 28
        %v1526 = vld [vmem:[%s1525] sm:$0xf]
        %v1529 = vcombine.high %v1523, %v1523
        %1530 = vrot.lane.b32.xlu0 %v1523, 91
        %v1531 = vpop.permute.xlu0 %1530
        %1532 = vrot.lane.b32.xlu0 %v1529, 91
        %v1533 = vpop.permute.xlu0 %1532
        %1534 = vrot.lane.b32.xlu0 %v1524, 91
        %v1535 = vpop.permute.xlu0 %1534
        %vm1536 = vcmask 744448
        %v1537 = vsel %vm1536, %v1531, %v1533
        %v1538 = vsel %vm1536, %v1533, %v1535
        %v1540 = vsel %vm376, %v1526, 0
        %v1542 = vsel %vm380, %v1537, 0
        %v1544 = vsel %vm380, %v1538, 0
        %v1546 = vsel %vm380, %v1535, 0
        %1548 = vmatprep.subr.mxu0 %v1544
        %1549 = vmatpush1.msra.mxu0 %v1542
        %1550 = vmatprep.subr.mxu0 0.0
        %1551 = vmatpush1.msra.mxu0 0.0
        %1552 = vmatprep.subr.mxu0 0.0
        %1553 = vmatpush1.msra.mxu0 0.0
        %1554 = vmatprep.subr.mxu0 0.0
        %1555 = vmatpush1.msra.mxu0 0.0
        %1556 = vmatprep.subr.mxu0 0.0
        %1557 = vmatpush1.msra.mxu0 0.0
        %1558 = vmatprep.subr.mxu0 0.0
        %1559 = vmatpush1.msra.mxu0 0.0
        %1560 = vmatprep.subr.mxu0 0.0
        %1561 = vmatpush1.msra.mxu0 0.0
        %1562 = vmatprep.subr.mxu0 0.0
        %1563 = vmatpush1.msra.mxu0 0.0
        %1564 = vmatprep.subr.mxu0 0.0
        %1565 = vmatpush1.msra.mxu0 0.0
        %1566 = vmatprep.subr.mxu0 0.0
        %1567 = vmatpush1.msra.mxu0 0.0
        %1568 = vmatprep.subr.mxu0 0.0
        %1569 = vmatpush1.msra.mxu0 0.0
        %1570 = vmatprep.subr.mxu0 0.0
        %1571 = vmatpush1.msra.mxu0 0.0
        %1572 = vmatprep.subr.mxu0 0.0
        %1573 = vmatpush1.msra.mxu0 0.0
        %1574 = vmatprep.subr.mxu0 0.0
        %1575 = vmatpush1.msra.mxu0 0.0
        %1576 = vmatprep.subr.mxu0 0.0
        %1577 = vmatpush1.msra.mxu0 0.0
        %1578 = vmatprep.subr.mxu0 0.0
        %1579 = vmatpush1.msra.mxu0 0.0
        %1580 = vmatprep.subr.mxu0 0.0
        %1581 = vmatpush1.msra.mxu0 0.0
        %1582 = vmatprep.subr.mxu0 0.0
        %1583 = vmatpush1.msra.mxu0 0.0
        %1584 = vmatprep.subr.mxu0 0.0
        %1585 = vmatpush1.msra.mxu0 0.0
        %1586 = vmatprep.subr.mxu0 0.0
        %1587 = vmatpush1.msra.mxu0 0.0
        %1588 = vmatprep.subr.mxu0 0.0
        %1589 = vmatpush1.msra.mxu0 0.0
        %1590 = vmatprep.subr.mxu0 0.0
        %1591 = vmatpush1.msra.mxu0 0.0
        %1592 = vmatprep.subr.mxu0 0.0
        %1593 = vmatpush1.msra.mxu0 0.0
        %1594 = vmatprep.subr.mxu0 0.0
        %1595 = vmatpush1.msra.mxu0 0.0
        %1596 = vmatprep.subr.mxu0 0.0
        %1597 = vmatpush1.msra.mxu0 0.0
        %1598 = vmatprep.subr.mxu0 0.0
        %1599 = vmatpush1.msra.mxu0 0.0
        %1600 = vmatprep.subr.mxu0 0.0
        %1601 = vmatpush1.msra.mxu0 0.0
        %1602 = vmatprep.subr.mxu0 0.0
        %1603 = vmatpush1.msra.mxu0 0.0
        %1604 = vmatprep.subr.mxu0 0.0
        %1605 = vmatpush1.msra.mxu0 0.0
        %1606 = vmatprep.subr.mxu0 0.0
        %1607 = vmatpush1.msra.mxu0 0.0
        %1608 = vmatprep.subr.mxu0 0.0
        %1609 = vmatpush1.msra.mxu0 0.0
        %1610 = vmatprep.subr.mxu0 0.0
        %1611 = vmatpush1.msra.mxu0 0.0
        %1612 = vmatprep.mubr.f32.mxu0 0.0
        %1613 = vmatmul.mubr.f32.gmra.mrb[0].mxu0 %v1540
        %v1614 = vpop.f32.mrb[0].mxu0
        %v1615 = vadd.f32 0.0, %v1614
        %v1616 = vpop.f32.mrb[0].mxu0
        %v1617 = vadd.f32 0.0, %v1616
        %1618 = vdwg.mxu0
        %1619 = vmatprep.subr.mxu0 0.0
        %1620 = vmatpush1.msra.mxu0 %v1546
        %1621 = vmatprep.subr.mxu0 0.0
        %1622 = vmatpush1.msra.mxu0 0.0
        %1623 = vmatprep.subr.mxu0 0.0
        %1624 = vmatpush1.msra.mxu0 0.0
        %1625 = vmatprep.subr.mxu0 0.0
        %1626 = vmatpush1.msra.mxu0 0.0
        %1627 = vmatprep.subr.mxu0 0.0
        %1628 = vmatpush1.msra.mxu0 0.0
        %1629 = vmatprep.subr.mxu0 0.0
        %1630 = vmatpush1.msra.mxu0 0.0
        %1631 = vmatprep.subr.mxu0 0.0
        %1632 = vmatpush1.msra.mxu0 0.0
        %1633 = vmatprep.subr.mxu0 0.0
        %1634 = vmatpush1.msra.mxu0 0.0
        %1635 = vmatprep.subr.mxu0 0.0
        %1636 = vmatpush1.msra.mxu0 0.0
        %1637 = vmatprep.subr.mxu0 0.0
        %1638 = vmatpush1.msra.mxu0 0.0
        %1639 = vmatprep.subr.mxu0 0.0
        %1640 = vmatpush1.msra.mxu0 0.0
        %1641 = vmatprep.subr.mxu0 0.0
        %1642 = vmatpush1.msra.mxu0 0.0
        %1643 = vmatprep.subr.mxu0 0.0
        %1644 = vmatpush1.msra.mxu0 0.0
        %1645 = vmatprep.subr.mxu0 0.0
        %1646 = vmatpush1.msra.mxu0 0.0
        %1647 = vmatprep.subr.mxu0 0.0
        %1648 = vmatpush1.msra.mxu0 0.0
        %1649 = vmatprep.subr.mxu0 0.0
        %1650 = vmatpush1.msra.mxu0 0.0
        %1651 = vmatprep.subr.mxu0 0.0
        %1652 = vmatpush1.msra.mxu0 0.0
        %1653 = vmatprep.subr.mxu0 0.0
        %1654 = vmatpush1.msra.mxu0 0.0
        %1655 = vmatprep.subr.mxu0 0.0
        %1656 = vmatpush1.msra.mxu0 0.0
        %1657 = vmatprep.subr.mxu0 0.0
        %1658 = vmatpush1.msra.mxu0 0.0
        %1659 = vmatprep.subr.mxu0 0.0
        %1660 = vmatpush1.msra.mxu0 0.0
        %1661 = vmatprep.subr.mxu0 0.0
        %1662 = vmatpush1.msra.mxu0 0.0
        %1663 = vmatprep.subr.mxu0 0.0
        %1664 = vmatpush1.msra.mxu0 0.0
        %1665 = vmatprep.subr.mxu0 0.0
        %1666 = vmatpush1.msra.mxu0 0.0
        %1667 = vmatprep.subr.mxu0 0.0
        %1668 = vmatpush1.msra.mxu0 0.0
        %1669 = vmatprep.subr.mxu0 0.0
        %1670 = vmatpush1.msra.mxu0 0.0
        %1671 = vmatprep.subr.mxu0 0.0
        %1672 = vmatpush1.msra.mxu0 0.0
        %1673 = vmatprep.subr.mxu0 0.0
        %1674 = vmatpush1.msra.mxu0 0.0
        %1675 = vmatprep.subr.mxu0 0.0
        %1676 = vmatpush1.msra.mxu0 0.0
        %1677 = vmatprep.subr.mxu0 0.0
        %1678 = vmatpush1.msra.mxu0 0.0
        %1679 = vmatprep.subr.mxu0 0.0
        %1680 = vmatpush1.msra.mxu0 0.0
        %1681 = vmatprep.subr.mxu0 0.0
        %1682 = vmatpush1.msra.mxu0 0.0
        %1683 = vmatprep.mubr.f32.mxu0 0.0
        %1684 = vmatmul.mubr.f32.gmra.mrb[0].mxu0 %v1540
        %v1685 = vpop.f32.mrb[0].mxu0
        %v1686 = vadd.f32 0.0, %v1685
        %v1687 = vpop.f32.mrb[0].mxu0
        %1688 = vdwg.mxu0
        %v1689 = vadd.f32 %v1520, %v1615
        %v1690 = vadd.f32 %v1521, %v1617
        %v1691 = vadd.f32 %v1522, %v1686
        %v1692 = vld [vmem:[%s357] sm:$0xff]
        %v1693 = vld [vmem:[%s357 + $0x8] sm:$0xf]
        %s1694 = scalar_lea.vmem %s2, 32
        %v1695 = vld [vmem:[%s1694] sm:$0xf]
        %v1698 = vcombine.high %v1692, %v1692
        %1699 = vrot.lane.b32.xlu0 %v1692, 90
        %v1700 = vpop.permute.xlu0 %1699
        %1701 = vrot.lane.b32.xlu0 %v1698, 90
        %v1702 = vpop.permute.xlu0 %1701
        %1703 = vrot.lane.b32.xlu0 %v1693, 90
        %v1704 = vpop.permute.xlu0 %1703
        %vm1705 = vcmask 736256
        %v1706 = vsel %vm1705, %v1700, %v1702
        %v1707 = vsel %vm1705, %v1702, %v1704
        %v1709 = vsel %vm376, %v1695, 0
        %v1711 = vsel %vm380, %v1706, 0
        %v1713 = vsel %vm380, %v1707, 0
        %v1715 = vsel %vm380, %v1704, 0
        %1717 = vmatprep.subr.mxu0 %v1713
        %1718 = vmatpush1.msra.mxu0 %v1711
        %1719 = vmatprep.subr.mxu0 0.0
        %1720 = vmatpush1.msra.mxu0 0.0
        %1721 = vmatprep.subr.mxu0 0.0
        %1722 = vmatpush1.msra.mxu0 0.0
        %1723 = vmatprep.subr.mxu0 0.0
        %1724 = vmatpush1.msra.mxu0 0.0
        %1725 = vmatprep.subr.mxu0 0.0
        %1726 = vmatpush1.msra.mxu0 0.0
        %1727 = vmatprep.subr.mxu0 0.0
        %1728 = vmatpush1.msra.mxu0 0.0
        %1729 = vmatprep.subr.mxu0 0.0
        %1730 = vmatpush1.msra.mxu0 0.0
        %1731 = vmatprep.subr.mxu0 0.0
        %1732 = vmatpush1.msra.mxu0 0.0
        %1733 = vmatprep.subr.mxu0 0.0
        %1734 = vmatpush1.msra.mxu0 0.0
        %1735 = vmatprep.subr.mxu0 0.0
        %1736 = vmatpush1.msra.mxu0 0.0
        %1737 = vmatprep.subr.mxu0 0.0
        %1738 = vmatpush1.msra.mxu0 0.0
        %1739 = vmatprep.subr.mxu0 0.0
        %1740 = vmatpush1.msra.mxu0 0.0
        %1741 = vmatprep.subr.mxu0 0.0
        %1742 = vmatpush1.msra.mxu0 0.0
        %1743 = vmatprep.subr.mxu0 0.0
        %1744 = vmatpush1.msra.mxu0 0.0
        %1745 = vmatprep.subr.mxu0 0.0
        %1746 = vmatpush1.msra.mxu0 0.0
        %1747 = vmatprep.subr.mxu0 0.0
        %1748 = vmatpush1.msra.mxu0 0.0
        %1749 = vmatprep.subr.mxu0 0.0
        %1750 = vmatpush1.msra.mxu0 0.0
        %1751 = vmatprep.subr.mxu0 0.0
        %1752 = vmatpush1.msra.mxu0 0.0
        %1753 = vmatprep.subr.mxu0 0.0
        %1754 = vmatpush1.msra.mxu0 0.0
        %1755 = vmatprep.subr.mxu0 0.0
        %1756 = vmatpush1.msra.mxu0 0.0
        %1757 = vmatprep.subr.mxu0 0.0
        %1758 = vmatpush1.msra.mxu0 0.0
        %1759 = vmatprep.subr.mxu0 0.0
        %1760 = vmatpush1.msra.mxu0 0.0
        %1761 = vmatprep.subr.mxu0 0.0
        %1762 = vmatpush1.msra.mxu0 0.0
        %1763 = vmatprep.subr.mxu0 0.0
        %1764 = vmatpush1.msra.mxu0 0.0
        %1765 = vmatprep.subr.mxu0 0.0
        %1766 = vmatpush1.msra.mxu0 0.0
        %1767 = vmatprep.subr.mxu0 0.0
        %1768 = vmatpush1.msra.mxu0 0.0
        %1769 = vmatprep.subr.mxu0 0.0
        %1770 = vmatpush1.msra.mxu0 0.0
        %1771 = vmatprep.subr.mxu0 0.0
        %1772 = vmatpush1.msra.mxu0 0.0
        %1773 = vmatprep.subr.mxu0 0.0
        %1774 = vmatpush1.msra.mxu0 0.0
        %1775 = vmatprep.subr.mxu0 0.0
        %1776 = vmatpush1.msra.mxu0 0.0
        %1777 = vmatprep.subr.mxu0 0.0
        %1778 = vmatpush1.msra.mxu0 0.0
        %1779 = vmatprep.subr.mxu0 0.0
        %1780 = vmatpush1.msra.mxu0 0.0
        %1781 = vmatprep.mubr.f32.mxu0 0.0
        %1782 = vmatmul.mubr.f32.gmra.mrb[0].mxu0 %v1709
        %v1783 = vpop.f32.mrb[0].mxu0
        %v1784 = vadd.f32 0.0, %v1783
        %v1785 = vpop.f32.mrb[0].mxu0
        %v1786 = vadd.f32 0.0, %v1785
        %1787 = vdwg.mxu0
        %1788 = vmatprep.subr.mxu0 0.0
        %1789 = vmatpush1.msra.mxu0 %v1715
        %1790 = vmatprep.subr.mxu0 0.0
        %1791 = vmatpush1.msra.mxu0 0.0
        %1792 = vmatprep.subr.mxu0 0.0
        %1793 = vmatpush1.msra.mxu0 0.0
        %1794 = vmatprep.subr.mxu0 0.0
        %1795 = vmatpush1.msra.mxu0 0.0
        %1796 = vmatprep.subr.mxu0 0.0
        %1797 = vmatpush1.msra.mxu0 0.0
        %1798 = vmatprep.subr.mxu0 0.0
        %1799 = vmatpush1.msra.mxu0 0.0
        %1800 = vmatprep.subr.mxu0 0.0
        %1801 = vmatpush1.msra.mxu0 0.0
        %1802 = vmatprep.subr.mxu0 0.0
        %1803 = vmatpush1.msra.mxu0 0.0
        %1804 = vmatprep.subr.mxu0 0.0
        %1805 = vmatpush1.msra.mxu0 0.0
        %1806 = vmatprep.subr.mxu0 0.0
        %1807 = vmatpush1.msra.mxu0 0.0
        %1808 = vmatprep.subr.mxu0 0.0
        %1809 = vmatpush1.msra.mxu0 0.0
        %1810 = vmatprep.subr.mxu0 0.0
        %1811 = vmatpush1.msra.mxu0 0.0
        %1812 = vmatprep.subr.mxu0 0.0
        %1813 = vmatpush1.msra.mxu0 0.0
        %1814 = vmatprep.subr.mxu0 0.0
        %1815 = vmatpush1.msra.mxu0 0.0
        %1816 = vmatprep.subr.mxu0 0.0
        %1817 = vmatpush1.msra.mxu0 0.0
        %1818 = vmatprep.subr.mxu0 0.0
        %1819 = vmatpush1.msra.mxu0 0.0
        %1820 = vmatprep.subr.mxu0 0.0
        %1821 = vmatpush1.msra.mxu0 0.0
        %1822 = vmatprep.subr.mxu0 0.0
        %1823 = vmatpush1.msra.mxu0 0.0
        %1824 = vmatprep.subr.mxu0 0.0
        %1825 = vmatpush1.msra.mxu0 0.0
        %1826 = vmatprep.subr.mxu0 0.0
        %1827 = vmatpush1.msra.mxu0 0.0
        %1828 = vmatprep.subr.mxu0 0.0
        %1829 = vmatpush1.msra.mxu0 0.0
        %1830 = vmatprep.subr.mxu0 0.0
        %1831 = vmatpush1.msra.mxu0 0.0
        %1832 = vmatprep.subr.mxu0 0.0
        %1833 = vmatpush1.msra.mxu0 0.0
        %1834 = vmatprep.subr.mxu0 0.0
        %1835 = vmatpush1.msra.mxu0 0.0
        %1836 = vmatprep.subr.mxu0 0.0
        %1837 = vmatpush1.msra.mxu0 0.0
        %1838 = vmatprep.subr.mxu0 0.0
        %1839 = vmatpush1.msra.mxu0 0.0
        %1840 = vmatprep.subr.mxu0 0.0
        %1841 = vmatpush1.msra.mxu0 0.0
        %1842 = vmatprep.subr.mxu0 0.0
        %1843 = vmatpush1.msra.mxu0 0.0
        %1844 = vmatprep.subr.mxu0 0.0
        %1845 = vmatpush1.msra.mxu0 0.0
        %1846 = vmatprep.subr.mxu0 0.0
        %1847 = vmatpush1.msra.mxu0 0.0
        %1848 = vmatprep.subr.mxu0 0.0
        %1849 = vmatpush1.msra.mxu0 0.0
        %1850 = vmatprep.subr.mxu0 0.0
        %1851 = vmatpush1.msra.mxu0 0.0
        %1852 = vmatprep.mubr.f32.mxu0 0.0
        %1853 = vmatmul.mubr.f32.gmra.mrb[0].mxu0 %v1709
        %v1854 = vpop.f32.mrb[0].mxu0
        %v1855 = vadd.f32 0.0, %v1854
        %v1856 = vpop.f32.mrb[0].mxu0
        %1857 = vdwg.mxu0
        %v1858 = vadd.f32 %v1689, %v1784
        %v1859 = vadd.f32 %v1690, %v1786
        %v1860 = vadd.f32 %v1691, %v1855
        %v1861 = vld [vmem:[%s3] sm:$0xf]
        %1863 = vset.pattern.permute.xlu0 0
        %1864 = vperm.xlu0 %1863, %v1861
        %v1865 = vpop.permute.xlu0 %1864
        %v1867 = vadd.f32 %v1858, %v1865
        %v1868 = vadd.f32 %v1859, %v1865
        %v1869 = vadd.f32 %v1860, %v1865
        %v1870 = vmax.f32 %v1867, 0.0
        %v1871 = vmax.f32 %v1868, 0.0
        %v1872 = vmax.f32 %v1869, 0.0
        %v1874 = vlaneseq
        %v1875 = vshrl.u32 %v1874, 7
        %v1876 = vsub.s32 0, %v1875
        %v1877 = vrot.slane %v358, %v1876
        %v1878 = vlaneseq
        %v1879 = vshrl.u32 %v1878, 7
        %v1880 = vsub.s32 1, %v1879
        %v1881 = vrot.slane %v358, %v1880
        %v1882 = vlaneseq
        %v1883 = vshrl.u32 %v1882, 7
        %v1884 = vsub.s32 2, %v1883
        %v1885 = vrot.slane %v358, %v1884
        %v1889 = vmul.f32 %v1870, %v1877
        %v1890 = vmul.f32 %v1871, %v1881
        %v1891 = vmul.f32 %v1872, %v1885
        %1892 = vst [vmem:[#allocation2] sm:$0xff] 0.0
        %vm1893 = vcmask 863232
        %1894 = vst.msk [vmem:[#allocation2 + $0x8] sm:$0xf] %vm1893, 0.0
        %v1898 = vcombine.low %v1889, %v1890
        %1899 = vrot.lane.b32.xlu0 %v1898, 19
        %v1900 = vpop.permute.xlu0 %1899
        %1901 = vrot.lane.b32.xlu0 %v1891, 19
        %v1902 = vpop.permute.xlu0 %1901
        %v1903 = vrot.slane %v1900, 4
        %vm1904 = vcmask 154624
        %v1905 = vsel %vm1904, %v1903, %v1900
        %v1906 = vsel %vm1904, %v1903, %v1902
        %vm1909 = vcmask 1043608
        %vm1910 = vcmask 1047556
        %vm1911 = vmor %vm1910, %vm1909
        %1912 = vst.msk [vmem:[#allocation2] sm:$0xff] %vm1911, %v1905
        %vm1913 = vcmask 707584
        %1914 = vst.msk [vmem:[#allocation2 + $0x8] sm:$0xf] %vm1913, %v1906
        %v1915 = vld [vmem:[#allocation2] sm:$0xff]
        %v1916 = vld [vmem:[#allocation2 + $0x8] sm:$0xf]
        %v1917 = vld [vmem:[%s4] sm:$0xf]
        %s1918 = scalar_lea.vmem %s4, 4
        %v1919 = vld [vmem:[%s1918] sm:$0xf]
        %v1922 = vcombine.high %v1915, %v1915
        %1923 = vrot.lane.b32.xlu0 %v1915, 127
        %v1924 = vpop.permute.xlu0 %1923
        %1925 = vrot.lane.b32.xlu0 %v1922, 127
        %v1926 = vpop.permute.xlu0 %1925
        %1927 = vrot.lane.b32.xlu0 %v1916, 127
        %v1928 = vpop.permute.xlu0 %1927
        %v1929 = vsel %vm373, %v1924, %v1926
        %v1930 = vsel %vm373, %v1926, %v1928
        %v1932 = vsel %vm376, %v1919, 0
        %v1934 = vsel %vm380, %v1929, 0
        %v1936 = vsel %vm380, %v1930, 0
        %v1938 = vsel %vm380, %v1928, 0
        %1940 = vmatprep.subr.mxu0 %v1936
        %1941 = vmatpush1.msra.mxu0 %v1934
        %1942 = vmatprep.subr.mxu0 0.0
        %1943 = vmatpush1.msra.mxu0 0.0
        %1944 = vmatprep.subr.mxu0 0.0
        %1945 = vmatpush1.msra.mxu0 0.0
        %1946 = vmatprep.subr.mxu0 0.0
        %1947 = vmatpush1.msra.mxu0 0.0
        %1948 = vmatprep.subr.mxu0 0.0
        %1949 = vmatpush1.msra.mxu0 0.0
        %1950 = vmatprep.subr.mxu0 0.0
        %1951 = vmatpush1.msra.mxu0 0.0
        %1952 = vmatprep.subr.mxu0 0.0
        %1953 = vmatpush1.msra.mxu0 0.0
        %1954 = vmatprep.subr.mxu0 0.0
        %1955 = vmatpush1.msra.mxu0 0.0
        %1956 = vmatprep.subr.mxu0 0.0
        %1957 = vmatpush1.msra.mxu0 0.0
        %1958 = vmatprep.subr.mxu0 0.0
        %1959 = vmatpush1.msra.mxu0 0.0
        %1960 = vmatprep.subr.mxu0 0.0
        %1961 = vmatpush1.msra.mxu0 0.0
        %1962 = vmatprep.subr.mxu0 0.0
        %1963 = vmatpush1.msra.mxu0 0.0
        %1964 = vmatprep.subr.mxu0 0.0
        %1965 = vmatpush1.msra.mxu0 0.0
        %1966 = vmatprep.subr.mxu0 0.0
        %1967 = vmatpush1.msra.mxu0 0.0
        %1968 = vmatprep.subr.mxu0 0.0
        %1969 = vmatpush1.msra.mxu0 0.0
        %1970 = vmatprep.subr.mxu0 0.0
        %1971 = vmatpush1.msra.mxu0 0.0
        %1972 = vmatprep.subr.mxu0 0.0
        %1973 = vmatpush1.msra.mxu0 0.0
        %1974 = vmatprep.subr.mxu0 0.0
        %1975 = vmatpush1.msra.mxu0 0.0
        %1976 = vmatprep.subr.mxu0 0.0
        %1977 = vmatpush1.msra.mxu0 0.0
        %1978 = vmatprep.subr.mxu0 0.0
        %1979 = vmatpush1.msra.mxu0 0.0
        %1980 = vmatprep.subr.mxu0 0.0
        %1981 = vmatpush1.msra.mxu0 0.0
        %1982 = vmatprep.subr.mxu0 0.0
        %1983 = vmatpush1.msra.mxu0 0.0
        %1984 = vmatprep.subr.mxu0 0.0
        %1985 = vmatpush1.msra.mxu0 0.0
        %1986 = vmatprep.subr.mxu0 0.0
        %1987 = vmatpush1.msra.mxu0 0.0
        %1988 = vmatprep.subr.mxu0 0.0
        %1989 = vmatpush1.msra.mxu0 0.0
        %1990 = vmatprep.subr.mxu0 0.0
        %1991 = vmatpush1.msra.mxu0 0.0
        %1992 = vmatprep.subr.mxu0 0.0
        %1993 = vmatpush1.msra.mxu0 0.0
        %1994 = vmatprep.subr.mxu0 0.0
        %1995 = vmatpush1.msra.mxu0 0.0
        %1996 = vmatprep.subr.mxu0 0.0
        %1997 = vmatpush1.msra.mxu0 0.0
        %1998 = vmatprep.subr.mxu0 0.0
        %1999 = vmatpush1.msra.mxu0 0.0
        %2000 = vmatprep.subr.mxu0 0.0
        %2001 = vmatpush1.msra.mxu0 0.0
        %2002 = vmatprep.subr.mxu0 0.0
        %2003 = vmatpush1.msra.mxu0 0.0
        %2004 = vmatprep.mubr.f32.mxu0 0.0
        %2005 = vmatmul.mubr.f32.gmra.mrb[0].mxu0 %v1932
        %v2006 = vpop.f32.mrb[0].mxu0
        %v2007 = vadd.f32 0.0, %v2006
        %v2008 = vpop.f32.mrb[0].mxu0
        %v2009 = vadd.f32 0.0, %v2008
        %2010 = vdwg.mxu0
        %2011 = vmatprep.subr.mxu0 0.0
        %2012 = vmatpush1.msra.mxu0 %v1938
        %2013 = vmatprep.subr.mxu0 0.0
        %2014 = vmatpush1.msra.mxu0 0.0
        %2015 = vmatprep.subr.mxu0 0.0
        %2016 = vmatpush1.msra.mxu0 0.0
        %2017 = vmatprep.subr.mxu0 0.0
        %2018 = vmatpush1.msra.mxu0 0.0
        %2019 = vmatprep.subr.mxu0 0.0
        %2020 = vmatpush1.msra.mxu0 0.0
        %2021 = vmatprep.subr.mxu0 0.0
        %2022 = vmatpush1.msra.mxu0 0.0
        %2023 = vmatprep.subr.mxu0 0.0
        %2024 = vmatpush1.msra.mxu0 0.0
        %2025 = vmatprep.subr.mxu0 0.0
        %2026 = vmatpush1.msra.mxu0 0.0
        %2027 = vmatprep.subr.mxu0 0.0
        %2028 = vmatpush1.msra.mxu0 0.0
        %2029 = vmatprep.subr.mxu0 0.0
        %2030 = vmatpush1.msra.mxu0 0.0
        %2031 = vmatprep.subr.mxu0 0.0
        %2032 = vmatpush1.msra.mxu0 0.0
        %2033 = vmatprep.subr.mxu0 0.0
        %2034 = vmatpush1.msra.mxu0 0.0
        %2035 = vmatprep.subr.mxu0 0.0
        %2036 = vmatpush1.msra.mxu0 0.0
        %2037 = vmatprep.subr.mxu0 0.0
        %2038 = vmatpush1.msra.mxu0 0.0
        %2039 = vmatprep.subr.mxu0 0.0
        %2040 = vmatpush1.msra.mxu0 0.0
        %2041 = vmatprep.subr.mxu0 0.0
        %2042 = vmatpush1.msra.mxu0 0.0
        %2043 = vmatprep.subr.mxu0 0.0
        %2044 = vmatpush1.msra.mxu0 0.0
        %2045 = vmatprep.subr.mxu0 0.0
        %2046 = vmatpush1.msra.mxu0 0.0
        %2047 = vmatprep.subr.mxu0 0.0
        %2048 = vmatpush1.msra.mxu0 0.0
        %2049 = vmatprep.subr.mxu0 0.0
        %2050 = vmatpush1.msra.mxu0 0.0
        %2051 = vmatprep.subr.mxu0 0.0
        %2052 = vmatpush1.msra.mxu0 0.0
        %2053 = vmatprep.subr.mxu0 0.0
        %2054 = vmatpush1.msra.mxu0 0.0
        %2055 = vmatprep.subr.mxu0 0.0
        %2056 = vmatpush1.msra.mxu0 0.0
        %2057 = vmatprep.subr.mxu0 0.0
        %2058 = vmatpush1.msra.mxu0 0.0
        %2059 = vmatprep.subr.mxu0 0.0
        %2060 = vmatpush1.msra.mxu0 0.0
        %2061 = vmatprep.subr.mxu0 0.0
        %2062 = vmatpush1.msra.mxu0 0.0
        %2063 = vmatprep.subr.mxu0 0.0
        %2064 = vmatpush1.msra.mxu0 0.0
        %2065 = vmatprep.subr.mxu0 0.0
        %2066 = vmatpush1.msra.mxu0 0.0
        %2067 = vmatprep.subr.mxu0 0.0
        %2068 = vmatpush1.msra.mxu0 0.0
        %2069 = vmatprep.subr.mxu0 0.0
        %2070 = vmatpush1.msra.mxu0 0.0
        %2071 = vmatprep.subr.mxu0 0.0
        %2072 = vmatpush1.msra.mxu0 0.0
        %2073 = vmatprep.subr.mxu0 0.0
        %2074 = vmatpush1.msra.mxu0 0.0
        %2075 = vmatprep.mubr.f32.mxu0 0.0
        %2076 = vmatmul.mubr.f32.gmra.mrb[0].mxu0 %v1932
        %v2077 = vpop.f32.mrb[0].mxu0
        %v2078 = vadd.f32 0.0, %v2077
        %v2079 = vpop.f32.mrb[0].mxu0
        %2080 = vdwg.mxu0
        %v2082 = vsel %vm376, %v1917, 0
        %v2084 = vsel %vm380, %v1915, 0
        %v2086 = vsel %vm380, %v1922, 0
        %v2088 = vsel %vm380, %v1916, 0
        %2090 = vmatprep.subr.mxu0 %v2086
        %2091 = vmatpush1.msra.mxu0 %v2084
        %2092 = vmatprep.subr.mxu0 0.0
        %2093 = vmatpush1.msra.mxu0 0.0
        %2094 = vmatprep.subr.mxu0 0.0
        %2095 = vmatpush1.msra.mxu0 0.0
        %2096 = vmatprep.subr.mxu0 0.0
        %2097 = vmatpush1.msra.mxu0 0.0
        %2098 = vmatprep.subr.mxu0 0.0
        %2099 = vmatpush1.msra.mxu0 0.0
        %2100 = vmatprep.subr.mxu0 0.0
        %2101 = vmatpush1.msra.mxu0 0.0
        %2102 = vmatprep.subr.mxu0 0.0
        %2103 = vmatpush1.msra.mxu0 0.0
        %2104 = vmatprep.subr.mxu0 0.0
        %2105 = vmatpush1.msra.mxu0 0.0
        %2106 = vmatprep.subr.mxu0 0.0
        %2107 = vmatpush1.msra.mxu0 0.0
        %2108 = vmatprep.subr.mxu0 0.0
        %2109 = vmatpush1.msra.mxu0 0.0
        %2110 = vmatprep.subr.mxu0 0.0
        %2111 = vmatpush1.msra.mxu0 0.0
        %2112 = vmatprep.subr.mxu0 0.0
        %2113 = vmatpush1.msra.mxu0 0.0
        %2114 = vmatprep.subr.mxu0 0.0
        %2115 = vmatpush1.msra.mxu0 0.0
        %2116 = vmatprep.subr.mxu0 0.0
        %2117 = vmatpush1.msra.mxu0 0.0
        %2118 = vmatprep.subr.mxu0 0.0
        %2119 = vmatpush1.msra.mxu0 0.0
        %2120 = vmatprep.subr.mxu0 0.0
        %2121 = vmatpush1.msra.mxu0 0.0
        %2122 = vmatprep.subr.mxu0 0.0
        %2123 = vmatpush1.msra.mxu0 0.0
        %2124 = vmatprep.subr.mxu0 0.0
        %2125 = vmatpush1.msra.mxu0 0.0
        %2126 = vmatprep.subr.mxu0 0.0
        %2127 = vmatpush1.msra.mxu0 0.0
        %2128 = vmatprep.subr.mxu0 0.0
        %2129 = vmatpush1.msra.mxu0 0.0
        %2130 = vmatprep.subr.mxu0 0.0
        %2131 = vmatpush1.msra.mxu0 0.0
        %2132 = vmatprep.subr.mxu0 0.0
        %2133 = vmatpush1.msra.mxu0 0.0
        %2134 = vmatprep.subr.mxu0 0.0
        %2135 = vmatpush1.msra.mxu0 0.0
        %2136 = vmatprep.subr.mxu0 0.0
        %2137 = vmatpush1.msra.mxu0 0.0
        %2138 = vmatprep.subr.mxu0 0.0
        %2139 = vmatpush1.msra.mxu0 0.0
        %2140 = vmatprep.subr.mxu0 0.0
        %2141 = vmatpush1.msra.mxu0 0.0
        %2142 = vmatprep.subr.mxu0 0.0
        %2143 = vmatpush1.msra.mxu0 0.0
        %2144 = vmatprep.subr.mxu0 0.0
        %2145 = vmatpush1.msra.mxu0 0.0
        %2146 = vmatprep.subr.mxu0 0.0
        %2147 = vmatpush1.msra.mxu0 0.0
        %2148 = vmatprep.subr.mxu0 0.0
        %2149 = vmatpush1.msra.mxu0 0.0
        %2150 = vmatprep.subr.mxu0 0.0
        %2151 = vmatpush1.msra.mxu0 0.0
        %2152 = vmatprep.subr.mxu0 0.0
        %2153 = vmatpush1.msra.mxu0 0.0
        %2154 = vmatprep.mubr.f32.mxu0 0.0
        %2155 = vmatmul.mubr.f32.gmra.mrb[0].mxu0 %v2082
        %v2156 = vpop.f32.mrb[0].mxu0
        %v2157 = vadd.f32 %v2007, %v2156
        %v2158 = vpop.f32.mrb[0].mxu0
        %v2159 = vadd.f32 %v2009, %v2158
        %2160 = vdwg.mxu0
        %2161 = vmatprep.subr.mxu0 0.0
        %2162 = vmatpush1.msra.mxu0 %v2088
        %2163 = vmatprep.subr.mxu0 0.0
        %2164 = vmatpush1.msra.mxu0 0.0
        %2165 = vmatprep.subr.mxu0 0.0
        %2166 = vmatpush1.msra.mxu0 0.0
        %2167 = vmatprep.subr.mxu0 0.0
        %2168 = vmatpush1.msra.mxu0 0.0
        %2169 = vmatprep.subr.mxu0 0.0
        %2170 = vmatpush1.msra.mxu0 0.0
        %2171 = vmatprep.subr.mxu0 0.0
        %2172 = vmatpush1.msra.mxu0 0.0
        %2173 = vmatprep.subr.mxu0 0.0
        %2174 = vmatpush1.msra.mxu0 0.0
        %2175 = vmatprep.subr.mxu0 0.0
        %2176 = vmatpush1.msra.mxu0 0.0
        %2177 = vmatprep.subr.mxu0 0.0
        %2178 = vmatpush1.msra.mxu0 0.0
        %2179 = vmatprep.subr.mxu0 0.0
        %2180 = vmatpush1.msra.mxu0 0.0
        %2181 = vmatprep.subr.mxu0 0.0
        %2182 = vmatpush1.msra.mxu0 0.0
        %2183 = vmatprep.subr.mxu0 0.0
        %2184 = vmatpush1.msra.mxu0 0.0
        %2185 = vmatprep.subr.mxu0 0.0
        %2186 = vmatpush1.msra.mxu0 0.0
        %2187 = vmatprep.subr.mxu0 0.0
        %2188 = vmatpush1.msra.mxu0 0.0
        %2189 = vmatprep.subr.mxu0 0.0
        %2190 = vmatpush1.msra.mxu0 0.0
        %2191 = vmatprep.subr.mxu0 0.0
        %2192 = vmatpush1.msra.mxu0 0.0
        %2193 = vmatprep.subr.mxu0 0.0
        %2194 = vmatpush1.msra.mxu0 0.0
        %2195 = vmatprep.subr.mxu0 0.0
        %2196 = vmatpush1.msra.mxu0 0.0
        %2197 = vmatprep.subr.mxu0 0.0
        %2198 = vmatpush1.msra.mxu0 0.0
        %2199 = vmatprep.subr.mxu0 0.0
        %2200 = vmatpush1.msra.mxu0 0.0
        %2201 = vmatprep.subr.mxu0 0.0
        %2202 = vmatpush1.msra.mxu0 0.0
        %2203 = vmatprep.subr.mxu0 0.0
        %2204 = vmatpush1.msra.mxu0 0.0
        %2205 = vmatprep.subr.mxu0 0.0
        %2206 = vmatpush1.msra.mxu0 0.0
        %2207 = vmatprep.subr.mxu0 0.0
        %2208 = vmatpush1.msra.mxu0 0.0
        %2209 = vmatprep.subr.mxu0 0.0
        %2210 = vmatpush1.msra.mxu0 0.0
        %2211 = vmatprep.subr.mxu0 0.0
        %2212 = vmatpush1.msra.mxu0 0.0
        %2213 = vmatprep.subr.mxu0 0.0
        %2214 = vmatpush1.msra.mxu0 0.0
        %2215 = vmatprep.subr.mxu0 0.0
        %2216 = vmatpush1.msra.mxu0 0.0
        %2217 = vmatprep.subr.mxu0 0.0
        %2218 = vmatpush1.msra.mxu0 0.0
        %2219 = vmatprep.subr.mxu0 0.0
        %2220 = vmatpush1.msra.mxu0 0.0
        %2221 = vmatprep.subr.mxu0 0.0
        %2222 = vmatpush1.msra.mxu0 0.0
        %2223 = vmatprep.subr.mxu0 0.0
        %2224 = vmatpush1.msra.mxu0 0.0
        %2225 = vmatprep.mubr.f32.mxu0 0.0
        %2226 = vmatmul.mubr.f32.gmra.mrb[0].mxu0 %v2082
        %v2227 = vpop.f32.mrb[0].mxu0
        %v2228 = vadd.f32 %v2078, %v2227
        %v2229 = vpop.f32.mrb[0].mxu0
        %2230 = vdwg.mxu0
        %v2231 = vld [vmem:[#allocation2] sm:$0xff]
        %v2232 = vld [vmem:[#allocation2 + $0x8] sm:$0xf]
        %s2233 = scalar_lea.vmem %s4, 8
        %v2234 = vld [vmem:[%s2233] sm:$0xf]
        %v2237 = vcombine.high %v2231, %v2231
        %2238 = vrot.lane.b32.xlu0 %v2231, 126
        %v2239 = vpop.permute.xlu0 %2238
        %2240 = vrot.lane.b32.xlu0 %v2237, 126
        %v2241 = vpop.permute.xlu0 %2240
        %2242 = vrot.lane.b32.xlu0 %v2232, 126
        %v2243 = vpop.permute.xlu0 %2242
        %v2244 = vsel %vm691, %v2239, %v2241
        %v2245 = vsel %vm691, %v2241, %v2243
        %v2247 = vsel %vm376, %v2234, 0
        %v2249 = vsel %vm380, %v2244, 0
        %v2251 = vsel %vm380, %v2245, 0
        %v2253 = vsel %vm380, %v2243, 0
        %2255 = vmatprep.subr.mxu0 %v2251
        %2256 = vmatpush1.msra.mxu0 %v2249
        %2257 = vmatprep.subr.mxu0 0.0
        %2258 = vmatpush1.msra.mxu0 0.0
        %2259 = vmatprep.subr.mxu0 0.0
        %2260 = vmatpush1.msra.mxu0 0.0
        %2261 = vmatprep.subr.mxu0 0.0
        %2262 = vmatpush1.msra.mxu0 0.0
        %2263 = vmatprep.subr.mxu0 0.0
        %2264 = vmatpush1.msra.mxu0 0.0
        %2265 = vmatprep.subr.mxu0 0.0
        %2266 = vmatpush1.msra.mxu0 0.0
        %2267 = vmatprep.subr.mxu0 0.0
        %2268 = vmatpush1.msra.mxu0 0.0
        %2269 = vmatprep.subr.mxu0 0.0
        %2270 = vmatpush1.msra.mxu0 0.0
        %2271 = vmatprep.subr.mxu0 0.0
        %2272 = vmatpush1.msra.mxu0 0.0
        %2273 = vmatprep.subr.mxu0 0.0
        %2274 = vmatpush1.msra.mxu0 0.0
        %2275 = vmatprep.subr.mxu0 0.0
        %2276 = vmatpush1.msra.mxu0 0.0
        %2277 = vmatprep.subr.mxu0 0.0
        %2278 = vmatpush1.msra.mxu0 0.0
        %2279 = vmatprep.subr.mxu0 0.0
        %2280 = vmatpush1.msra.mxu0 0.0
        %2281 = vmatprep.subr.mxu0 0.0
        %2282 = vmatpush1.msra.mxu0 0.0
        %2283 = vmatprep.subr.mxu0 0.0
        %2284 = vmatpush1.msra.mxu0 0.0
        %2285 = vmatprep.subr.mxu0 0.0
        %2286 = vmatpush1.msra.mxu0 0.0
        %2287 = vmatprep.subr.mxu0 0.0
        %2288 = vmatpush1.msra.mxu0 0.0
        %2289 = vmatprep.subr.mxu0 0.0
        %2290 = vmatpush1.msra.mxu0 0.0
        %2291 = vmatprep.subr.mxu0 0.0
        %2292 = vmatpush1.msra.mxu0 0.0
        %2293 = vmatprep.subr.mxu0 0.0
        %2294 = vmatpush1.msra.mxu0 0.0
        %2295 = vmatprep.subr.mxu0 0.0
        %2296 = vmatpush1.msra.mxu0 0.0
        %2297 = vmatprep.subr.mxu0 0.0
        %2298 = vmatpush1.msra.mxu0 0.0
        %2299 = vmatprep.subr.mxu0 0.0
        %2300 = vmatpush1.msra.mxu0 0.0
        %2301 = vmatprep.subr.mxu0 0.0
        %2302 = vmatpush1.msra.mxu0 0.0
        %2303 = vmatprep.subr.mxu0 0.0
        %2304 = vmatpush1.msra.mxu0 0.0
        %2305 = vmatprep.subr.mxu0 0.0
        %2306 = vmatpush1.msra.mxu0 0.0
        %2307 = vmatprep.subr.mxu0 0.0
        %2308 = vmatpush1.msra.mxu0 0.0
        %2309 = vmatprep.subr.mxu0 0.0
        %2310 = vmatpush1.msra.mxu0 0.0
        %2311 = vmatprep.subr.mxu0 0.0
        %2312 = vmatpush1.msra.mxu0 0.0
        %2313 = vmatprep.subr.mxu0 0.0
        %2314 = vmatpush1.msra.mxu0 0.0
        %2315 = vmatprep.subr.mxu0 0.0
        %2316 = vmatpush1.msra.mxu0 0.0
        %2317 = vmatprep.subr.mxu0 0.0
        %2318 = vmatpush1.msra.mxu0 0.0
        %2319 = vmatprep.mubr.f32.mxu0 0.0
        %2320 = vmatmul.mubr.f32.gmra.mrb[0].mxu0 %v2247
        %v2321 = vpop.f32.mrb[0].mxu0
        %v2322 = vadd.f32 0.0, %v2321
        %v2323 = vpop.f32.mrb[0].mxu0
        %v2324 = vadd.f32 0.0, %v2323
        %2325 = vdwg.mxu0
        %2326 = vmatprep.subr.mxu0 0.0
        %2327 = vmatpush1.msra.mxu0 %v2253
        %2328 = vmatprep.subr.mxu0 0.0
        %2329 = vmatpush1.msra.mxu0 0.0
        %2330 = vmatprep.subr.mxu0 0.0
        %2331 = vmatpush1.msra.mxu0 0.0
        %2332 = vmatprep.subr.mxu0 0.0
        %2333 = vmatpush1.msra.mxu0 0.0
        %2334 = vmatprep.subr.mxu0 0.0
        %2335 = vmatpush1.msra.mxu0 0.0
        %2336 = vmatprep.subr.mxu0 0.0
        %2337 = vmatpush1.msra.mxu0 0.0
        %2338 = vmatprep.subr.mxu0 0.0
        %2339 = vmatpush1.msra.mxu0 0.0
        %2340 = vmatprep.subr.mxu0 0.0
        %2341 = vmatpush1.msra.mxu0 0.0
        %2342 = vmatprep.subr.mxu0 0.0
        %2343 = vmatpush1.msra.mxu0 0.0
        %2344 = vmatprep.subr.mxu0 0.0
        %2345 = vmatpush1.msra.mxu0 0.0
        %2346 = vmatprep.subr.mxu0 0.0
        %2347 = vmatpush1.msra.mxu0 0.0
        %2348 = vmatprep.subr.mxu0 0.0
        %2349 = vmatpush1.msra.mxu0 0.0
        %2350 = vmatprep.subr.mxu0 0.0
        %2351 = vmatpush1.msra.mxu0 0.0
        %2352 = vmatprep.subr.mxu0 0.0
        %2353 = vmatpush1.msra.mxu0 0.0
        %2354 = vmatprep.subr.mxu0 0.0
        %2355 = vmatpush1.msra.mxu0 0.0
        %2356 = vmatprep.subr.mxu0 0.0
        %2357 = vmatpush1.msra.mxu0 0.0
        %2358 = vmatprep.subr.mxu0 0.0
        %2359 = vmatpush1.msra.mxu0 0.0
        %2360 = vmatprep.subr.mxu0 0.0
        %2361 = vmatpush1.msra.mxu0 0.0
        %2362 = vmatprep.subr.mxu0 0.0
        %2363 = vmatpush1.msra.mxu0 0.0
        %2364 = vmatprep.subr.mxu0 0.0
        %2365 = vmatpush1.msra.mxu0 0.0
        %2366 = vmatprep.subr.mxu0 0.0
        %2367 = vmatpush1.msra.mxu0 0.0
        %2368 = vmatprep.subr.mxu0 0.0
        %2369 = vmatpush1.msra.mxu0 0.0
        %2370 = vmatprep.subr.mxu0 0.0
        %2371 = vmatpush1.msra.mxu0 0.0
        %2372 = vmatprep.subr.mxu0 0.0
        %2373 = vmatpush1.msra.mxu0 0.0
        %2374 = vmatprep.subr.mxu0 0.0
        %2375 = vmatpush1.msra.mxu0 0.0
        %2376 = vmatprep.subr.mxu0 0.0
        %2377 = vmatpush1.msra.mxu0 0.0
        %2378 = vmatprep.subr.mxu0 0.0
        %2379 = vmatpush1.msra.mxu0 0.0
        %2380 = vmatprep.subr.mxu0 0.0
        %2381 = vmatpush1.msra.mxu0 0.0
        %2382 = vmatprep.subr.mxu0 0.0
        %2383 = vmatpush1.msra.mxu0 0.0
        %2384 = vmatprep.subr.mxu0 0.0
        %2385 = vmatpush1.msra.mxu0 0.0
        %2386 = vmatprep.subr.mxu0 0.0
        %2387 = vmatpush1.msra.mxu0 0.0
        %2388 = vmatprep.subr.mxu0 0.0
        %2389 = vmatpush1.msra.mxu0 0.0
        %2390 = vmatprep.mubr.f32.mxu0 0.0
        %2391 = vmatmul.mubr.f32.gmra.mrb[0].mxu0 %v2247
        %v2392 = vpop.f32.mrb[0].mxu0
        %v2393 = vadd.f32 0.0, %v2392
        %v2394 = vpop.f32.mrb[0].mxu0
        %2395 = vdwg.mxu0
        %v2396 = vadd.f32 %v2157, %v2322
        %v2397 = vadd.f32 %v2159, %v2324
        %v2398 = vadd.f32 %v2228, %v2393
        %v2399 = vld [vmem:[#allocation2] sm:$0xff]
        %v2400 = vld [vmem:[#allocation2 + $0x8] sm:$0xf]
        %s2401 = scalar_lea.vmem %s4, 12
        %v2402 = vld [vmem:[%s2401] sm:$0xf]
        %v2405 = vcombine.high %v2399, %v2399
        %2406 = vrot.lane.b32.xlu0 %v2399, 110
        %v2407 = vpop.permute.xlu0 %2406
        %2408 = vrot.lane.b32.xlu0 %v2405, 110
        %v2409 = vpop.permute.xlu0 %2408
        %2410 = vrot.lane.b32.xlu0 %v2400, 110
        %v2411 = vpop.permute.xlu0 %2410
        %v2412 = vsel %vm860, %v2407, %v2409
        %v2413 = vsel %vm860, %v2409, %v2411
        %v2415 = vsel %vm376, %v2402, 0
        %v2417 = vsel %vm380, %v2412, 0
        %v2419 = vsel %vm380, %v2413, 0
        %v2421 = vsel %vm380, %v2411, 0
        %2423 = vmatprep.subr.mxu0 %v2419
        %2424 = vmatpush1.msra.mxu0 %v2417
        %2425 = vmatprep.subr.mxu0 0.0
        %2426 = vmatpush1.msra.mxu0 0.0
        %2427 = vmatprep.subr.mxu0 0.0
        %2428 = vmatpush1.msra.mxu0 0.0
        %2429 = vmatprep.subr.mxu0 0.0
        %2430 = vmatpush1.msra.mxu0 0.0
        %2431 = vmatprep.subr.mxu0 0.0
        %2432 = vmatpush1.msra.mxu0 0.0
        %2433 = vmatprep.subr.mxu0 0.0
        %2434 = vmatpush1.msra.mxu0 0.0
        %2435 = vmatprep.subr.mxu0 0.0
        %2436 = vmatpush1.msra.mxu0 0.0
        %2437 = vmatprep.subr.mxu0 0.0
        %2438 = vmatpush1.msra.mxu0 0.0
        %2439 = vmatprep.subr.mxu0 0.0
        %2440 = vmatpush1.msra.mxu0 0.0
        %2441 = vmatprep.subr.mxu0 0.0
        %2442 = vmatpush1.msra.mxu0 0.0
        %2443 = vmatprep.subr.mxu0 0.0
        %2444 = vmatpush1.msra.mxu0 0.0
        %2445 = vmatprep.subr.mxu0 0.0
        %2446 = vmatpush1.msra.mxu0 0.0
        %2447 = vmatprep.subr.mxu0 0.0
        %2448 = vmatpush1.msra.mxu0 0.0
        %2449 = vmatprep.subr.mxu0 0.0
        %2450 = vmatpush1.msra.mxu0 0.0
        %2451 = vmatprep.subr.mxu0 0.0
        %2452 = vmatpush1.msra.mxu0 0.0
        %2453 = vmatprep.subr.mxu0 0.0
        %2454 = vmatpush1.msra.mxu0 0.0
        %2455 = vmatprep.subr.mxu0 0.0
        %2456 = vmatpush1.msra.mxu0 0.0
        %2457 = vmatprep.subr.mxu0 0.0
        %2458 = vmatpush1.msra.mxu0 0.0
        %2459 = vmatprep.subr.mxu0 0.0
        %2460 = vmatpush1.msra.mxu0 0.0
        %2461 = vmatprep.subr.mxu0 0.0
        %2462 = vmatpush1.msra.mxu0 0.0
        %2463 = vmatprep.subr.mxu0 0.0
        %2464 = vmatpush1.msra.mxu0 0.0
        %2465 = vmatprep.subr.mxu0 0.0
        %2466 = vmatpush1.msra.mxu0 0.0
        %2467 = vmatprep.subr.mxu0 0.0
        %2468 = vmatpush1.msra.mxu0 0.0
        %2469 = vmatprep.subr.mxu0 0.0
        %2470 = vmatpush1.msra.mxu0 0.0
        %2471 = vmatprep.subr.mxu0 0.0
        %2472 = vmatpush1.msra.mxu0 0.0
        %2473 = vmatprep.subr.mxu0 0.0
        %2474 = vmatpush1.msra.mxu0 0.0
        %2475 = vmatprep.subr.mxu0 0.0
        %2476 = vmatpush1.msra.mxu0 0.0
        %2477 = vmatprep.subr.mxu0 0.0
        %2478 = vmatpush1.msra.mxu0 0.0
        %2479 = vmatprep.subr.mxu0 0.0
        %2480 = vmatpush1.msra.mxu0 0.0
        %2481 = vmatprep.subr.mxu0 0.0
        %2482 = vmatpush1.msra.mxu0 0.0
        %2483 = vmatprep.subr.mxu0 0.0
        %2484 = vmatpush1.msra.mxu0 0.0
        %2485 = vmatprep.subr.mxu0 0.0
        %2486 = vmatpush1.msra.mxu0 0.0
        %2487 = vmatprep.mubr.f32.mxu0 0.0
        %2488 = vmatmul.mubr.f32.gmra.mrb[0].mxu0 %v2415
        %v2489 = vpop.f32.mrb[0].mxu0
        %v2490 = vadd.f32 0.0, %v2489
        %v2491 = vpop.f32.mrb[0].mxu0
        %v2492 = vadd.f32 0.0, %v2491
        %2493 = vdwg.mxu0
        %2494 = vmatprep.subr.mxu0 0.0
        %2495 = vmatpush1.msra.mxu0 %v2421
        %2496 = vmatprep.subr.mxu0 0.0
        %2497 = vmatpush1.msra.mxu0 0.0
        %2498 = vmatprep.subr.mxu0 0.0
        %2499 = vmatpush1.msra.mxu0 0.0
        %2500 = vmatprep.subr.mxu0 0.0
        %2501 = vmatpush1.msra.mxu0 0.0
        %2502 = vmatprep.subr.mxu0 0.0
        %2503 = vmatpush1.msra.mxu0 0.0
        %2504 = vmatprep.subr.mxu0 0.0
        %2505 = vmatpush1.msra.mxu0 0.0
        %2506 = vmatprep.subr.mxu0 0.0
        %2507 = vmatpush1.msra.mxu0 0.0
        %2508 = vmatprep.subr.mxu0 0.0
        %2509 = vmatpush1.msra.mxu0 0.0
        %2510 = vmatprep.subr.mxu0 0.0
        %2511 = vmatpush1.msra.mxu0 0.0
        %2512 = vmatprep.subr.mxu0 0.0
        %2513 = vmatpush1.msra.mxu0 0.0
        %2514 = vmatprep.subr.mxu0 0.0
        %2515 = vmatpush1.msra.mxu0 0.0
        %2516 = vmatprep.subr.mxu0 0.0
        %2517 = vmatpush1.msra.mxu0 0.0
        %2518 = vmatprep.subr.mxu0 0.0
        %2519 = vmatpush1.msra.mxu0 0.0
        %2520 = vmatprep.subr.mxu0 0.0
        %2521 = vmatpush1.msra.mxu0 0.0
        %2522 = vmatprep.subr.mxu0 0.0
        %2523 = vmatpush1.msra.mxu0 0.0
        %2524 = vmatprep.subr.mxu0 0.0
        %2525 = vmatpush1.msra.mxu0 0.0
        %2526 = vmatprep.subr.mxu0 0.0
        %2527 = vmatpush1.msra.mxu0 0.0
        %2528 = vmatprep.subr.mxu0 0.0
        %2529 = vmatpush1.msra.mxu0 0.0
        %2530 = vmatprep.subr.mxu0 0.0
        %2531 = vmatpush1.msra.mxu0 0.0
        %2532 = vmatprep.subr.mxu0 0.0
        %2533 = vmatpush1.msra.mxu0 0.0
        %2534 = vmatprep.subr.mxu0 0.0
        %2535 = vmatpush1.msra.mxu0 0.0
        %2536 = vmatprep.subr.mxu0 0.0
        %2537 = vmatpush1.msra.mxu0 0.0
        %2538 = vmatprep.subr.mxu0 0.0
        %2539 = vmatpush1.msra.mxu0 0.0
        %2540 = vmatprep.subr.mxu0 0.0
        %2541 = vmatpush1.msra.mxu0 0.0
        %2542 = vmatprep.subr.mxu0 0.0
        %2543 = vmatpush1.msra.mxu0 0.0
        %2544 = vmatprep.subr.mxu0 0.0
        %2545 = vmatpush1.msra.mxu0 0.0
        %2546 = vmatprep.subr.mxu0 0.0
        %2547 = vmatpush1.msra.mxu0 0.0
        %2548 = vmatprep.subr.mxu0 0.0
        %2549 = vmatpush1.msra.mxu0 0.0
        %2550 = vmatprep.subr.mxu0 0.0
        %2551 = vmatpush1.msra.mxu0 0.0
        %2552 = vmatprep.subr.mxu0 0.0
        %2553 = vmatpush1.msra.mxu0 0.0
        %2554 = vmatprep.subr.mxu0 0.0
        %2555 = vmatpush1.msra.mxu0 0.0
        %2556 = vmatprep.subr.mxu0 0.0
        %2557 = vmatpush1.msra.mxu0 0.0
        %2558 = vmatprep.mubr.f32.mxu0 0.0
        %2559 = vmatmul.mubr.f32.gmra.mrb[0].mxu0 %v2415
        %v2560 = vpop.f32.mrb[0].mxu0
        %v2561 = vadd.f32 0.0, %v2560
        %v2562 = vpop.f32.mrb[0].mxu0
        %2563 = vdwg.mxu0
        %v2564 = vadd.f32 %v2396, %v2490
        %v2565 = vadd.f32 %v2397, %v2492
        %v2566 = vadd.f32 %v2398, %v2561
        %v2567 = vld [vmem:[#allocation2] sm:$0xff]
        %v2568 = vld [vmem:[#allocation2 + $0x8] sm:$0xf]
        %s2569 = scalar_lea.vmem %s4, 16
        %v2570 = vld [vmem:[%s2569] sm:$0xf]
        %v2573 = vcombine.high %v2567, %v2567
        %2574 = vrot.lane.b32.xlu0 %v2567, 109
        %v2575 = vpop.permute.xlu0 %2574
        %2576 = vrot.lane.b32.xlu0 %v2573, 109
        %v2577 = vpop.permute.xlu0 %2576
        %2578 = vrot.lane.b32.xlu0 %v2568, 109
        %v2579 = vpop.permute.xlu0 %2578
        %v2580 = vsel %vm1029, %v2575, %v2577
        %v2581 = vsel %vm1029, %v2577, %v2579
        %v2583 = vsel %vm376, %v2570, 0
        %v2585 = vsel %vm380, %v2580, 0
        %v2587 = vsel %vm380, %v2581, 0
        %v2589 = vsel %vm380, %v2579, 0
        %2591 = vmatprep.subr.mxu0 %v2587
        %2592 = vmatpush1.msra.mxu0 %v2585
        %2593 = vmatprep.subr.mxu0 0.0
        %2594 = vmatpush1.msra.mxu0 0.0
        %2595 = vmatprep.subr.mxu0 0.0
        %2596 = vmatpush1.msra.mxu0 0.0
        %2597 = vmatprep.subr.mxu0 0.0
        %2598 = vmatpush1.msra.mxu0 0.0
        %2599 = vmatprep.subr.mxu0 0.0
        %2600 = vmatpush1.msra.mxu0 0.0
        %2601 = vmatprep.subr.mxu0 0.0
        %2602 = vmatpush1.msra.mxu0 0.0
        %2603 = vmatprep.subr.mxu0 0.0
        %2604 = vmatpush1.msra.mxu0 0.0
        %2605 = vmatprep.subr.mxu0 0.0
        %2606 = vmatpush1.msra.mxu0 0.0
        %2607 = vmatprep.subr.mxu0 0.0
        %2608 = vmatpush1.msra.mxu0 0.0
        %2609 = vmatprep.subr.mxu0 0.0
        %2610 = vmatpush1.msra.mxu0 0.0
        %2611 = vmatprep.subr.mxu0 0.0
        %2612 = vmatpush1.msra.mxu0 0.0
        %2613 = vmatprep.subr.mxu0 0.0
        %2614 = vmatpush1.msra.mxu0 0.0
        %2615 = vmatprep.subr.mxu0 0.0
        %2616 = vmatpush1.msra.mxu0 0.0
        %2617 = vmatprep.subr.mxu0 0.0
        %2618 = vmatpush1.msra.mxu0 0.0
        %2619 = vmatprep.subr.mxu0 0.0
        %2620 = vmatpush1.msra.mxu0 0.0
        %2621 = vmatprep.subr.mxu0 0.0
        %2622 = vmatpush1.msra.mxu0 0.0
        %2623 = vmatprep.subr.mxu0 0.0
        %2624 = vmatpush1.msra.mxu0 0.0
        %2625 = vmatprep.subr.mxu0 0.0
        %2626 = vmatpush1.msra.mxu0 0.0
        %2627 = vmatprep.subr.mxu0 0.0
        %2628 = vmatpush1.msra.mxu0 0.0
        %2629 = vmatprep.subr.mxu0 0.0
        %2630 = vmatpush1.msra.mxu0 0.0
        %2631 = vmatprep.subr.mxu0 0.0
        %2632 = vmatpush1.msra.mxu0 0.0
        %2633 = vmatprep.subr.mxu0 0.0
        %2634 = vmatpush1.msra.mxu0 0.0
        %2635 = vmatprep.subr.mxu0 0.0
        %2636 = vmatpush1.msra.mxu0 0.0
        %2637 = vmatprep.subr.mxu0 0.0
        %2638 = vmatpush1.msra.mxu0 0.0
        %2639 = vmatprep.subr.mxu0 0.0
        %2640 = vmatpush1.msra.mxu0 0.0
        %2641 = vmatprep.subr.mxu0 0.0
        %2642 = vmatpush1.msra.mxu0 0.0
        %2643 = vmatprep.subr.mxu0 0.0
        %2644 = vmatpush1.msra.mxu0 0.0
        %2645 = vmatprep.subr.mxu0 0.0
        %2646 = vmatpush1.msra.mxu0 0.0
        %2647 = vmatprep.subr.mxu0 0.0
        %2648 = vmatpush1.msra.mxu0 0.0
        %2649 = vmatprep.subr.mxu0 0.0
        %2650 = vmatpush1.msra.mxu0 0.0
        %2651 = vmatprep.subr.mxu0 0.0
        %2652 = vmatpush1.msra.mxu0 0.0
        %2653 = vmatprep.subr.mxu0 0.0
        %2654 = vmatpush1.msra.mxu0 0.0
        %2655 = vmatprep.mubr.f32.mxu0 0.0
        %2656 = vmatmul.mubr.f32.gmra.mrb[0].mxu0 %v2583
        %v2657 = vpop.f32.mrb[0].mxu0
        %v2658 = vadd.f32 0.0, %v2657
        %v2659 = vpop.f32.mrb[0].mxu0
        %v2660 = vadd.f32 0.0, %v2659
        %2661 = vdwg.mxu0
        %2662 = vmatprep.subr.mxu0 0.0
        %2663 = vmatpush1.msra.mxu0 %v2589
        %2664 = vmatprep.subr.mxu0 0.0
        %2665 = vmatpush1.msra.mxu0 0.0
        %2666 = vmatprep.subr.mxu0 0.0
        %2667 = vmatpush1.msra.mxu0 0.0
        %2668 = vmatprep.subr.mxu0 0.0
        %2669 = vmatpush1.msra.mxu0 0.0
        %2670 = vmatprep.subr.mxu0 0.0
        %2671 = vmatpush1.msra.mxu0 0.0
        %2672 = vmatprep.subr.mxu0 0.0
        %2673 = vmatpush1.msra.mxu0 0.0
        %2674 = vmatprep.subr.mxu0 0.0
        %2675 = vmatpush1.msra.mxu0 0.0
        %2676 = vmatprep.subr.mxu0 0.0
        %2677 = vmatpush1.msra.mxu0 0.0
        %2678 = vmatprep.subr.mxu0 0.0
        %2679 = vmatpush1.msra.mxu0 0.0
        %2680 = vmatprep.subr.mxu0 0.0
        %2681 = vmatpush1.msra.mxu0 0.0
        %2682 = vmatprep.subr.mxu0 0.0
        %2683 = vmatpush1.msra.mxu0 0.0
        %2684 = vmatprep.subr.mxu0 0.0
        %2685 = vmatpush1.msra.mxu0 0.0
        %2686 = vmatprep.subr.mxu0 0.0
        %2687 = vmatpush1.msra.mxu0 0.0
        %2688 = vmatprep.subr.mxu0 0.0
        %2689 = vmatpush1.msra.mxu0 0.0
        %2690 = vmatprep.subr.mxu0 0.0
        %2691 = vmatpush1.msra.mxu0 0.0
        %2692 = vmatprep.subr.mxu0 0.0
        %2693 = vmatpush1.msra.mxu0 0.0
        %2694 = vmatprep.subr.mxu0 0.0
        %2695 = vmatpush1.msra.mxu0 0.0
        %2696 = vmatprep.subr.mxu0 0.0
        %2697 = vmatpush1.msra.mxu0 0.0
        %2698 = vmatprep.subr.mxu0 0.0
        %2699 = vmatpush1.msra.mxu0 0.0
        %2700 = vmatprep.subr.mxu0 0.0
        %2701 = vmatpush1.msra.mxu0 0.0
        %2702 = vmatprep.subr.mxu0 0.0
        %2703 = vmatpush1.msra.mxu0 0.0
        %2704 = vmatprep.subr.mxu0 0.0
        %2705 = vmatpush1.msra.mxu0 0.0
        %2706 = vmatprep.subr.mxu0 0.0
        %2707 = vmatpush1.msra.mxu0 0.0
        %2708 = vmatprep.subr.mxu0 0.0
        %2709 = vmatpush1.msra.mxu0 0.0
        %2710 = vmatprep.subr.mxu0 0.0
        %2711 = vmatpush1.msra.mxu0 0.0
        %2712 = vmatprep.subr.mxu0 0.0
        %2713 = vmatpush1.msra.mxu0 0.0
        %2714 = vmatprep.subr.mxu0 0.0
        %2715 = vmatpush1.msra.mxu0 0.0
        %2716 = vmatprep.subr.mxu0 0.0
        %2717 = vmatpush1.msra.mxu0 0.0
        %2718 = vmatprep.subr.mxu0 0.0
        %2719 = vmatpush1.msra.mxu0 0.0
        %2720 = vmatprep.subr.mxu0 0.0
        %2721 = vmatpush1.msra.mxu0 0.0
        %2722 = vmatprep.subr.mxu0 0.0
        %2723 = vmatpush1.msra.mxu0 0.0
        %2724 = vmatprep.subr.mxu0 0.0
        %2725 = vmatpush1.msra.mxu0 0.0
        %2726 = vmatprep.mubr.f32.mxu0 0.0
        %2727 = vmatmul.mubr.f32.gmra.mrb[0].mxu0 %v2583
        %v2728 = vpop.f32.mrb[0].mxu0
        %v2729 = vadd.f32 0.0, %v2728
        %v2730 = vpop.f32.mrb[0].mxu0
        %2731 = vdwg.mxu0
        %v2732 = vadd.f32 %v2564, %v2658
        %v2733 = vadd.f32 %v2565, %v2660
        %v2734 = vadd.f32 %v2566, %v2729
        %v2735 = vld [vmem:[#allocation2] sm:$0xff]
        %v2736 = vld [vmem:[#allocation2 + $0x8] sm:$0xf]
        %s2737 = scalar_lea.vmem %s4, 20
        %v2738 = vld [vmem:[%s2737] sm:$0xf]
        %v2741 = vcombine.high %v2735, %v2735
        %2742 = vrot.lane.b32.xlu0 %v2735, 108
        %v2743 = vpop.permute.xlu0 %2742
        %2744 = vrot.lane.b32.xlu0 %v2741, 108
        %v2745 = vpop.permute.xlu0 %2744
        %2746 = vrot.lane.b32.xlu0 %v2736, 108
        %v2747 = vpop.permute.xlu0 %2746
        %v2748 = vsel %vm1198, %v2743, %v2745
        %v2749 = vsel %vm1198, %v2745, %v2747
        %v2751 = vsel %vm376, %v2738, 0
        %v2753 = vsel %vm380, %v2748, 0
        %v2755 = vsel %vm380, %v2749, 0
        %v2757 = vsel %vm380, %v2747, 0
        %2759 = vmatprep.subr.mxu0 %v2755
        %2760 = vmatpush1.msra.mxu0 %v2753
        %2761 = vmatprep.subr.mxu0 0.0
        %2762 = vmatpush1.msra.mxu0 0.0
        %2763 = vmatprep.subr.mxu0 0.0
        %2764 = vmatpush1.msra.mxu0 0.0
        %2765 = vmatprep.subr.mxu0 0.0
        %2766 = vmatpush1.msra.mxu0 0.0
        %2767 = vmatprep.subr.mxu0 0.0
        %2768 = vmatpush1.msra.mxu0 0.0
        %2769 = vmatprep.subr.mxu0 0.0
        %2770 = vmatpush1.msra.mxu0 0.0
        %2771 = vmatprep.subr.mxu0 0.0
        %2772 = vmatpush1.msra.mxu0 0.0
        %2773 = vmatprep.subr.mxu0 0.0
        %2774 = vmatpush1.msra.mxu0 0.0
        %2775 = vmatprep.subr.mxu0 0.0
        %2776 = vmatpush1.msra.mxu0 0.0
        %2777 = vmatprep.subr.mxu0 0.0
        %2778 = vmatpush1.msra.mxu0 0.0
        %2779 = vmatprep.subr.mxu0 0.0
        %2780 = vmatpush1.msra.mxu0 0.0
        %2781 = vmatprep.subr.mxu0 0.0
        %2782 = vmatpush1.msra.mxu0 0.0
        %2783 = vmatprep.subr.mxu0 0.0
        %2784 = vmatpush1.msra.mxu0 0.0
        %2785 = vmatprep.subr.mxu0 0.0
        %2786 = vmatpush1.msra.mxu0 0.0
        %2787 = vmatprep.subr.mxu0 0.0
        %2788 = vmatpush1.msra.mxu0 0.0
        %2789 = vmatprep.subr.mxu0 0.0
        %2790 = vmatpush1.msra.mxu0 0.0
        %2791 = vmatprep.subr.mxu0 0.0
        %2792 = vmatpush1.msra.mxu0 0.0
        %2793 = vmatprep.subr.mxu0 0.0
        %2794 = vmatpush1.msra.mxu0 0.0
        %2795 = vmatprep.subr.mxu0 0.0
        %2796 = vmatpush1.msra.mxu0 0.0
        %2797 = vmatprep.subr.mxu0 0.0
        %2798 = vmatpush1.msra.mxu0 0.0
        %2799 = vmatprep.subr.mxu0 0.0
        %2800 = vmatpush1.msra.mxu0 0.0
        %2801 = vmatprep.subr.mxu0 0.0
        %2802 = vmatpush1.msra.mxu0 0.0
        %2803 = vmatprep.subr.mxu0 0.0
        %2804 = vmatpush1.msra.mxu0 0.0
        %2805 = vmatprep.subr.mxu0 0.0
        %2806 = vmatpush1.msra.mxu0 0.0
        %2807 = vmatprep.subr.mxu0 0.0
        %2808 = vmatpush1.msra.mxu0 0.0
        %2809 = vmatprep.subr.mxu0 0.0
        %2810 = vmatpush1.msra.mxu0 0.0
        %2811 = vmatprep.subr.mxu0 0.0
        %2812 = vmatpush1.msra.mxu0 0.0
        %2813 = vmatprep.subr.mxu0 0.0
        %2814 = vmatpush1.msra.mxu0 0.0
        %2815 = vmatprep.subr.mxu0 0.0
        %2816 = vmatpush1.msra.mxu0 0.0
        %2817 = vmatprep.subr.mxu0 0.0
        %2818 = vmatpush1.msra.mxu0 0.0
        %2819 = vmatprep.subr.mxu0 0.0
        %2820 = vmatpush1.msra.mxu0 0.0
        %2821 = vmatprep.subr.mxu0 0.0
        %2822 = vmatpush1.msra.mxu0 0.0
        %2823 = vmatprep.mubr.f32.mxu0 0.0
        %2824 = vmatmul.mubr.f32.gmra.mrb[0].mxu0 %v2751
        %v2825 = vpop.f32.mrb[0].mxu0
        %v2826 = vadd.f32 0.0, %v2825
        %v2827 = vpop.f32.mrb[0].mxu0
        %v2828 = vadd.f32 0.0, %v2827
        %2829 = vdwg.mxu0
        %2830 = vmatprep.subr.mxu0 0.0
        %2831 = vmatpush1.msra.mxu0 %v2757
        %2832 = vmatprep.subr.mxu0 0.0
        %2833 = vmatpush1.msra.mxu0 0.0
        %2834 = vmatprep.subr.mxu0 0.0
        %2835 = vmatpush1.msra.mxu0 0.0
        %2836 = vmatprep.subr.mxu0 0.0
        %2837 = vmatpush1.msra.mxu0 0.0
        %2838 = vmatprep.subr.mxu0 0.0
        %2839 = vmatpush1.msra.mxu0 0.0
        %2840 = vmatprep.subr.mxu0 0.0
        %2841 = vmatpush1.msra.mxu0 0.0
        %2842 = vmatprep.subr.mxu0 0.0
        %2843 = vmatpush1.msra.mxu0 0.0
        %2844 = vmatprep.subr.mxu0 0.0
        %2845 = vmatpush1.msra.mxu0 0.0
        %2846 = vmatprep.subr.mxu0 0.0
        %2847 = vmatpush1.msra.mxu0 0.0
        %2848 = vmatprep.subr.mxu0 0.0
        %2849 = vmatpush1.msra.mxu0 0.0
        %2850 = vmatprep.subr.mxu0 0.0
        %2851 = vmatpush1.msra.mxu0 0.0
        %2852 = vmatprep.subr.mxu0 0.0
        %2853 = vmatpush1.msra.mxu0 0.0
        %2854 = vmatprep.subr.mxu0 0.0
        %2855 = vmatpush1.msra.mxu0 0.0
        %2856 = vmatprep.subr.mxu0 0.0
        %2857 = vmatpush1.msra.mxu0 0.0
        %2858 = vmatprep.subr.mxu0 0.0
        %2859 = vmatpush1.msra.mxu0 0.0
        %2860 = vmatprep.subr.mxu0 0.0
        %2861 = vmatpush1.msra.mxu0 0.0
        %2862 = vmatprep.subr.mxu0 0.0
        %2863 = vmatpush1.msra.mxu0 0.0
        %2864 = vmatprep.subr.mxu0 0.0
        %2865 = vmatpush1.msra.mxu0 0.0
        %2866 = vmatprep.subr.mxu0 0.0
        %2867 = vmatpush1.msra.mxu0 0.0
        %2868 = vmatprep.subr.mxu0 0.0
        %2869 = vmatpush1.msra.mxu0 0.0
        %2870 = vmatprep.subr.mxu0 0.0
        %2871 = vmatpush1.msra.mxu0 0.0
        %2872 = vmatprep.subr.mxu0 0.0
        %2873 = vmatpush1.msra.mxu0 0.0
        %2874 = vmatprep.subr.mxu0 0.0
        %2875 = vmatpush1.msra.mxu0 0.0
        %2876 = vmatprep.subr.mxu0 0.0
        %2877 = vmatpush1.msra.mxu0 0.0
        %2878 = vmatprep.subr.mxu0 0.0
        %2879 = vmatpush1.msra.mxu0 0.0
        %2880 = vmatprep.subr.mxu0 0.0
        %2881 = vmatpush1.msra.mxu0 0.0
        %2882 = vmatprep.subr.mxu0 0.0
        %2883 = vmatpush1.msra.mxu0 0.0
        %2884 = vmatprep.subr.mxu0 0.0
        %2885 = vmatpush1.msra.mxu0 0.0
        %2886 = vmatprep.subr.mxu0 0.0
        %2887 = vmatpush1.msra.mxu0 0.0
        %2888 = vmatprep.subr.mxu0 0.0
        %2889 = vmatpush1.msra.mxu0 0.0
        %2890 = vmatprep.subr.mxu0 0.0
        %2891 = vmatpush1.msra.mxu0 0.0
        %2892 = vmatprep.subr.mxu0 0.0
        %2893 = vmatpush1.msra.mxu0 0.0
        %2894 = vmatprep.mubr.f32.mxu0 0.0
        %2895 = vmatmul.mubr.f32.gmra.mrb[0].mxu0 %v2751
        %v2896 = vpop.f32.mrb[0].mxu0
        %v2897 = vadd.f32 0.0, %v2896
        %v2898 = vpop.f32.mrb[0].mxu0
        %2899 = vdwg.mxu0
        %v2900 = vadd.f32 %v2732, %v2826
        %v2901 = vadd.f32 %v2733, %v2828
        %v2902 = vadd.f32 %v2734, %v2897
        %v2903 = vld [vmem:[#allocation2] sm:$0xff]
        %v2904 = vld [vmem:[#allocation2 + $0x8] sm:$0xf]
        %s2905 = scalar_lea.vmem %s4, 24
        %v2906 = vld [vmem:[%s2905] sm:$0xf]
        %v2909 = vcombine.high %v2903, %v2903
        %2910 = vrot.lane.b32.xlu0 %v2903, 92
        %v2911 = vpop.permute.xlu0 %2910
        %2912 = vrot.lane.b32.xlu0 %v2909, 92
        %v2913 = vpop.permute.xlu0 %2912
        %2914 = vrot.lane.b32.xlu0 %v2904, 92
        %v2915 = vpop.permute.xlu0 %2914
        %v2916 = vsel %vm1367, %v2911, %v2913
        %v2917 = vsel %vm1367, %v2913, %v2915
        %v2919 = vsel %vm376, %v2906, 0
        %v2921 = vsel %vm380, %v2916, 0
        %v2923 = vsel %vm380, %v2917, 0
        %v2925 = vsel %vm380, %v2915, 0
        %2927 = vmatprep.subr.mxu0 %v2923
        %2928 = vmatpush1.msra.mxu0 %v2921
        %2929 = vmatprep.subr.mxu0 0.0
        %2930 = vmatpush1.msra.mxu0 0.0
        %2931 = vmatprep.subr.mxu0 0.0
        %2932 = vmatpush1.msra.mxu0 0.0
        %2933 = vmatprep.subr.mxu0 0.0
        %2934 = vmatpush1.msra.mxu0 0.0
        %2935 = vmatprep.subr.mxu0 0.0
        %2936 = vmatpush1.msra.mxu0 0.0
        %2937 = vmatprep.subr.mxu0 0.0
        %2938 = vmatpush1.msra.mxu0 0.0
        %2939 = vmatprep.subr.mxu0 0.0
        %2940 = vmatpush1.msra.mxu0 0.0
        %2941 = vmatprep.subr.mxu0 0.0
        %2942 = vmatpush1.msra.mxu0 0.0
        %2943 = vmatprep.subr.mxu0 0.0
        %2944 = vmatpush1.msra.mxu0 0.0
        %2945 = vmatprep.subr.mxu0 0.0
        %2946 = vmatpush1.msra.mxu0 0.0
        %2947 = vmatprep.subr.mxu0 0.0
        %2948 = vmatpush1.msra.mxu0 0.0
        %2949 = vmatprep.subr.mxu0 0.0
        %2950 = vmatpush1.msra.mxu0 0.0
        %2951 = vmatprep.subr.mxu0 0.0
        %2952 = vmatpush1.msra.mxu0 0.0
        %2953 = vmatprep.subr.mxu0 0.0
        %2954 = vmatpush1.msra.mxu0 0.0
        %2955 = vmatprep.subr.mxu0 0.0
        %2956 = vmatpush1.msra.mxu0 0.0
        %2957 = vmatprep.subr.mxu0 0.0
        %2958 = vmatpush1.msra.mxu0 0.0
        %2959 = vmatprep.subr.mxu0 0.0
        %2960 = vmatpush1.msra.mxu0 0.0
        %2961 = vmatprep.subr.mxu0 0.0
        %2962 = vmatpush1.msra.mxu0 0.0
        %2963 = vmatprep.subr.mxu0 0.0
        %2964 = vmatpush1.msra.mxu0 0.0
        %2965 = vmatprep.subr.mxu0 0.0
        %2966 = vmatpush1.msra.mxu0 0.0
        %2967 = vmatprep.subr.mxu0 0.0
        %2968 = vmatpush1.msra.mxu0 0.0
        %2969 = vmatprep.subr.mxu0 0.0
        %2970 = vmatpush1.msra.mxu0 0.0
        %2971 = vmatprep.subr.mxu0 0.0
        %2972 = vmatpush1.msra.mxu0 0.0
        %2973 = vmatprep.subr.mxu0 0.0
        %2974 = vmatpush1.msra.mxu0 0.0
        %2975 = vmatprep.subr.mxu0 0.0
        %2976 = vmatpush1.msra.mxu0 0.0
        %2977 = vmatprep.subr.mxu0 0.0
        %2978 = vmatpush1.msra.mxu0 0.0
        %2979 = vmatprep.subr.mxu0 0.0
        %2980 = vmatpush1.msra.mxu0 0.0
        %2981 = vmatprep.subr.mxu0 0.0
        %2982 = vmatpush1.msra.mxu0 0.0
        %2983 = vmatprep.subr.mxu0 0.0
        %2984 = vmatpush1.msra.mxu0 0.0
        %2985 = vmatprep.subr.mxu0 0.0
        %2986 = vmatpush1.msra.mxu0 0.0
        %2987 = vmatprep.subr.mxu0 0.0
        %2988 = vmatpush1.msra.mxu0 0.0
        %2989 = vmatprep.subr.mxu0 0.0
        %2990 = vmatpush1.msra.mxu0 0.0
        %2991 = vmatprep.mubr.f32.mxu0 0.0
        %2992 = vmatmul.mubr.f32.gmra.mrb[0].mxu0 %v2919
        %v2993 = vpop.f32.mrb[0].mxu0
        %v2994 = vadd.f32 0.0, %v2993
        %v2995 = vpop.f32.mrb[0].mxu0
        %v2996 = vadd.f32 0.0, %v2995
        %2997 = vdwg.mxu0
        %2998 = vmatprep.subr.mxu0 0.0
        %2999 = vmatpush1.msra.mxu0 %v2925
        %3000 = vmatprep.subr.mxu0 0.0
        %3001 = vmatpush1.msra.mxu0 0.0
        %3002 = vmatprep.subr.mxu0 0.0
        %3003 = vmatpush1.msra.mxu0 0.0
        %3004 = vmatprep.subr.mxu0 0.0
        %3005 = vmatpush1.msra.mxu0 0.0
        %3006 = vmatprep.subr.mxu0 0.0
        %3007 = vmatpush1.msra.mxu0 0.0
        %3008 = vmatprep.subr.mxu0 0.0
        %3009 = vmatpush1.msra.mxu0 0.0
        %3010 = vmatprep.subr.mxu0 0.0
        %3011 = vmatpush1.msra.mxu0 0.0
        %3012 = vmatprep.subr.mxu0 0.0
        %3013 = vmatpush1.msra.mxu0 0.0
        %3014 = vmatprep.subr.mxu0 0.0
        %3015 = vmatpush1.msra.mxu0 0.0
        %3016 = vmatprep.subr.mxu0 0.0
        %3017 = vmatpush1.msra.mxu0 0.0
        %3018 = vmatprep.subr.mxu0 0.0
        %3019 = vmatpush1.msra.mxu0 0.0
        %3020 = vmatprep.subr.mxu0 0.0
        %3021 = vmatpush1.msra.mxu0 0.0
        %3022 = vmatprep.subr.mxu0 0.0
        %3023 = vmatpush1.msra.mxu0 0.0
        %3024 = vmatprep.subr.mxu0 0.0
        %3025 = vmatpush1.msra.mxu0 0.0
        %3026 = vmatprep.subr.mxu0 0.0
        %3027 = vmatpush1.msra.mxu0 0.0
        %3028 = vmatprep.subr.mxu0 0.0
        %3029 = vmatpush1.msra.mxu0 0.0
        %3030 = vmatprep.subr.mxu0 0.0
        %3031 = vmatpush1.msra.mxu0 0.0
        %3032 = vmatprep.subr.mxu0 0.0
        %3033 = vmatpush1.msra.mxu0 0.0
        %3034 = vmatprep.subr.mxu0 0.0
        %3035 = vmatpush1.msra.mxu0 0.0
        %3036 = vmatprep.subr.mxu0 0.0
        %3037 = vmatpush1.msra.mxu0 0.0
        %3038 = vmatprep.subr.mxu0 0.0
        %3039 = vmatpush1.msra.mxu0 0.0
        %3040 = vmatprep.subr.mxu0 0.0
        %3041 = vmatpush1.msra.mxu0 0.0
        %3042 = vmatprep.subr.mxu0 0.0
        %3043 = vmatpush1.msra.mxu0 0.0
        %3044 = vmatprep.subr.mxu0 0.0
        %3045 = vmatpush1.msra.mxu0 0.0
        %3046 = vmatprep.subr.mxu0 0.0
        %3047 = vmatpush1.msra.mxu0 0.0
        %3048 = vmatprep.subr.mxu0 0.0
        %3049 = vmatpush1.msra.mxu0 0.0
        %3050 = vmatprep.subr.mxu0 0.0
        %3051 = vmatpush1.msra.mxu0 0.0
        %3052 = vmatprep.subr.mxu0 0.0
        %3053 = vmatpush1.msra.mxu0 0.0
        %3054 = vmatprep.subr.mxu0 0.0
        %3055 = vmatpush1.msra.mxu0 0.0
        %3056 = vmatprep.subr.mxu0 0.0
        %3057 = vmatpush1.msra.mxu0 0.0
        %3058 = vmatprep.subr.mxu0 0.0
        %3059 = vmatpush1.msra.mxu0 0.0
        %3060 = vmatprep.subr.mxu0 0.0
        %3061 = vmatpush1.msra.mxu0 0.0
        %3062 = vmatprep.mubr.f32.mxu0 0.0
        %3063 = vmatmul.mubr.f32.gmra.mrb[0].mxu0 %v2919
        %v3064 = vpop.f32.mrb[0].mxu0
        %v3065 = vadd.f32 0.0, %v3064
        %v3066 = vpop.f32.mrb[0].mxu0
        %3067 = vdwg.mxu0
        %v3068 = vadd.f32 %v2900, %v2994
        %v3069 = vadd.f32 %v2901, %v2996
        %v3070 = vadd.f32 %v2902, %v3065
        %v3071 = vld [vmem:[#allocation2] sm:$0xff]
        %v3072 = vld [vmem:[#allocation2 + $0x8] sm:$0xf]
        %s3073 = scalar_lea.vmem %s4, 28
        %v3074 = vld [vmem:[%s3073] sm:$0xf]
        %v3077 = vcombine.high %v3071, %v3071
        %3078 = vrot.lane.b32.xlu0 %v3071, 91
        %v3079 = vpop.permute.xlu0 %3078
        %3080 = vrot.lane.b32.xlu0 %v3077, 91
        %v3081 = vpop.permute.xlu0 %3080
        %3082 = vrot.lane.b32.xlu0 %v3072, 91
        %v3083 = vpop.permute.xlu0 %3082
        %v3084 = vsel %vm1536, %v3079, %v3081
        %v3085 = vsel %vm1536, %v3081, %v3083
        %v3087 = vsel %vm376, %v3074, 0
        %v3089 = vsel %vm380, %v3084, 0
        %v3091 = vsel %vm380, %v3085, 0
        %v3093 = vsel %vm380, %v3083, 0
        %3095 = vmatprep.subr.mxu0 %v3091
        %3096 = vmatpush1.msra.mxu0 %v3089
        %3097 = vmatprep.subr.mxu0 0.0
        %3098 = vmatpush1.msra.mxu0 0.0
        %3099 = vmatprep.subr.mxu0 0.0
        %3100 = vmatpush1.msra.mxu0 0.0
        %3101 = vmatprep.subr.mxu0 0.0
        %3102 = vmatpush1.msra.mxu0 0.0
        %3103 = vmatprep.subr.mxu0 0.0
        %3104 = vmatpush1.msra.mxu0 0.0
        %3105 = vmatprep.subr.mxu0 0.0
        %3106 = vmatpush1.msra.mxu0 0.0
        %3107 = vmatprep.subr.mxu0 0.0
        %3108 = vmatpush1.msra.mxu0 0.0
        %3109 = vmatprep.subr.mxu0 0.0
        %3110 = vmatpush1.msra.mxu0 0.0
        %3111 = vmatprep.subr.mxu0 0.0
        %3112 = vmatpush1.msra.mxu0 0.0
        %3113 = vmatprep.subr.mxu0 0.0
        %3114 = vmatpush1.msra.mxu0 0.0
        %3115 = vmatprep.subr.mxu0 0.0
        %3116 = vmatpush1.msra.mxu0 0.0
        %3117 = vmatprep.subr.mxu0 0.0
        %3118 = vmatpush1.msra.mxu0 0.0
        %3119 = vmatprep.subr.mxu0 0.0
        %3120 = vmatpush1.msra.mxu0 0.0
        %3121 = vmatprep.subr.mxu0 0.0
        %3122 = vmatpush1.msra.mxu0 0.0
        %3123 = vmatprep.subr.mxu0 0.0
        %3124 = vmatpush1.msra.mxu0 0.0
        %3125 = vmatprep.subr.mxu0 0.0
        %3126 = vmatpush1.msra.mxu0 0.0
        %3127 = vmatprep.subr.mxu0 0.0
        %3128 = vmatpush1.msra.mxu0 0.0
        %3129 = vmatprep.subr.mxu0 0.0
        %3130 = vmatpush1.msra.mxu0 0.0
        %3131 = vmatprep.subr.mxu0 0.0
        %3132 = vmatpush1.msra.mxu0 0.0
        %3133 = vmatprep.subr.mxu0 0.0
        %3134 = vmatpush1.msra.mxu0 0.0
        %3135 = vmatprep.subr.mxu0 0.0
        %3136 = vmatpush1.msra.mxu0 0.0
        %3137 = vmatprep.subr.mxu0 0.0
        %3138 = vmatpush1.msra.mxu0 0.0
        %3139 = vmatprep.subr.mxu0 0.0
        %3140 = vmatpush1.msra.mxu0 0.0
        %3141 = vmatprep.subr.mxu0 0.0
        %3142 = vmatpush1.msra.mxu0 0.0
        %3143 = vmatprep.subr.mxu0 0.0
        %3144 = vmatpush1.msra.mxu0 0.0
        %3145 = vmatprep.subr.mxu0 0.0
        %3146 = vmatpush1.msra.mxu0 0.0
        %3147 = vmatprep.subr.mxu0 0.0
        %3148 = vmatpush1.msra.mxu0 0.0
        %3149 = vmatprep.subr.mxu0 0.0
        %3150 = vmatpush1.msra.mxu0 0.0
        %3151 = vmatprep.subr.mxu0 0.0
        %3152 = vmatpush1.msra.mxu0 0.0
        %3153 = vmatprep.subr.mxu0 0.0
        %3154 = vmatpush1.msra.mxu0 0.0
        %3155 = vmatprep.subr.mxu0 0.0
        %3156 = vmatpush1.msra.mxu0 0.0
        %3157 = vmatprep.subr.mxu0 0.0
        %3158 = vmatpush1.msra.mxu0 0.0
        %3159 = vmatprep.mubr.f32.mxu0 0.0
        %3160 = vmatmul.mubr.f32.gmra.mrb[0].mxu0 %v3087
        %v3161 = vpop.f32.mrb[0].mxu0
        %v3162 = vadd.f32 0.0, %v3161
        %v3163 = vpop.f32.mrb[0].mxu0
        %v3164 = vadd.f32 0.0, %v3163
        %3165 = vdwg.mxu0
        %3166 = vmatprep.subr.mxu0 0.0
        %3167 = vmatpush1.msra.mxu0 %v3093
        %3168 = vmatprep.subr.mxu0 0.0
        %3169 = vmatpush1.msra.mxu0 0.0
        %3170 = vmatprep.subr.mxu0 0.0
        %3171 = vmatpush1.msra.mxu0 0.0
        %3172 = vmatprep.subr.mxu0 0.0
        %3173 = vmatpush1.msra.mxu0 0.0
        %3174 = vmatprep.subr.mxu0 0.0
        %3175 = vmatpush1.msra.mxu0 0.0
        %3176 = vmatprep.subr.mxu0 0.0
        %3177 = vmatpush1.msra.mxu0 0.0
        %3178 = vmatprep.subr.mxu0 0.0
        %3179 = vmatpush1.msra.mxu0 0.0
        %3180 = vmatprep.subr.mxu0 0.0
        %3181 = vmatpush1.msra.mxu0 0.0
        %3182 = vmatprep.subr.mxu0 0.0
        %3183 = vmatpush1.msra.mxu0 0.0
        %3184 = vmatprep.subr.mxu0 0.0
        %3185 = vmatpush1.msra.mxu0 0.0
        %3186 = vmatprep.subr.mxu0 0.0
        %3187 = vmatpush1.msra.mxu0 0.0
        %3188 = vmatprep.subr.mxu0 0.0
        %3189 = vmatpush1.msra.mxu0 0.0
        %3190 = vmatprep.subr.mxu0 0.0
        %3191 = vmatpush1.msra.mxu0 0.0
        %3192 = vmatprep.subr.mxu0 0.0
        %3193 = vmatpush1.msra.mxu0 0.0
        %3194 = vmatprep.subr.mxu0 0.0
        %3195 = vmatpush1.msra.mxu0 0.0
        %3196 = vmatprep.subr.mxu0 0.0
        %3197 = vmatpush1.msra.mxu0 0.0
        %3198 = vmatprep.subr.mxu0 0.0
        %3199 = vmatpush1.msra.mxu0 0.0
        %3200 = vmatprep.subr.mxu0 0.0
        %3201 = vmatpush1.msra.mxu0 0.0
        %3202 = vmatprep.subr.mxu0 0.0
        %3203 = vmatpush1.msra.mxu0 0.0
        %3204 = vmatprep.subr.mxu0 0.0
        %3205 = vmatpush1.msra.mxu0 0.0
        %3206 = vmatprep.subr.mxu0 0.0
        %3207 = vmatpush1.msra.mxu0 0.0
        %3208 = vmatprep.subr.mxu0 0.0
        %3209 = vmatpush1.msra.mxu0 0.0
        %3210 = vmatprep.subr.mxu0 0.0
        %3211 = vmatpush1.msra.mxu0 0.0
        %3212 = vmatprep.subr.mxu0 0.0
        %3213 = vmatpush1.msra.mxu0 0.0
        %3214 = vmatprep.subr.mxu0 0.0
        %3215 = vmatpush1.msra.mxu0 0.0
        %3216 = vmatprep.subr.mxu0 0.0
        %3217 = vmatpush1.msra.mxu0 0.0
        %3218 = vmatprep.subr.mxu0 0.0
        %3219 = vmatpush1.msra.mxu0 0.0
        %3220 = vmatprep.subr.mxu0 0.0
        %3221 = vmatpush1.msra.mxu0 0.0
        %3222 = vmatprep.subr.mxu0 0.0
        %3223 = vmatpush1.msra.mxu0 0.0
        %3224 = vmatprep.subr.mxu0 0.0
        %3225 = vmatpush1.msra.mxu0 0.0
        %3226 = vmatprep.subr.mxu0 0.0
        %3227 = vmatpush1.msra.mxu0 0.0
        %3228 = vmatprep.subr.mxu0 0.0
        %3229 = vmatpush1.msra.mxu0 0.0
        %3230 = vmatprep.mubr.f32.mxu0 0.0
        %3231 = vmatmul.mubr.f32.gmra.mrb[0].mxu0 %v3087
        %v3232 = vpop.f32.mrb[0].mxu0
        %v3233 = vadd.f32 0.0, %v3232
        %v3234 = vpop.f32.mrb[0].mxu0
        %3235 = vdwg.mxu0
        %v3236 = vadd.f32 %v3068, %v3162
        %v3237 = vadd.f32 %v3069, %v3164
        %v3238 = vadd.f32 %v3070, %v3233
        %v3239 = vld [vmem:[#allocation2] sm:$0xff]
        %v3240 = vld [vmem:[#allocation2 + $0x8] sm:$0xf]
        %s3241 = scalar_lea.vmem %s4, 32
        %v3242 = vld [vmem:[%s3241] sm:$0xf]
        %v3245 = vcombine.high %v3239, %v3239
        %3246 = vrot.lane.b32.xlu0 %v3239, 90
        %v3247 = vpop.permute.xlu0 %3246
        %3248 = vrot.lane.b32.xlu0 %v3245, 90
        %v3249 = vpop.permute.xlu0 %3248
        %3250 = vrot.lane.b32.xlu0 %v3240, 90
        %v3251 = vpop.permute.xlu0 %3250
        %v3252 = vsel %vm1705, %v3247, %v3249
        %v3253 = vsel %vm1705, %v3249, %v3251
        %v3255 = vsel %vm376, %v3242, 0
        %v3257 = vsel %vm380, %v3252, 0
        %v3259 = vsel %vm380, %v3253, 0
        %v3261 = vsel %vm380, %v3251, 0
        %3263 = vmatprep.subr.mxu0 %v3259
        %3264 = vmatpush1.msra.mxu0 %v3257
        %3265 = vmatprep.subr.mxu0 0.0
        %3266 = vmatpush1.msra.mxu0 0.0
        %3267 = vmatprep.subr.mxu0 0.0
        %3268 = vmatpush1.msra.mxu0 0.0
        %3269 = vmatprep.subr.mxu0 0.0
        %3270 = vmatpush1.msra.mxu0 0.0
        %3271 = vmatprep.subr.mxu0 0.0
        %3272 = vmatpush1.msra.mxu0 0.0
        %3273 = vmatprep.subr.mxu0 0.0
        %3274 = vmatpush1.msra.mxu0 0.0
        %3275 = vmatprep.subr.mxu0 0.0
        %3276 = vmatpush1.msra.mxu0 0.0
        %3277 = vmatprep.subr.mxu0 0.0
        %3278 = vmatpush1.msra.mxu0 0.0
        %3279 = vmatprep.subr.mxu0 0.0
        %3280 = vmatpush1.msra.mxu0 0.0
        %3281 = vmatprep.subr.mxu0 0.0
        %3282 = vmatpush1.msra.mxu0 0.0
        %3283 = vmatprep.subr.mxu0 0.0
        %3284 = vmatpush1.msra.mxu0 0.0
        %3285 = vmatprep.subr.mxu0 0.0
        %3286 = vmatpush1.msra.mxu0 0.0
        %3287 = vmatprep.subr.mxu0 0.0
        %3288 = vmatpush1.msra.mxu0 0.0
        %3289 = vmatprep.subr.mxu0 0.0
        %3290 = vmatpush1.msra.mxu0 0.0
        %3291 = vmatprep.subr.mxu0 0.0
        %3292 = vmatpush1.msra.mxu0 0.0
        %3293 = vmatprep.subr.mxu0 0.0
        %3294 = vmatpush1.msra.mxu0 0.0
        %3295 = vmatprep.subr.mxu0 0.0
        %3296 = vmatpush1.msra.mxu0 0.0
        %3297 = vmatprep.subr.mxu0 0.0
        %3298 = vmatpush1.msra.mxu0 0.0
        %3299 = vmatprep.subr.mxu0 0.0
        %3300 = vmatpush1.msra.mxu0 0.0
        %3301 = vmatprep.subr.mxu0 0.0
        %3302 = vmatpush1.msra.mxu0 0.0
        %3303 = vmatprep.subr.mxu0 0.0
        %3304 = vmatpush1.msra.mxu0 0.0
        %3305 = vmatprep.subr.mxu0 0.0
        %3306 = vmatpush1.msra.mxu0 0.0
        %3307 = vmatprep.subr.mxu0 0.0
        %3308 = vmatpush1.msra.mxu0 0.0
        %3309 = vmatprep.subr.mxu0 0.0
        %3310 = vmatpush1.msra.mxu0 0.0
        %3311 = vmatprep.subr.mxu0 0.0
        %3312 = vmatpush1.msra.mxu0 0.0
        %3313 = vmatprep.subr.mxu0 0.0
        %3314 = vmatpush1.msra.mxu0 0.0
        %3315 = vmatprep.subr.mxu0 0.0
        %3316 = vmatpush1.msra.mxu0 0.0
        %3317 = vmatprep.subr.mxu0 0.0
        %3318 = vmatpush1.msra.mxu0 0.0
        %3319 = vmatprep.subr.mxu0 0.0
        %3320 = vmatpush1.msra.mxu0 0.0
        %3321 = vmatprep.subr.mxu0 0.0
        %3322 = vmatpush1.msra.mxu0 0.0
        %3323 = vmatprep.subr.mxu0 0.0
        %3324 = vmatpush1.msra.mxu0 0.0
        %3325 = vmatprep.subr.mxu0 0.0
        %3326 = vmatpush1.msra.mxu0 0.0
        %3327 = vmatprep.mubr.f32.mxu0 0.0
        %3328 = vmatmul.mubr.f32.gmra.mrb[0].mxu0 %v3255
        %v3329 = vpop.f32.mrb[0].mxu0
        %v3330 = vadd.f32 0.0, %v3329
        %v3331 = vpop.f32.mrb[0].mxu0
        %v3332 = vadd.f32 0.0, %v3331
        %3333 = vdwg.mxu0
        %3334 = vmatprep.subr.mxu0 0.0
        %3335 = vmatpush1.msra.mxu0 %v3261
        %3336 = vmatprep.subr.mxu0 0.0
        %3337 = vmatpush1.msra.mxu0 0.0
        %3338 = vmatprep.subr.mxu0 0.0
        %3339 = vmatpush1.msra.mxu0 0.0
        %3340 = vmatprep.subr.mxu0 0.0
        %3341 = vmatpush1.msra.mxu0 0.0
        %3342 = vmatprep.subr.mxu0 0.0
        %3343 = vmatpush1.msra.mxu0 0.0
        %3344 = vmatprep.subr.mxu0 0.0
        %3345 = vmatpush1.msra.mxu0 0.0
        %3346 = vmatprep.subr.mxu0 0.0
        %3347 = vmatpush1.msra.mxu0 0.0
        %3348 = vmatprep.subr.mxu0 0.0
        %3349 = vmatpush1.msra.mxu0 0.0
        %3350 = vmatprep.subr.mxu0 0.0
        %3351 = vmatpush1.msra.mxu0 0.0
        %3352 = vmatprep.subr.mxu0 0.0
        %3353 = vmatpush1.msra.mxu0 0.0
        %3354 = vmatprep.subr.mxu0 0.0
        %3355 = vmatpush1.msra.mxu0 0.0
        %3356 = vmatprep.subr.mxu0 0.0
        %3357 = vmatpush1.msra.mxu0 0.0
        %3358 = vmatprep.subr.mxu0 0.0
        %3359 = vmatpush1.msra.mxu0 0.0
        %3360 = vmatprep.subr.mxu0 0.0
        %3361 = vmatpush1.msra.mxu0 0.0
        %3362 = vmatprep.subr.mxu0 0.0
        %3363 = vmatpush1.msra.mxu0 0.0
        %3364 = vmatprep.subr.mxu0 0.0
        %3365 = vmatpush1.msra.mxu0 0.0
        %3366 = vmatprep.subr.mxu0 0.0
        %3367 = vmatpush1.msra.mxu0 0.0
        %3368 = vmatprep.subr.mxu0 0.0
        %3369 = vmatpush1.msra.mxu0 0.0
        %3370 = vmatprep.subr.mxu0 0.0
        %3371 = vmatpush1.msra.mxu0 0.0
        %3372 = vmatprep.subr.mxu0 0.0
        %3373 = vmatpush1.msra.mxu0 0.0
        %3374 = vmatprep.subr.mxu0 0.0
        %3375 = vmatpush1.msra.mxu0 0.0
        %3376 = vmatprep.subr.mxu0 0.0
        %3377 = vmatpush1.msra.mxu0 0.0
        %3378 = vmatprep.subr.mxu0 0.0
        %3379 = vmatpush1.msra.mxu0 0.0
        %3380 = vmatprep.subr.mxu0 0.0
        %3381 = vmatpush1.msra.mxu0 0.0
        %3382 = vmatprep.subr.mxu0 0.0
        %3383 = vmatpush1.msra.mxu0 0.0
        %3384 = vmatprep.subr.mxu0 0.0
        %3385 = vmatpush1.msra.mxu0 0.0
        %3386 = vmatprep.subr.mxu0 0.0
        %3387 = vmatpush1.msra.mxu0 0.0
        %3388 = vmatprep.subr.mxu0 0.0
        %3389 = vmatpush1.msra.mxu0 0.0
        %3390 = vmatprep.subr.mxu0 0.0
        %3391 = vmatpush1.msra.mxu0 0.0
        %3392 = vmatprep.subr.mxu0 0.0
        %3393 = vmatpush1.msra.mxu0 0.0
        %3394 = vmatprep.subr.mxu0 0.0
        %3395 = vmatpush1.msra.mxu0 0.0
        %3396 = vmatprep.subr.mxu0 0.0
        %3397 = vmatpush1.msra.mxu0 0.0
        %3398 = vmatprep.mubr.f32.mxu0 0.0
        %3399 = vmatmul.mubr.f32.gmra.mrb[0].mxu0 %v3255
        %v3400 = vpop.f32.mrb[0].mxu0
        %v3401 = vadd.f32 0.0, %v3400
        %v3402 = vpop.f32.mrb[0].mxu0
        %3403 = vdwg.mxu0
        %v3404 = vadd.f32 %v3236, %v3330
        %v3405 = vadd.f32 %v3237, %v3332
        %v3406 = vadd.f32 %v3238, %v3401
        %v3407 = vld [vmem:[%s5] sm:$0xf]
        %3409 = vset.pattern.permute.xlu0 0
        %3410 = vperm.xlu0 %3409, %v3407
        %v3411 = vpop.permute.xlu0 %3410
        %v3413 = vadd.f32 %v3404, %v3411
        %v3414 = vadd.f32 %v3405, %v3411
        %v3415 = vadd.f32 %v3406, %v3411
        %v3416 = vmul.f32 %v3413, %v1877
        %v3417 = vmul.f32 %v3414, %v1881
        %v3418 = vmul.f32 %v3415, %v1885
        %v3419 = vsel %vm380, %v3416, 0.0
        %v3420 = vsel %vm380, %v3417, 0.0
        %v3421 = vadd.f32 %v3419, %v3420
        %vm3422 = vcmask 551936
        %v3423 = vsel %vm3422, %v3418, 0.0
        %v3424 = vadd.f32 %v3421, %v3423
        %3425 = vadd.xlane.f32.xlu0 %v3424
        %v3426 = vpop.xlane.xlu0 %3425
        %v3427 = vmul.f32 %v3426, 0.00390625
        %v3428 = vld [vmem:[%s6] sm:$0x3]
        %v3429 = vld [vmem:[%s7] sm:$0x3]
        %3431 = vset.pattern.permute.xlu0 0
        %3432 = vperm.xlu0 %3431, %v3429
        %v3433 = vpop.permute.xlu0 %3432
        %v3437 = vsel %vm376, %v3428, 0
        %v3439 = vsel %vm380, %v3427, 0
        %3441 = vmatprep.subr.mxu0 %v3439
        %3442 = vmatpush1.msra.mxu0 %v3439
        %3443 = vmatprep.subr.mxu0 0.0
        %3444 = vmatpush1.msra.mxu0 0.0
        %3445 = vmatprep.subr.mxu0 0.0
        %3446 = vmatpush1.msra.mxu0 0.0
        %3447 = vmatprep.subr.mxu0 0.0
        %3448 = vmatpush1.msra.mxu0 0.0
        %3449 = vmatprep.subr.mxu0 0.0
        %3450 = vmatpush1.msra.mxu0 0.0
        %3451 = vmatprep.subr.mxu0 0.0
        %3452 = vmatpush1.msra.mxu0 0.0
        %3453 = vmatprep.subr.mxu0 0.0
        %3454 = vmatpush1.msra.mxu0 0.0
        %3455 = vmatprep.subr.mxu0 0.0
        %3456 = vmatpush1.msra.mxu0 0.0
        %3457 = vmatprep.subr.mxu0 0.0
        %3458 = vmatpush1.msra.mxu0 0.0
        %3459 = vmatprep.subr.mxu0 0.0
        %3460 = vmatpush1.msra.mxu0 0.0
        %3461 = vmatprep.subr.mxu0 0.0
        %3462 = vmatpush1.msra.mxu0 0.0
        %3463 = vmatprep.subr.mxu0 0.0
        %3464 = vmatpush1.msra.mxu0 0.0
        %3465 = vmatprep.subr.mxu0 0.0
        %3466 = vmatpush1.msra.mxu0 0.0
        %3467 = vmatprep.subr.mxu0 0.0
        %3468 = vmatpush1.msra.mxu0 0.0
        %3469 = vmatprep.subr.mxu0 0.0
        %3470 = vmatpush1.msra.mxu0 0.0
        %3471 = vmatprep.subr.mxu0 0.0
        %3472 = vmatpush1.msra.mxu0 0.0
        %3473 = vmatprep.subr.mxu0 0.0
        %3474 = vmatpush1.msra.mxu0 0.0
        %3475 = vmatprep.subr.mxu0 0.0
        %3476 = vmatpush1.msra.mxu0 0.0
        %3477 = vmatprep.subr.mxu0 0.0
        %3478 = vmatpush1.msra.mxu0 0.0
        %3479 = vmatprep.subr.mxu0 0.0
        %3480 = vmatpush1.msra.mxu0 0.0
        %3481 = vmatprep.subr.mxu0 0.0
        %3482 = vmatpush1.msra.mxu0 0.0
        %3483 = vmatprep.subr.mxu0 0.0
        %3484 = vmatpush1.msra.mxu0 0.0
        %3485 = vmatprep.subr.mxu0 0.0
        %3486 = vmatpush1.msra.mxu0 0.0
        %3487 = vmatprep.subr.mxu0 0.0
        %3488 = vmatpush1.msra.mxu0 0.0
        %3489 = vmatprep.subr.mxu0 0.0
        %3490 = vmatpush1.msra.mxu0 0.0
        %3491 = vmatprep.subr.mxu0 0.0
        %3492 = vmatpush1.msra.mxu0 0.0
        %3493 = vmatprep.subr.mxu0 0.0
        %3494 = vmatpush1.msra.mxu0 0.0
        %3495 = vmatprep.subr.mxu0 0.0
        %3496 = vmatpush1.msra.mxu0 0.0
        %3497 = vmatprep.subr.mxu0 0.0
        %3498 = vmatpush1.msra.mxu0 0.0
        %3499 = vmatprep.subr.mxu0 0.0
        %3500 = vmatpush1.msra.mxu0 0.0
        %3501 = vmatprep.subr.mxu0 0.0
        %3502 = vmatpush1.msra.mxu0 0.0
        %3503 = vmatprep.subr.mxu0 0.0
        %3504 = vmatpush1.msra.mxu0 0.0
        %3505 = vmatprep.mubr.f32.mxu0 0.0
        %3506 = vmatmul.mubr.f32.gmra.mrb[0].mxu0 %v3437
        %v3507 = vpop.f32.mrb[0].mxu0
        %v3508 = vadd.f32 %v3433, %v3507
        %v3509 = vpop.f32.mrb[0].mxu0
        %v3510 = vadd.f32 %v3433, %v3509
        %3511 = vdwg.mxu0
        %3512 = vmatprep.subr.mxu0 0.0
        %3513 = vmatpush1.msra.mxu0 %v3439
        %3514 = vmatprep.subr.mxu0 0.0
        %3515 = vmatpush1.msra.mxu0 0.0
        %3516 = vmatprep.subr.mxu0 0.0
        %3517 = vmatpush1.msra.mxu0 0.0
        %3518 = vmatprep.subr.mxu0 0.0
        %3519 = vmatpush1.msra.mxu0 0.0
        %3520 = vmatprep.subr.mxu0 0.0
        %3521 = vmatpush1.msra.mxu0 0.0
        %3522 = vmatprep.subr.mxu0 0.0
        %3523 = vmatpush1.msra.mxu0 0.0
        %3524 = vmatprep.subr.mxu0 0.0
        %3525 = vmatpush1.msra.mxu0 0.0
        %3526 = vmatprep.subr.mxu0 0.0
        %3527 = vmatpush1.msra.mxu0 0.0
        %3528 = vmatprep.subr.mxu0 0.0
        %3529 = vmatpush1.msra.mxu0 0.0
        %3530 = vmatprep.subr.mxu0 0.0
        %3531 = vmatpush1.msra.mxu0 0.0
        %3532 = vmatprep.subr.mxu0 0.0
        %3533 = vmatpush1.msra.mxu0 0.0
        %3534 = vmatprep.subr.mxu0 0.0
        %3535 = vmatpush1.msra.mxu0 0.0
        %3536 = vmatprep.subr.mxu0 0.0
        %3537 = vmatpush1.msra.mxu0 0.0
        %3538 = vmatprep.subr.mxu0 0.0
        %3539 = vmatpush1.msra.mxu0 0.0
        %3540 = vmatprep.subr.mxu0 0.0
        %3541 = vmatpush1.msra.mxu0 0.0
        %3542 = vmatprep.subr.mxu0 0.0
        %3543 = vmatpush1.msra.mxu0 0.0
        %3544 = vmatprep.subr.mxu0 0.0
        %3545 = vmatpush1.msra.mxu0 0.0
        %3546 = vmatprep.subr.mxu0 0.0
        %3547 = vmatpush1.msra.mxu0 0.0
        %3548 = vmatprep.subr.mxu0 0.0
        %3549 = vmatpush1.msra.mxu0 0.0
        %3550 = vmatprep.subr.mxu0 0.0
        %3551 = vmatpush1.msra.mxu0 0.0
        %3552 = vmatprep.subr.mxu0 0.0
        %3553 = vmatpush1.msra.mxu0 0.0
        %3554 = vmatprep.subr.mxu0 0.0
        %3555 = vmatpush1.msra.mxu0 0.0
        %3556 = vmatprep.subr.mxu0 0.0
        %3557 = vmatpush1.msra.mxu0 0.0
        %3558 = vmatprep.subr.mxu0 0.0
        %3559 = vmatpush1.msra.mxu0 0.0
        %3560 = vmatprep.subr.mxu0 0.0
        %3561 = vmatpush1.msra.mxu0 0.0
        %3562 = vmatprep.subr.mxu0 0.0
        %3563 = vmatpush1.msra.mxu0 0.0
        %3564 = vmatprep.subr.mxu0 0.0
        %3565 = vmatpush1.msra.mxu0 0.0
        %3566 = vmatprep.subr.mxu0 0.0
        %3567 = vmatpush1.msra.mxu0 0.0
        %3568 = vmatprep.subr.mxu0 0.0
        %3569 = vmatpush1.msra.mxu0 0.0
        %3570 = vmatprep.subr.mxu0 0.0
        %3571 = vmatpush1.msra.mxu0 0.0
        %3572 = vmatprep.subr.mxu0 0.0
        %3573 = vmatpush1.msra.mxu0 0.0
        %3574 = vmatprep.subr.mxu0 0.0
        %3575 = vmatpush1.msra.mxu0 0.0
        %3576 = vmatprep.mubr.f32.mxu0 0.0
        %3577 = vmatmul.mubr.f32.gmra.mrb[0].mxu0 %v3437
        %v3578 = vpop.f32.mrb[0].mxu0
        %v3579 = vadd.f32 %v3433, %v3578
        %v3580 = vpop.f32.mrb[0].mxu0
        %3581 = vdwg.mxu0
        %v3582 = vmax.f32 %v3508, 0.0
        %v3583 = vmax.f32 %v3510, 0.0
        %v3584 = vmax.f32 %v3579, 0.0
        %v3585 = vld [vmem:[%s8] sm:$0xf]
        %v3586 = vld [vmem:[%s9] sm:$0xf]
        %3588 = vset.pattern.permute.xlu0 0
        %3589 = vperm.xlu0 %3588, %v3586
        %v3590 = vpop.permute.xlu0 %3589
        %vm3592 = vcmask 15360
        %v3594 = vsel %vm3592, %v3585, 0
        %vm3596 = vcmask 1041408
        %v3598 = vsel %vm3596, %v3582, 0
        %v3601 = vsel %vm3596, %v3583, 0
        %v3604 = vsel %vm3596, %v3584, 0
        %3606 = vmatprep.subr.mxu0 %v3601
        %3607 = vmatpush1.msra.mxu0 %v3598
        %3608 = vmatprep.subr.mxu0 0.0
        %3609 = vmatpush1.msra.mxu0 0.0
        %3610 = vmatprep.subr.mxu0 0.0
        %3611 = vmatpush1.msra.mxu0 0.0
        %3612 = vmatprep.subr.mxu0 0.0
        %3613 = vmatpush1.msra.mxu0 0.0
        %3614 = vmatprep.subr.mxu0 0.0
        %3615 = vmatpush1.msra.mxu0 0.0
        %3616 = vmatprep.subr.mxu0 0.0
        %3617 = vmatpush1.msra.mxu0 0.0
        %3618 = vmatprep.subr.mxu0 0.0
        %3619 = vmatpush1.msra.mxu0 0.0
        %3620 = vmatprep.subr.mxu0 0.0
        %3621 = vmatpush1.msra.mxu0 0.0
        %3622 = vmatprep.subr.mxu0 0.0
        %3623 = vmatpush1.msra.mxu0 0.0
        %3624 = vmatprep.subr.mxu0 0.0
        %3625 = vmatpush1.msra.mxu0 0.0
        %3626 = vmatprep.subr.mxu0 0.0
        %3627 = vmatpush1.msra.mxu0 0.0
        %3628 = vmatprep.subr.mxu0 0.0
        %3629 = vmatpush1.msra.mxu0 0.0
        %3630 = vmatprep.subr.mxu0 0.0
        %3631 = vmatpush1.msra.mxu0 0.0
        %3632 = vmatprep.subr.mxu0 0.0
        %3633 = vmatpush1.msra.mxu0 0.0
        %3634 = vmatprep.subr.mxu0 0.0
        %3635 = vmatpush1.msra.mxu0 0.0
        %3636 = vmatprep.subr.mxu0 0.0
        %3637 = vmatpush1.msra.mxu0 0.0
        %3638 = vmatprep.subr.mxu0 0.0
        %3639 = vmatpush1.msra.mxu0 0.0
        %3640 = vmatprep.subr.mxu0 0.0
        %3641 = vmatpush1.msra.mxu0 0.0
        %3642 = vmatprep.subr.mxu0 0.0
        %3643 = vmatpush1.msra.mxu0 0.0
        %3644 = vmatprep.subr.mxu0 0.0
        %3645 = vmatpush1.msra.mxu0 0.0
        %3646 = vmatprep.subr.mxu0 0.0
        %3647 = vmatpush1.msra.mxu0 0.0
        %3648 = vmatprep.subr.mxu0 0.0
        %3649 = vmatpush1.msra.mxu0 0.0
        %3650 = vmatprep.subr.mxu0 0.0
        %3651 = vmatpush1.msra.mxu0 0.0
        %3652 = vmatprep.subr.mxu0 0.0
        %3653 = vmatpush1.msra.mxu0 0.0
        %3654 = vmatprep.subr.mxu0 0.0
        %3655 = vmatpush1.msra.mxu0 0.0
        %3656 = vmatprep.subr.mxu0 0.0
        %3657 = vmatpush1.msra.mxu0 0.0
        %3658 = vmatprep.subr.mxu0 0.0
        %3659 = vmatpush1.msra.mxu0 0.0
        %3660 = vmatprep.subr.mxu0 0.0
        %3661 = vmatpush1.msra.mxu0 0.0
        %3662 = vmatprep.subr.mxu0 0.0
        %3663 = vmatpush1.msra.mxu0 0.0
        %3664 = vmatprep.subr.mxu0 0.0
        %3665 = vmatpush1.msra.mxu0 0.0
        %3666 = vmatprep.subr.mxu0 0.0
        %3667 = vmatpush1.msra.mxu0 0.0
        %3668 = vmatprep.subr.mxu0 0.0
        %3669 = vmatpush1.msra.mxu0 0.0
        %3670 = vmatprep.mubr.f32.mxu0 0.0
        %3671 = vmatmul.mubr.f32.gmra.mrb[0].mxu0 %v3594
        %v3672 = vpop.f32.mrb[0].mxu0
        %v3673 = vadd.f32 %v3590, %v3672
        %v3674 = vpop.f32.mrb[0].mxu0
        %v3675 = vadd.f32 %v3590, %v3674
        %3676 = vdwg.mxu0
        %3677 = vmatprep.subr.mxu0 0.0
        %3678 = vmatpush1.msra.mxu0 %v3604
        %3679 = vmatprep.subr.mxu0 0.0
        %3680 = vmatpush1.msra.mxu0 0.0
        %3681 = vmatprep.subr.mxu0 0.0
        %3682 = vmatpush1.msra.mxu0 0.0
        %3683 = vmatprep.subr.mxu0 0.0
        %3684 = vmatpush1.msra.mxu0 0.0
        %3685 = vmatprep.subr.mxu0 0.0
        %3686 = vmatpush1.msra.mxu0 0.0
        %3687 = vmatprep.subr.mxu0 0.0
        %3688 = vmatpush1.msra.mxu0 0.0
        %3689 = vmatprep.subr.mxu0 0.0
        %3690 = vmatpush1.msra.mxu0 0.0
        %3691 = vmatprep.subr.mxu0 0.0
        %3692 = vmatpush1.msra.mxu0 0.0
        %3693 = vmatprep.subr.mxu0 0.0
        %3694 = vmatpush1.msra.mxu0 0.0
        %3695 = vmatprep.subr.mxu0 0.0
        %3696 = vmatpush1.msra.mxu0 0.0
        %3697 = vmatprep.subr.mxu0 0.0
        %3698 = vmatpush1.msra.mxu0 0.0
        %3699 = vmatprep.subr.mxu0 0.0
        %3700 = vmatpush1.msra.mxu0 0.0
        %3701 = vmatprep.subr.mxu0 0.0
        %3702 = vmatpush1.msra.mxu0 0.0
        %3703 = vmatprep.subr.mxu0 0.0
        %3704 = vmatpush1.msra.mxu0 0.0
        %3705 = vmatprep.subr.mxu0 0.0
        %3706 = vmatpush1.msra.mxu0 0.0
        %3707 = vmatprep.subr.mxu0 0.0
        %3708 = vmatpush1.msra.mxu0 0.0
        %3709 = vmatprep.subr.mxu0 0.0
        %3710 = vmatpush1.msra.mxu0 0.0
        %3711 = vmatprep.subr.mxu0 0.0
        %3712 = vmatpush1.msra.mxu0 0.0
        %3713 = vmatprep.subr.mxu0 0.0
        %3714 = vmatpush1.msra.mxu0 0.0
        %3715 = vmatprep.subr.mxu0 0.0
        %3716 = vmatpush1.msra.mxu0 0.0
        %3717 = vmatprep.subr.mxu0 0.0
        %3718 = vmatpush1.msra.mxu0 0.0
        %3719 = vmatprep.subr.mxu0 0.0
        %3720 = vmatpush1.msra.mxu0 0.0
        %3721 = vmatprep.subr.mxu0 0.0
        %3722 = vmatpush1.msra.mxu0 0.0
        %3723 = vmatprep.subr.mxu0 0.0
        %3724 = vmatpush1.msra.mxu0 0.0
        %3725 = vmatprep.subr.mxu0 0.0
        %3726 = vmatpush1.msra.mxu0 0.0
        %3727 = vmatprep.subr.mxu0 0.0
        %3728 = vmatpush1.msra.mxu0 0.0
        %3729 = vmatprep.subr.mxu0 0.0
        %3730 = vmatpush1.msra.mxu0 0.0
        %3731 = vmatprep.subr.mxu0 0.0
        %3732 = vmatpush1.msra.mxu0 0.0
        %3733 = vmatprep.subr.mxu0 0.0
        %3734 = vmatpush1.msra.mxu0 0.0
        %3735 = vmatprep.subr.mxu0 0.0
        %3736 = vmatpush1.msra.mxu0 0.0
        %3737 = vmatprep.subr.mxu0 0.0
        %3738 = vmatpush1.msra.mxu0 0.0
        %3739 = vmatprep.subr.mxu0 0.0
        %3740 = vmatpush1.msra.mxu0 0.0
        %3741 = vmatprep.mubr.f32.mxu0 0.0
        %3742 = vmatmul.mubr.f32.gmra.mrb[0].mxu0 %v3594
        %v3743 = vpop.f32.mrb[0].mxu0
        %v3744 = vadd.f32 %v3590, %v3743
        %v3745 = vpop.f32.mrb[0].mxu0
        %3746 = vdwg.mxu0
        %v3747 = vsub.f32 0.0, %v3673
        %v3748 = vsub.f32 0.0, %v3675
        %v3749 = vsub.f32 0.0, %v3744
        %v3750 = vmul.f32 %v3747, 1.442695
        %v3751 = vpow.pop %v3750
        %v3752 = vmul.f32 %v3748, 1.442695
        %v3753 = vpow.pop %v3752
        %v3754 = vmul.f32 %v3749, 1.442695
        %v3755 = vpow.pop %v3754
        %v3756 = vadd.f32 %v3751, 1.0
        %v3757 = vadd.f32 %v3753, 1.0
        %v3758 = vadd.f32 %v3755, 1.0
        %v3759 = vrcp.pop %v3756
        %v3760 = vmul.f32 1.0, %v3759
        %v3761 = vrcp.pop %v3757
        %v3762 = vmul.f32 1.0, %v3761
        %v3763 = vrcp.pop %v3758
        %v3764 = vmul.f32 1.0, %v3763
        %v3765 = vld [vmem:[%s357] sm:$0xff]
        %v3766 = vld [vmem:[%s357 + $0x8] sm:$0xf]
        %v3767 = vmul.f32 %v3416, %v3760
        %v3768 = vmul.f32 %v3417, %v3762
        %v3769 = vmul.f32 %v3418, %v3764
        %v3772 = vcombine.high %v3765, %v3765
        %3773 = vrot.lane.b32.xlu0 %v3765, 109
        %v3774 = vpop.permute.xlu0 %3773
        %3775 = vrot.lane.b32.xlu0 %v3772, 109
        %v3776 = vpop.permute.xlu0 %3775
        %3777 = vrot.lane.b32.xlu0 %v3766, 109
        %v3778 = vpop.permute.xlu0 %3777
        %v3779 = vsel %vm1029, %v3774, %v3776
        %v3780 = vsel %vm1029, %v3776, %v3778
        %v3784 = vadd.f32 %v3767, %v3779
        %v3785 = vadd.f32 %v3768, %v3780
        %v3786 = vadd.f32 %v3769, %v3778
        %v3789 = vcombine.low %v3784, %v3785
        %3791 = vst [vmem:[%s352] sm:$0xff] %v3789
        %3792 = vst.msk [vmem:[%s352 + $0x8] sm:$0xf] %vm3422, %v3786
        %s3793 = sand.u32 %s247, 1
        %s3794 = scalar_lea.sflag [#allocation4], %s3793
        %s3795 = sand.u32 %s247, 1
        %s3796 = smul.addr %s3795, 12
        %s3797 = scalar_lea.vmem [#allocation3], %s3796
        // Predicated region
        $region61: #{tpu_custom_call.1} parent=59 // pred_check
          %p3798 = pneg %p257
        $region62: #{tpu_custom_call.1} parent=59 // pred_check_branch
          %3800 = sbr.rel (%p3798) target = $region64
        $region63: #{tpu_custom_call.1} parent=59 // pred_region
          %s3802 = ssub.s32 192, 192
          %3803 = vsyncadd %s3794, %s3802
          %s3804 = smul.addr %s24, 3
          %s3805 = smul.addr %s3804, 64
          %s3806 = scalar_lea.hbm %s10, %s3805
          %s3808 = sshll.u32 %s3797, 4
          %s3809 = int_to_ptr.vmem [resolvable:$true] %s3808
          %3811 = dma.vmem_to_hbm [thread:$0]  %s3809, 192, %s3806, %s3794
        $region64: #{tpu_custom_call.1} parent=59 // pred_fallthru
          _
      $region60: #{tpu_custom_call.1} parent=5 // pred_fallthru
        _
      %p3812 = scmp.le.s32.totalorder 2, %s19
      // Predicated region
      $region65: #{tpu_custom_call.1} parent=5 // pred_check
        %p3813 = pneg %p3812
      $region66: #{tpu_custom_call.1} parent=5 // pred_check_branch
        %3815 = sbr.rel (%p3813) target = $region68
      $region67: #{tpu_custom_call.1} parent=5 // pred_region
        %s3816 = ssub.s32 %s19, 2
        // Predicated region
        $region69: #{tpu_custom_call.1} parent=67 // pred_check
          %p3817 = pneg %p263
        $region70: #{tpu_custom_call.1} parent=67 // pred_check_branch
          %3819 = sbr.rel (%p3817) target = $region72
        $region71: #{tpu_custom_call.1} parent=67 // pred_region
          %s3820 = sand.u32 %s248, 1
          %s3821 = scalar_lea.sflag [#allocation4], %s3820
          %s3822 = sand.u32 %s248, 1
          %s3823 = smul.addr %s3822, 12
          %s3824 = scalar_lea.vmem [#allocation3], %s3823
          %3825 = dma.done %s3821, 192
        $region72: #{tpu_custom_call.1} parent=67 // pred_fallthru
          _
      $region68: #{tpu_custom_call.1} parent=5 // pred_fallthru
        _
    $region6: #{tpu_custom_call.1} parent=1 // loop_footer
      %s23 = sadd.s32 1, %s19
    $region7: #{tpu_custom_call.1} parent=1 // loop_footer_branch
      %18 = sbr.rel target = $region3
    $region8: #{tpu_custom_call.1} parent=1 // loop_exit
      _
    %3826 = vsyncpa [#allocation4], 1
    %s3827 = scalar_lea.sflag [#allocation4], 1
    %3828 = vsyncpa %s3827, 1

</llo_original>
